<compile_context>
chip_gen: v7x
topology: tpu7x:2x2x1
jax: 0.10.0
libtpu: 0.0.40
codegen_flags: <defaults>
</compile_context>

<pallas_src>
import functools

import jax
import jax.numpy as jnp
import numpy as np
from jax.experimental import pallas as pl
from jax.experimental.pallas import tpu as pltpu


def _round_up(v, m):
    return -(-v // m) * m


@functools.lru_cache(maxsize=1)
def _vmem_limit():
    """Per-generation scoped-VMEM budget: ~3/4 of physical, capped at 96 MiB."""
    cap = 128 * 1024 * 1024
    try:
        cap = int(pltpu.get_tpu_info().vmem_capacity_bytes)
    except Exception:
        pass
    return min((cap * 3) // 4, 96 * 1024 * 1024)


# ----------------------------------------------------------------------------
# Kernel 1: tiled linear with K-accumulation axis.
#   Used for the hoisted x @ W_ih + b gate projection AND the hoisted decoder
#   output projection (T*B, H) @ (H, V).
# ----------------------------------------------------------------------------
def _linear_kernel(x_ref, w_ref, b_ref, o_ref, acc_ref, *, mm_dtype):
    @pl.when(pl.program_id(2) == 0)
    def _():
        acc_ref[...] = jnp.zeros_like(acc_ref)

    acc_ref[...] += jnp.dot(x_ref[...].astype(mm_dtype), w_ref[...].astype(mm_dtype),
                            preferred_element_type=jnp.float32)

    @pl.when(pl.program_id(2) == pl.num_programs(2) - 1)
    def _():
        o_ref[...] = (acc_ref[...] + b_ref[...]).astype(o_ref.dtype)


def linear(x2d, w, b, *, mm_dtype=jnp.float32, out_dtype=jnp.float32,
           tile_m=512, tile_n=512, tile_k=512):
    """x2d: (M, K), w: (K, N), b: (N,) -> (M, N) out_dtype.

    Tiles over (M, N) with "parallel" semantics and accumulates over K with an
    "arbitrary" axis + f32 VMEM accumulator.  M/N/K are padded to tile multiples
    so no partial blocks ever occur; the pad is sliced off on the way out.
    """
    M, K = x2d.shape
    N = w.shape[1]

    Mp = _round_up(M, 8)
    tm = Mp if Mp <= tile_m else tile_m
    Mp = _round_up(Mp, tm)
    tk = K if K <= tile_k else tile_k
    Kp = _round_up(K, tk)
    tn = N if N <= tile_n else tile_n
    Np = _round_up(N, tn)

    if Mp != M or Kp != K:
        x2d = jnp.pad(x2d, ((0, Mp - M), (0, Kp - K)))
    if Kp != K or Np != N:
        w = jnp.pad(w, ((0, Kp - K), (0, Np - N)))
    if Np != N:
        b = jnp.pad(b, (0, Np - N))

    grid = (Mp // tm, Np // tn, Kp // tk)
    kern = functools.partial(_linear_kernel, mm_dtype=mm_dtype)
    out = pl.pallas_call(
        kern,
        out_shape=jax.ShapeDtypeStruct((Mp, Np), out_dtype),
        grid=grid,
        in_specs=[
            pl.BlockSpec((tm, tk), lambda i, j, k: (i, k)),
            pl.BlockSpec((tk, tn), lambda i, j, k: (k, j)),
            pl.BlockSpec((1, tn), lambda i, j, k: (0, j)),
        ],
        out_specs=pl.BlockSpec((tm, tn), lambda i, j, k: (i, j)),
        scratch_shapes=[pltpu.VMEM((tm, tn), jnp.float32)],
        compiler_params=pltpu.CompilerParams(
            dimension_semantics=("parallel", "parallel", "arbitrary"),
            vmem_limit_bytes=_vmem_limit()),
    )(x2d, w, b.reshape(1, Np))
    if Mp != M or Np != N:
        out = out[:M, :N]
    return out


# ----------------------------------------------------------------------------
# Kernel 2: encoder LSTM recurrence over precomputed gate pre-activations.
#   Grid = (direction ["parallel"], T-chunk ["arbitrary"]).
#   Each direction DMAs only its own 4H slice of g (last-dim block index = d),
#   h/c carried in VMEM scratch across chunks, final (h, c) per direction emitted
#   at the last chunk and summed in JAX.
# ----------------------------------------------------------------------------
def _lstm_state_kernel(g_ref, len_ref, whh_ref, h_out_ref, c_out_ref,
                       h_scr, c_scr, *, hidden_dim, t_chunk, bidirectional,
                       mm_dtype, unroll):
    H = hidden_dim
    d = pl.program_id(0)
    c_blk = pl.program_id(1)
    nc = pl.num_programs(1)

    @pl.when(c_blk == 0)
    def _():
        h_scr[...] = jnp.zeros_like(h_scr)
        c_scr[...] = jnp.zeros_like(c_scr)

    lengths = len_ref[...]                                   # (B, 1) int32
    w_hh = whh_ref[0].astype(mm_dtype)                       # (H, 4H), resident

    if bidirectional:
        is_rev = d == 1
        time_blk = jnp.where(is_rev, nc - 1 - c_blk, c_blk)  # reverse chunk order
    else:
        is_rev = None
        time_blk = c_blk
    t0 = time_blk * t_chunk

    def step(s, carry):
        h, c = carry
        if bidirectional:
            t_local = jnp.where(is_rev, t_chunk - 1 - s, s)  # reverse within chunk
        else:
            t_local = s
        gates = (g_ref[t_local].astype(jnp.float32)
                 + jnp.dot(h.astype(mm_dtype), w_hh,
                           preferred_element_type=jnp.float32))
        i_g = jax.nn.sigmoid(gates[:, 0 * H:1 * H])          # PyTorch gate order i,f,g,o
        f_g = jax.nn.sigmoid(gates[:, 1 * H:2 * H])
        g_g = jnp.tanh(gates[:, 2 * H:3 * H])
        o_g = jax.nn.sigmoid(gates[:, 3 * H:4 * H])
        c_new = f_g * c + i_g * g_g
        h_new = o_g * jnp.tanh(c_new)
        valid = (t0 + t_local) < lengths                     # packed-seq: freeze past length
        return (jnp.where(valid, h_new, h), jnp.where(valid, c_new, c))

    h_n, c_n = jax.lax.fori_loop(0, t_chunk, step, (h_scr[...], c_scr[...]),
                                 unroll=unroll)
    h_scr[...] = h_n
    c_scr[...] = c_n

    @pl.when(c_blk == nc - 1)
    def _():
        h_out_ref[0] = h_scr[...]                            # written exactly once per dir
        c_out_ref[0] = c_scr[...]


# ----------------------------------------------------------------------------
# Kernel 3: decoder LSTM recurrence.
#   Grid = (T-chunk ["arbitrary"]).  Emits only the masked hidden states y
#   (T, B, H) as a streamed output block; the output Linear is hoisted out and
#   done by the tiled `linear` kernel afterwards.
# ----------------------------------------------------------------------------
def _lstm_decode_kernel(g_ref, len_ref, whh_ref, h0_ref, c0_ref, y_ref,
                        h_scr, c_scr, *, hidden_dim, t_chunk, mm_dtype, unroll):
    H = hidden_dim
    c_blk = pl.program_id(0)

    @pl.when(c_blk == 0)
    def _():
        h_scr[...] = h0_ref[...]
        c_scr[...] = c0_ref[...]

    lengths = len_ref[...]                                   # (B, 1) int32
    w_hh = whh_ref[...].astype(mm_dtype)                     # (H, 4H), resident
    t0 = c_blk * t_chunk

    def step(s, carry):
        h, c = carry
        gates = (g_ref[s].astype(jnp.float32)
                 + jnp.dot(h.astype(mm_dtype), w_hh,
                           preferred_element_type=jnp.float32))
        i_g = jax.nn.sigmoid(gates[:, 0 * H:1 * H])
        f_g = jax.nn.sigmoid(gates[:, 1 * H:2 * H])
        g_g = jnp.tanh(gates[:, 2 * H:3 * H])
        o_g = jax.nn.sigmoid(gates[:, 3 * H:4 * H])
        c_new = f_g * c + i_g * g_g
        h_new = o_g * jnp.tanh(c_new)
        valid = (t0 + s) < lengths
        y_ref[s] = jnp.where(valid, h_new, 0.0)              # padded outputs are zero
        return (jnp.where(valid, h_new, h), jnp.where(valid, c_new, c))

    h_n, c_n = jax.lax.fori_loop(0, t_chunk, step, (h_scr[...], c_scr[...]),
                                 unroll=unroll)
    h_scr[...] = h_n
    c_scr[...] = c_n


# ----------------------------------------------------------------------------
# Model glue
# ----------------------------------------------------------------------------
def _lengths(token_ids):
    """pack_padded_sequence length semantics (pad_index == 0, trailing padding)."""
    return jnp.sum((token_ids != 0).astype(jnp.int32), axis=0).reshape(-1, 1)


def naive_seq2seq_forward(params, encoder_inputs, decoder_inputs, *,
                          bidirectional, mm_dtype=jnp.float32, t_chunk=32):
    H = params["enc_w_hh"].shape[0]
    T_e, B = encoder_inputs.shape
    T_d = decoder_inputs.shape[0]
    V = params["out_w"].shape[1]

    enc_len = _lengths(encoder_inputs)
    dec_len = _lengths(decoder_inputs)

    cast = (lambda a: a.astype(mm_dtype)) if mm_dtype != jnp.float32 else (lambda a: a)

    # ---------------- encoder ----------------
    enc_emb = jnp.take(params["enc_emb"], encoder_inputs, axis=0)        # (T_e, B, E)
    E = enc_emb.shape[-1]
    if bidirectional:
        w_ih = jnp.concatenate([params["enc_w_ih"], params["enc_w_ih_rev"]], axis=1)
        b_ih = jnp.concatenate([params["enc_b"], params["enc_b_rev"]], axis=0)
        w_hh = jnp.stack([params["enc_w_hh"], params["enc_w_hh_rev"]], axis=0)
        num_dirs = 2
    else:
        w_ih, b_ih = params["enc_w_ih"], params["enc_b"]
        w_hh = params["enc_w_hh"][None]
        num_dirs = 1

    # Hoisted input projection: one big MXU matmul for all timesteps & directions.
    g_enc = linear(cast(enc_emb.reshape(T_e * B, E)), cast(w_ih), b_ih,
                   mm_dtype=mm_dtype, out_dtype=mm_dtype)
    g_enc = g_enc.reshape(T_e, B, num_dirs * 4 * H)

    tc_e = min(t_chunk, T_e)
    nc_e = pl.cdiv(T_e, tc_e)
    unroll_e = True if tc_e <= 16 else 8

    if bidirectional:
        # fwd direction (d=0): chunks in order; bwd direction (d=1): chunks reversed.
        g_tmap = lambda d, c: (c * (1 - d) + (nc_e - 1 - c) * d, 0, d)
    else:
        g_tmap = lambda d, c: (c, 0, 0)

    enc_kern = functools.partial(
        _lstm_state_kernel, hidden_dim=H, t_chunk=tc_e,
        bidirectional=bidirectional, mm_dtype=mm_dtype, unroll=unroll_e)

    h_dirs, c_dirs = pl.pallas_call(
        enc_kern,
        out_shape=(jax.ShapeDtypeStruct((num_dirs, B, H), jnp.float32),
                   jax.ShapeDtypeStruct((num_dirs, B, H), jnp.float32)),
        grid=(num_dirs, nc_e),
        in_specs=[
            pl.BlockSpec((tc_e, B, 4 * H), g_tmap),
            pl.BlockSpec((B, 1), lambda d, c: (0, 0)),
            pl.BlockSpec((1, H, 4 * H), lambda d, c: (d, 0, 0)),
        ],
        out_specs=(pl.BlockSpec((1, B, H), lambda d, c: (d, 0, 0)),
                   pl.BlockSpec((1, B, H), lambda d, c: (d, 0, 0))),
        scratch_shapes=[pltpu.VMEM((B, H), jnp.float32),
                        pltpu.VMEM((B, H), jnp.float32)],
        compiler_params=pltpu.CompilerParams(
            dimension_semantics=("parallel", "arbitrary"),
            vmem_limit_bytes=_vmem_limit()),
    )(g_enc, enc_len, w_hh)
    h_enc = h_dirs.sum(axis=0)
    c_enc = c_dirs.sum(axis=0)

    # ---------------- decoder ----------------
    dec_emb = jnp.take(params["dec_emb"], decoder_inputs, axis=0)        # (T_d, B, E)
    g_dec = linear(cast(dec_emb.reshape(T_d * B, dec_emb.shape[-1])),
                   cast(params["dec_w_ih"]), params["dec_b"],
                   mm_dtype=mm_dtype, out_dtype=mm_dtype)
    g_dec = g_dec.reshape(T_d, B, 4 * H)

    tc_d = min(t_chunk, T_d)
    nc_d = pl.cdiv(T_d, tc_d)
    unroll_d = True if tc_d <= 16 else 8

    dec_kern = functools.partial(
        _lstm_decode_kernel, hidden_dim=H, t_chunk=tc_d,
        mm_dtype=mm_dtype, unroll=unroll_d)

    # TODO(synk): y_dec is kept f32 for quality; could be emitted bf16 to halve its HBM trip.
    y_dec = pl.pallas_call(
        dec_kern,
        out_shape=jax.ShapeDtypeStruct((T_d, B, H), jnp.float32),
        grid=(nc_d,),
        in_specs=[
            pl.BlockSpec((tc_d, B, 4 * H), lambda c: (c, 0, 0)),
            pl.BlockSpec((B, 1), lambda c: (0, 0)),
            pl.BlockSpec((H, 4 * H), lambda c: (0, 0)),
            pl.BlockSpec((B, H), lambda c: (0, 0)),
            pl.BlockSpec((B, H), lambda c: (0, 0)),
        ],
        out_specs=pl.BlockSpec((tc_d, B, H), lambda c: (c, 0, 0)),
        scratch_shapes=[pltpu.VMEM((B, H), jnp.float32),
                        pltpu.VMEM((B, H), jnp.float32)],
        compiler_params=pltpu.CompilerParams(
            dimension_semantics=("arbitrary",),
            vmem_limit_bytes=_vmem_limit()),
    )(g_dec, dec_len, params["dec_w_hh"], h_enc, c_enc)

    # Hoisted output projection: full-tile MXU matmul, logits streamed through `linear`.
    logits = linear(y_dec.reshape(T_d * B, H), cast(params["out_w"]),
                    params["out_b"], mm_dtype=mm_dtype, out_dtype=jnp.float32)
    return logits.reshape(T_d, B, V)


def init_params(key, enc_vocab, dec_vocab, emb_dim, hidden_dim, bidirectional):
    keys = jax.random.split(key, 16)
    k = 1.0 / np.sqrt(hidden_dim)

    def unif(rk, shape):
        return jax.random.uniform(rk, shape, jnp.float32, -k, k)

    p = {
        "enc_emb": jax.random.normal(keys[0], (enc_vocab, emb_dim), jnp.float32),
        "dec_emb": jax.random.normal(keys[1], (dec_vocab, emb_dim), jnp.float32),
        "enc_w_ih": unif(keys[2], (emb_dim, 4 * hidden_dim)),
        "enc_w_hh": unif(keys[3], (hidden_dim, 4 * hidden_dim)),
        "enc_b": unif(keys[4], (4 * hidden_dim,)),
        "dec_w_ih": unif(keys[5], (emb_dim, 4 * hidden_dim)),
        "dec_w_hh": unif(keys[6], (hidden_dim, 4 * hidden_dim)),
        "dec_b": unif(keys[7], (4 * hidden_dim,)),
        "out_w": unif(keys[8], (hidden_dim, dec_vocab)),
        "out_b": unif(keys[9], (dec_vocab,)),
    }
    if bidirectional:
        p["enc_w_ih_rev"] = unif(keys[10], (emb_dim, 4 * hidden_dim))
        p["enc_w_hh_rev"] = unif(keys[11], (hidden_dim, 4 * hidden_dim))
        p["enc_b_rev"] = unif(keys[12], (4 * hidden_dim,))
    return p


# ----------------------------------------------------------------------------
# Pure-JAX reference (for correctness check only)
# ----------------------------------------------------------------------------
def _valid_mask(token_ids):
    T, B = token_ids.shape
    lengths = jnp.sum((token_ids != 0).astype(jnp.int32), axis=0)
    valid = (jnp.arange(T)[:, None] < lengths[None, :]).astype(jnp.float32)
    return valid[:, :, None]


def _ref_lstm(x, valid, w_ih, w_hh, b, h0, c0, reverse=False):
    H = h0.shape[-1]
    if reverse:
        x, valid = x[::-1], valid[::-1]

    def step(carry, inp):
        h, c = carry
        xt, vt = inp
        gates = xt @ w_ih + h @ w_hh + b
        i = jax.nn.sigmoid(gates[:, :H])
        f = jax.nn.sigmoid(gates[:, H:2 * H])
        g = jnp.tanh(gates[:, 2 * H:3 * H])
        o = jax.nn.sigmoid(gates[:, 3 * H:])
        c_new = f * c + i * g
        h_new = o * jnp.tanh(c_new)
        h_k = vt * h_new + (1 - vt) * h
        c_k = vt * c_new + (1 - vt) * c
        return (h_k, c_k), vt * h_new

    (h_n, c_n), y = jax.lax.scan(step, (h0, c0), (x, valid))
    if reverse:
        y = y[::-1]
    return y, h_n, c_n


def _ref_forward(params, enc_in, dec_in, *, bidirectional):
    H = params["enc_w_hh"].shape[0]
    B = enc_in.shape[1]
    zeros = jnp.zeros((B, H), jnp.float32)
    enc_emb = jnp.take(params["enc_emb"], enc_in, axis=0)
    enc_valid = _valid_mask(enc_in)
    _, h_f, c_f = _ref_lstm(enc_emb, enc_valid, params["enc_w_ih"],
                            params["enc_w_hh"], params["enc_b"], zeros, zeros)
    if bidirectional:
        _, h_b, c_b = _ref_lstm(enc_emb, enc_valid, params["enc_w_ih_rev"],
                                params["enc_w_hh_rev"], params["enc_b_rev"],
                                zeros, zeros, reverse=True)
        h_enc, c_enc = h_f + h_b, c_f + c_b
    else:
        h_enc, c_enc = h_f, c_f
    dec_emb = jnp.take(params["dec_emb"], dec_in, axis=0)
    dec_valid = _valid_mask(dec_in)
    y, _, _ = _ref_lstm(dec_emb, dec_valid, params["dec_w_ih"],
                        params["dec_w_hh"], params["dec_b"], h_enc, c_enc)
    return y @ params["out_w"] + params["out_b"]


# ----------------------------------------------------------------------------
if __name__ == "__main__":
    ENC_VOCAB, DEC_VOCAB = 48, 64
    EMB_DIM, HIDDEN_DIM = 16, 32
    T_ENC, T_DEC, BATCH = 8, 8, 2
    BIDIRECTIONAL = True
    T_CHUNK = 4  # small chunk so the demo exercises the multi-chunk carry path

    root = jax.random.PRNGKey(0)
    k_par, k_enc, k_dec = jax.random.split(root, 3)
    params = init_params(k_par, ENC_VOCAB, DEC_VOCAB, EMB_DIM, HIDDEN_DIM,
                         BIDIRECTIONAL)

    # time-major int32 token ids; pad_index = 0
    encoder_inputs = jax.random.randint(k_enc, (T_ENC, BATCH), 1, ENC_VOCAB,
                                        dtype=jnp.int32)
    # give the second encoder sequence trailing pads to exercise packed-seq masking
    encoder_inputs = encoder_inputs.at[T_ENC - 2:, 1].set(0)
    decoder_inputs = jax.random.randint(k_dec, (T_DEC, BATCH), 1, DEC_VOCAB,
                                        dtype=jnp.int32)

    # f32 path (tight check against the pure-JAX reference)
    fwd = jax.jit(functools.partial(naive_seq2seq_forward,
                                    bidirectional=BIDIRECTIONAL,
                                    mm_dtype=jnp.float32, t_chunk=T_CHUNK))
    out = jax.block_until_ready(fwd(params, encoder_inputs, decoder_inputs))
    assert out.shape == (T_DEC, BATCH, DEC_VOCAB), out.shape

    ref = _ref_forward(params, encoder_inputs, decoder_inputs,
                       bidirectional=BIDIRECTIONAL)
    np.testing.assert_allclose(np.asarray(out), np.asarray(ref),
                               rtol=1e-4, atol=1e-4)

    # bf16-matmul path (v6e/v7x MXU); bf16 operands + f32 accumulation, loose check.
    fwd_bf16 = jax.jit(functools.partial(naive_seq2seq_forward,
                                         bidirectional=BIDIRECTIONAL,
                                         mm_dtype=jnp.bfloat16, t_chunk=T_CHUNK))
    out_bf16 = jax.block_until_ready(fwd_bf16(params, encoder_inputs, decoder_inputs))
    np.testing.assert_allclose(np.asarray(out_bf16), np.asarray(ref),
                               rtol=1e-1, atol=1e-1)

    print("KERNEL_OK")
</pallas_src>

<mosaic_0001>
module attributes {stable_mosaic.version = 11 : i64} {
  func.func @_linear_kernel(%arg0: i32, %arg1: i32, %arg2: i32, %arg3: memref<16x16xf32, #tpu.memory_space<vmem>>, %arg4: memref<16x256xf32, #tpu.memory_space<vmem>>, %arg5: memref<1x256xf32, #tpu.memory_space<vmem>>, %arg6: memref<16x256xf32, #tpu.memory_space<vmem>>, %arg7: memref<16x256xf32, #tpu.memory_space<vmem>>) attributes {dimension_semantics = [#tpu.dimension_semantics<parallel>, #tpu.dimension_semantics<parallel>, #tpu.dimension_semantics<arbitrary>], iteration_bounds = array<i64: 1, 1, 1>, scalar_prefetch = 0 : i64, scratch_operands = 1 : i64, tpu.core_type = #tpu.core_type<tc>, window_params = [{transform_indices = @transform_0, window_bounds = array<i64: 16, 16>}, {transform_indices = @transform_1, window_bounds = array<i64: 16, 256>}, {transform_indices = @transform_2, window_bounds = array<i64: 1, 256>}, {transform_indices = @transform_3, window_bounds = array<i64: 16, 256>}]} {
    %c0_i32 = arith.constant 0 : i32
    %0 = arith.cmpi eq, %arg2, %c0_i32 : i32
    %1 = arith.extui %0 : i1 to i32
    %c0_i32_0 = arith.constant 0 : i32
    %2 = arith.cmpi ne, %1, %c0_i32_0 : i32
    scf.if %2 {
      %cst_10 = arith.constant 0.000000e+00 : f32
      %12 = vector.broadcast %cst_10 : f32 to vector<16x256xf32>
      %c0_11 = arith.constant 0 : index
      %c0_12 = arith.constant 0 : index
      %13 = vector.load %arg7[%c0_11, %c0_12] : memref<16x256xf32, #tpu.memory_space<vmem>>, vector<16x256xf32>
      tpu.vector_store %arg7[%c0_11, %c0_12], %12 {strides = array<i32>} : memref<16x256xf32, #tpu.memory_space<vmem>>, vector<16x256xf32>,
    } else {
    }
    %c0 = arith.constant 0 : index
    %c0_1 = arith.constant 0 : index
    %3 = vector.load %arg7[%c0, %c0_1] : memref<16x256xf32, #tpu.memory_space<vmem>>, vector<16x256xf32>
    %c0_2 = arith.constant 0 : index
    %c0_3 = arith.constant 0 : index
    %4 = vector.load %arg3[%c0_2, %c0_3] : memref<16x16xf32, #tpu.memory_space<vmem>>, vector<16x16xf32>
    %c0_4 = arith.constant 0 : index
    %c0_5 = arith.constant 0 : index
    %5 = vector.load %arg4[%c0_4, %c0_5] : memref<16x256xf32, #tpu.memory_space<vmem>>, vector<16x256xf32>
    %cst = arith.constant dense<0.000000e+00> : vector<16x256xf32>
    %6 = tpu.matmul %4, %5, %cst {dimension_numbers = #tpu.dot_dimension_numbers<[1], [0], [0], [1], [0, 0, 1, 1], [], []>} : vector<16x16xf32>, vector<16x256xf32>, vector<16x256xf32> -> vector<16x256xf32>
    %7 = arith.addf %3, %6 : vector<16x256xf32>
    %c0_6 = arith.constant 0 : index
    %c0_7 = arith.constant 0 : index
    %8 = vector.load %arg7[%c0_6, %c0_7] : memref<16x256xf32, #tpu.memory_space<vmem>>, vector<16x256xf32>
    tpu.vector_store %arg7[%c0_6, %c0_7], %7 {strides = array<i32>} : memref<16x256xf32, #tpu.memory_space<vmem>>, vector<16x256xf32>,
    %c0_i32_8 = arith.constant 0 : i32
    %9 = arith.cmpi eq, %arg2, %c0_i32_8 : i32
    %10 = arith.extui %9 : i1 to i32
    %c0_i32_9 = arith.constant 0 : i32
    %11 = arith.cmpi ne, %10, %c0_i32_9 : i32
    scf.if %11 {
      %c0_10 = arith.constant 0 : index
      %c0_11 = arith.constant 0 : index
      %12 = vector.load %arg7[%c0_10, %c0_11] : memref<16x256xf32, #tpu.memory_space<vmem>>, vector<16x256xf32>
      %c0_12 = arith.constant 0 : index
      %c0_13 = arith.constant 0 : index
      %13 = vector.load %arg5[%c0_12, %c0_13] : memref<1x256xf32, #tpu.memory_space<vmem>>, vector<1x256xf32>
      %14 = vector.broadcast %13 : vector<1x256xf32> to vector<16x256xf32>
      %15 = arith.addf %12, %14 : vector<16x256xf32>
      %c0_14 = arith.constant 0 : index
      %c0_15 = arith.constant 0 : index
      %16 = vector.load %arg6[%c0_14, %c0_15] : memref<16x256xf32, #tpu.memory_space<vmem>>, vector<16x256xf32>
      tpu.vector_store %arg6[%c0_14, %c0_15], %15 {strides = array<i32>} : memref<16x256xf32, #tpu.memory_space<vmem>>, vector<16x256xf32>,
    } else {
    }
    return
  }
  func.func @transform_0(%arg0: i32, %arg1: i32, %arg2: i32) -> (i32, i32) {
    %c0_i32 = arith.constant 0 : i32
    return %arg0, %arg2 : i32, i32
  }
  func.func @transform_1(%arg0: i32, %arg1: i32, %arg2: i32) -> (i32, i32) {
    %c0_i32 = arith.constant 0 : i32
    return %arg2, %arg1 : i32, i32
  }
  func.func @transform_2(%arg0: i32, %arg1: i32, %arg2: i32) -> (i32, i32) {
    %c0_i32 = arith.constant 0 : i32
    %c0_i32_0 = arith.constant 0 : i32
    return %c0_i32, %arg1 : i32, i32
  }
  func.func @transform_3(%arg0: i32, %arg1: i32, %arg2: i32) -> (i32, i32) {
    %c0_i32 = arith.constant 0 : i32
    return %arg0, %arg1 : i32, i32
  }
}

module attributes {stable_mosaic.version = 11 : i64} {
  func.func @_lstm_state_kernel(%arg0: i32, %arg1: i32, %arg2: memref<4x2x128xf32, #tpu.memory_space<vmem>>, %arg3: memref<2x1xi32, #tpu.memory_space<vmem>>, %arg4: memref<1x32x128xf32, #tpu.memory_space<vmem>>, %arg5: memref<1x2x32xf32, #tpu.memory_space<vmem>>, %arg6: memref<1x2x32xf32, #tpu.memory_space<vmem>>, %arg7: memref<2x32xf32, #tpu.memory_space<vmem>>, %arg8: memref<2x32xf32, #tpu.memory_space<vmem>>) attributes {dimension_semantics = [#tpu.dimension_semantics<parallel>, #tpu.dimension_semantics<arbitrary>], iteration_bounds = array<i64: 2, 2>, scalar_prefetch = 0 : i64, scratch_operands = 2 : i64, tpu.core_type = #tpu.core_type<tc>, window_params = [{transform_indices = @transform_0, window_bounds = array<i64: 4, 2, 128>}, {pipeline_mode = #tpu.pipeline_mode<synchronous>, transform_indices = @transform_1, window_bounds = array<i64: 2, 1>}, {transform_indices = @transform_2, window_bounds = array<i64: 1, 32, 128>}, {transform_indices = @transform_3, window_bounds = array<i64: 1, 2, 32>}, {transform_indices = @transform_4, window_bounds = array<i64: 1, 2, 32>}]} {
    %c0_i32 = arith.constant 0 : i32
    %0 = arith.cmpi eq, %arg1, %c0_i32 : i32
    %1 = arith.extui %0 : i1 to i32
    %c0_i32_0 = arith.constant 0 : i32
    %2 = arith.cmpi ne, %1, %c0_i32_0 : i32
    scf.if %2 {
      %cst_46 = arith.constant 0.000000e+00 : f32
      %181 = vector.broadcast %cst_46 : f32 to vector<2x32xf32>
      %c0_47 = arith.constant 0 : index
      %c0_48 = arith.constant 0 : index
      %182 = vector.load %arg7[%c0_47, %c0_48] : memref<2x32xf32, #tpu.memory_space<vmem>>, vector<2x32xf32>
      tpu.vector_store %arg7[%c0_47, %c0_48], %181 {strides = array<i32>} : memref<2x32xf32, #tpu.memory_space<vmem>>, vector<2x32xf32>,
      %cst_49 = arith.constant 0.000000e+00 : f32
      %183 = vector.broadcast %cst_49 : f32 to vector<2x32xf32>
      %c0_50 = arith.constant 0 : index
      %c0_51 = arith.constant 0 : index
      %184 = vector.load %arg8[%c0_50, %c0_51] : memref<2x32xf32, #tpu.memory_space<vmem>>, vector<2x32xf32>
      tpu.vector_store %arg8[%c0_50, %c0_51], %183 {strides = array<i32>} : memref<2x32xf32, #tpu.memory_space<vmem>>, vector<2x32xf32>,
    } else {
    }
    %c0 = arith.constant 0 : index
    %c0_1 = arith.constant 0 : index
    %3 = vector.load %arg3[%c0, %c0_1] : memref<2x1xi32, #tpu.memory_space<vmem>>, vector<2x1xi32>
    %c0_2 = arith.constant 0 : index
    %c0_3 = arith.constant 0 : index
    %c0_4 = arith.constant 0 : index
    %4 = vector.load %arg4[%c0_2, %c0_3, %c0_4] : memref<1x32x128xf32, #tpu.memory_space<vmem>>, vector<1x32x128xf32>
    %5 = vector.shape_cast %4 : vector<1x32x128xf32> to vector<32x128xf32>
    %c1_i32 = arith.constant 1 : i32
    %6 = arith.cmpi eq, %arg0, %c1_i32 : i32
    %c1_i32_5 = arith.constant 1 : i32
    %7 = arith.subi %c1_i32_5, %arg1 : i32
    %8 = arith.select %6, %7, %arg1 : i32
    %c4_i32 = arith.constant 4 : i32
    %9 = arith.muli %8, %c4_i32 : i32
    %c0_6 = arith.constant 0 : index
    %c0_7 = arith.constant 0 : index
    %10 = vector.load %arg7[%c0_6, %c0_7] : memref<2x32xf32, #tpu.memory_space<vmem>>, vector<2x32xf32>
    %c0_8 = arith.constant 0 : index
    %c0_9 = arith.constant 0 : index
    %11 = vector.load %arg8[%c0_8, %c0_9] : memref<2x32xf32, #tpu.memory_space<vmem>>, vector<2x32xf32>
    %c0_i32_10 = arith.constant 0 : i32
    %c3_i32 = arith.constant 3 : i32
    %12 = arith.subi %c3_i32, %c0_i32_10 : i32
    %13 = arith.select %6, %12, %c0_i32_10 : i32
    %14 = arith.index_cast %13 : i32 to index
    %c0_11 = arith.constant 0 : index
    %c0_12 = arith.constant 0 : index
    %15 = vector.load %arg2[%14, %c0_11, %c0_12] : memref<4x2x128xf32, #tpu.memory_space<vmem>>, vector<1x2x128xf32>
    %16 = vector.shape_cast %15 : vector<1x2x128xf32> to vector<2x128xf32>
    %cst = arith.constant dense<0.000000e+00> : vector<2x128xf32>
    %17 = tpu.matmul %10, %5, %cst {dimension_numbers = #tpu.dot_dimension_numbers<[1], [0], [0], [1], [0, 0, 1, 1], [], []>} : vector<2x32xf32>, vector<32x128xf32>, vector<2x128xf32> -> vector<2x128xf32>
    %18 = arith.addf %16, %17 : vector<2x128xf32>
    %19 = vector.extract_strided_slice %18 {offsets = [0, 0], sizes = [2, 32], strides = [1, 1]} : vector<2x128xf32> to vector<2x32xf32>
    %20 = arith.negf %19 : vector<2x32xf32>
    %21 = math.exp %20 : vector<2x32xf32>
    %cst_13 = arith.constant 1.000000e+00 : f32
    %22 = vector.broadcast %cst_13 : f32 to vector<2x32xf32>
    %23 = arith.addf %22, %21 : vector<2x32xf32>
    %24 = arith.divf %22, %23 : vector<2x32xf32>
    %25 = vector.extract_strided_slice %18 {offsets = [0, 32], sizes = [2, 32], strides = [1, 1]} : vector<2x128xf32> to vector<2x32xf32>
    %26 = arith.negf %25 : vector<2x32xf32>
    %27 = math.exp %26 : vector<2x32xf32>
    %cst_14 = arith.constant 1.000000e+00 : f32
    %28 = vector.broadcast %cst_14 : f32 to vector<2x32xf32>
    %29 = arith.addf %28, %27 : vector<2x32xf32>
    %30 = arith.divf %28, %29 : vector<2x32xf32>
    %31 = vector.extract_strided_slice %18 {offsets = [0, 64], sizes = [2, 32], strides = [1, 1]} : vector<2x128xf32> to vector<2x32xf32>
    %32 = math.tanh %31 : vector<2x32xf32>
    %33 = vector.extract_strided_slice %18 {offsets = [0, 96], sizes = [2, 32], strides = [1, 1]} : vector<2x128xf32> to vector<2x32xf32>
    %34 = arith.negf %33 : vector<2x32xf32>
    %35 = math.exp %34 : vector<2x32xf32>
    %cst_15 = arith.constant 1.000000e+00 : f32
    %36 = vector.broadcast %cst_15 : f32 to vector<2x32xf32>
    %37 = arith.addf %36, %35 : vector<2x32xf32>
    %38 = arith.divf %36, %37 : vector<2x32xf32>
    %39 = arith.mulf %30, %11 : vector<2x32xf32>
    %40 = arith.mulf %24, %32 : vector<2x32xf32>
    %41 = arith.addf %39, %40 : vector<2x32xf32>
    %42 = math.tanh %41 : vector<2x32xf32>
    %43 = arith.mulf %38, %42 : vector<2x32xf32>
    %44 = arith.addi %9, %13 : i32
    %45 = vector.broadcast %44 : i32 to vector<2x1xi32>
    %46 = arith.cmpi slt, %45, %3 : vector<2x1xi32>
    %47 = vector.shape_cast %46 : vector<2x1xi1> to vector<2x1xi1>
    %48 = vector.broadcast %47 : vector<2x1xi1> to vector<2x32xi1>
    %49 = arith.select %48, %43, %10 : vector<2x32xi1>, vector<2x32xf32>
    %50 = vector.shape_cast %46 : vector<2x1xi1> to vector<2x1xi1>
    %51 = vector.broadcast %50 : vector<2x1xi1> to vector<2x32xi1>
    %52 = arith.select %51, %41, %11 : vector<2x32xi1>, vector<2x32xf32>
    %c1_i32_16 = arith.constant 1 : i32
    %c3_i32_17 = arith.constant 3 : i32
    %53 = arith.subi %c3_i32_17, %c1_i32_16 : i32
    %54 = arith.select %6, %53, %c1_i32_16 : i32
    %55 = arith.index_cast %54 : i32 to index
    %c0_18 = arith.constant 0 : index
    %c0_19 = arith.constant 0 : index
    %56 = vector.load %arg2[%55, %c0_18, %c0_19] : memref<4x2x128xf32, #tpu.memory_space<vmem>>, vector<1x2x128xf32>
    %57 = vector.shape_cast %56 : vector<1x2x128xf32> to vector<2x128xf32>
    %cst_20 = arith.constant dense<0.000000e+00> : vector<2x128xf32>
    %58 = tpu.matmul %49, %5, %cst_20 {dimension_numbers = #tpu.dot_dimension_numbers<[1], [0], [0], [1], [0, 0, 1, 1], [], []>} : vector<2x32xf32>, vector<32x128xf32>, vector<2x128xf32> -> vector<2x128xf32>
    %59 = arith.addf %57, %58 : vector<2x128xf32>
    %60 = vector.extract_strided_slice %59 {offsets = [0, 0], sizes = [2, 32], strides = [1, 1]} : vector<2x128xf32> to vector<2x32xf32>
    %61 = arith.negf %60 : vector<2x32xf32>
    %62 = math.exp %61 : vector<2x32xf32>
    %cst_21 = arith.constant 1.000000e+00 : f32
    %63 = vector.broadcast %cst_21 : f32 to vector<2x32xf32>
    %64 = arith.addf %63, %62 : vector<2x32xf32>
    %65 = arith.divf %63, %64 : vector<2x32xf32>
    %66 = vector.extract_strided_slice %59 {offsets = [0, 32], sizes = [2, 32], strides = [1, 1]} : vector<2x128xf32> to vector<2x32xf32>
    %67 = arith.negf %66 : vector<2x32xf32>
    %68 = math.exp %67 : vector<2x32xf32>
    %cst_22 = arith.constant 1.000000e+00 : f32
    %69 = vector.broadcast %cst_22 : f32 to vector<2x32xf32>
    %70 = arith.addf %69, %68 : vector<2x32xf32>
    %71 = arith.divf %69, %70 : vector<2x32xf32>
    %72 = vector.extract_strided_slice %59 {offsets = [0, 64], sizes = [2, 32], strides = [1, 1]} : vector<2x128xf32> to vector<2x32xf32>
    %73 = math.tanh %72 : vector<2x32xf32>
    %74 = vector.extract_strided_slice %59 {offsets = [0, 96], sizes = [2, 32], strides = [1, 1]} : vector<2x128xf32> to vector<2x32xf32>
    %75 = arith.negf %74 : vector<2x32xf32>
    %76 = math.exp %75 : vector<2x32xf32>
    %cst_23 = arith.constant 1.000000e+00 : f32
    %77 = vector.broadcast %cst_23 : f32 to vector<2x32xf32>
    %78 = arith.addf %77, %76 : vector<2x32xf32>
    %79 = arith.divf %77, %78 : vector<2x32xf32>
    %80 = arith.mulf %71, %52 : vector<2x32xf32>
    %81 = arith.mulf %65, %73 : vector<2x32xf32>
    %82 = arith.addf %80, %81 : vector<2x32xf32>
    %83 = math.tanh %82 : vector<2x32xf32>
    %84 = arith.mulf %79, %83 : vector<2x32xf32>
    %85 = arith.addi %9, %54 : i32
    %86 = vector.broadcast %85 : i32 to vector<2x1xi32>
    %87 = arith.cmpi slt, %86, %3 : vector<2x1xi32>
    %88 = vector.shape_cast %87 : vector<2x1xi1> to vector<2x1xi1>
    %89 = vector.broadcast %88 : vector<2x1xi1> to vector<2x32xi1>
    %90 = arith.select %89, %84, %49 : vector<2x32xi1>, vector<2x32xf32>
    %91 = vector.shape_cast %87 : vector<2x1xi1> to vector<2x1xi1>
    %92 = vector.broadcast %91 : vector<2x1xi1> to vector<2x32xi1>
    %93 = arith.select %92, %82, %52 : vector<2x32xi1>, vector<2x32xf32>
    %c2_i32 = arith.constant 2 : i32
    %c3_i32_24 = arith.constant 3 : i32
    %94 = arith.subi %c3_i32_24, %c2_i32 : i32
    %95 = arith.select %6, %94, %c2_i32 : i32
    %96 = arith.index_cast %95 : i32 to index
    %c0_25 = arith.constant 0 : index
    %c0_26 = arith.constant 0 : index
    %97 = vector.load %arg2[%96, %c0_25, %c0_26] : memref<4x2x128xf32, #tpu.memory_space<vmem>>, vector<1x2x128xf32>
    %98 = vector.shape_cast %97 : vector<1x2x128xf32> to vector<2x128xf32>
    %cst_27 = arith.constant dense<0.000000e+00> : vector<2x128xf32>
    %99 = tpu.matmul %90, %5, %cst_27 {dimension_numbers = #tpu.dot_dimension_numbers<[1], [0], [0], [1], [0, 0, 1, 1], [], []>} : vector<2x32xf32>, vector<32x128xf32>, vector<2x128xf32> -> vector<2x128xf32>
    %100 = arith.addf %98, %99 : vector<2x128xf32>
    %101 = vector.extract_strided_slice %100 {offsets = [0, 0], sizes = [2, 32], strides = [1, 1]} : vector<2x128xf32> to vector<2x32xf32>
    %102 = arith.negf %101 : vector<2x32xf32>
    %103 = math.exp %102 : vector<2x32xf32>
    %cst_28 = arith.constant 1.000000e+00 : f32
    %104 = vector.broadcast %cst_28 : f32 to vector<2x32xf32>
    %105 = arith.addf %104, %103 : vector<2x32xf32>
    %106 = arith.divf %104, %105 : vector<2x32xf32>
    %107 = vector.extract_strided_slice %100 {offsets = [0, 32], sizes = [2, 32], strides = [1, 1]} : vector<2x128xf32> to vector<2x32xf32>
    %108 = arith.negf %107 : vector<2x32xf32>
    %109 = math.exp %108 : vector<2x32xf32>
    %cst_29 = arith.constant 1.000000e+00 : f32
    %110 = vector.broadcast %cst_29 : f32 to vector<2x32xf32>
    %111 = arith.addf %110, %109 : vector<2x32xf32>
    %112 = arith.divf %110, %111 : vector<2x32xf32>
    %113 = vector.extract_strided_slice %100 {offsets = [0, 64], sizes = [2, 32], strides = [1, 1]} : vector<2x128xf32> to vector<2x32xf32>
    %114 = math.tanh %113 : vector<2x32xf32>
    %115 = vector.extract_strided_slice %100 {offsets = [0, 96], sizes = [2, 32], strides = [1, 1]} : vector<2x128xf32> to vector<2x32xf32>
    %116 = arith.negf %115 : vector<2x32xf32>
    %117 = math.exp %116 : vector<2x32xf32>
    %cst_30 = arith.constant 1.000000e+00 : f32
    %118 = vector.broadcast %cst_30 : f32 to vector<2x32xf32>
    %119 = arith.addf %118, %117 : vector<2x32xf32>
    %120 = arith.divf %118, %119 : vector<2x32xf32>
    %121 = arith.mulf %112, %93 : vector<2x32xf32>
    %122 = arith.mulf %106, %114 : vector<2x32xf32>
    %123 = arith.addf %121, %122 : vector<2x32xf32>
    %124 = math.tanh %123 : vector<2x32xf32>
    %125 = arith.mulf %120, %124 : vector<2x32xf32>
    %126 = arith.addi %9, %95 : i32
    %127 = vector.broadcast %126 : i32 to vector<2x1xi32>
    %128 = arith.cmpi slt, %127, %3 : vector<2x1xi32>
    %129 = vector.shape_cast %128 : vector<2x1xi1> to vector<2x1xi1>
    %130 = vector.broadcast %129 : vector<2x1xi1> to vector<2x32xi1>
    %131 = arith.select %130, %125, %90 : vector<2x32xi1>, vector<2x32xf32>
    %132 = vector.shape_cast %128 : vector<2x1xi1> to vector<2x1xi1>
    %133 = vector.broadcast %132 : vector<2x1xi1> to vector<2x32xi1>
    %134 = arith.select %133, %123, %93 : vector<2x32xi1>, vector<2x32xf32>
    %c3_i32_31 = arith.constant 3 : i32
    %c3_i32_32 = arith.constant 3 : i32
    %135 = arith.subi %c3_i32_32, %c3_i32_31 : i32
    %136 = arith.select %6, %135, %c3_i32_31 : i32
    %137 = arith.index_cast %136 : i32 to index
    %c0_33 = arith.constant 0 : index
    %c0_34 = arith.constant 0 : index
    %138 = vector.load %arg2[%137, %c0_33, %c0_34] : memref<4x2x128xf32, #tpu.memory_space<vmem>>, vector<1x2x128xf32>
    %139 = vector.shape_cast %138 : vector<1x2x128xf32> to vector<2x128xf32>
    %cst_35 = arith.constant dense<0.000000e+00> : vector<2x128xf32>
    %140 = tpu.matmul %131, %5, %cst_35 {dimension_numbers = #tpu.dot_dimension_numbers<[1], [0], [0], [1], [0, 0, 1, 1], [], []>} : vector<2x32xf32>, vector<32x128xf32>, vector<2x128xf32> -> vector<2x128xf32>
    %141 = arith.addf %139, %140 : vector<2x128xf32>
    %142 = vector.extract_strided_slice %141 {offsets = [0, 0], sizes = [2, 32], strides = [1, 1]} : vector<2x128xf32> to vector<2x32xf32>
    %143 = arith.negf %142 : vector<2x32xf32>
    %144 = math.exp %143 : vector<2x32xf32>
    %cst_36 = arith.constant 1.000000e+00 : f32
    %145 = vector.broadcast %cst_36 : f32 to vector<2x32xf32>
    %146 = arith.addf %145, %144 : vector<2x32xf32>
    %147 = arith.divf %145, %146 : vector<2x32xf32>
    %148 = vector.extract_strided_slice %141 {offsets = [0, 32], sizes = [2, 32], strides = [1, 1]} : vector<2x128xf32> to vector<2x32xf32>
    %149 = arith.negf %148 : vector<2x32xf32>
    %150 = math.exp %149 : vector<2x32xf32>
    %cst_37 = arith.constant 1.000000e+00 : f32
    %151 = vector.broadcast %cst_37 : f32 to vector<2x32xf32>
    %152 = arith.addf %151, %150 : vector<2x32xf32>
    %153 = arith.divf %151, %152 : vector<2x32xf32>
    %154 = vector.extract_strided_slice %141 {offsets = [0, 64], sizes = [2, 32], strides = [1, 1]} : vector<2x128xf32> to vector<2x32xf32>
    %155 = math.tanh %154 : vector<2x32xf32>
    %156 = vector.extract_strided_slice %141 {offsets = [0, 96], sizes = [2, 32], strides = [1, 1]} : vector<2x128xf32> to vector<2x32xf32>
    %157 = arith.negf %156 : vector<2x32xf32>
    %158 = math.exp %157 : vector<2x32xf32>
    %cst_38 = arith.constant 1.000000e+00 : f32
    %159 = vector.broadcast %cst_38 : f32 to vector<2x32xf32>
    %160 = arith.addf %159, %158 : vector<2x32xf32>
    %161 = arith.divf %159, %160 : vector<2x32xf32>
    %162 = arith.mulf %153, %134 : vector<2x32xf32>
    %163 = arith.mulf %147, %155 : vector<2x32xf32>
    %164 = arith.addf %162, %163 : vector<2x32xf32>
    %165 = math.tanh %164 : vector<2x32xf32>
    %166 = arith.mulf %161, %165 : vector<2x32xf32>
    %167 = arith.addi %9, %136 : i32
    %168 = vector.broadcast %167 : i32 to vector<2x1xi32>
    %169 = arith.cmpi slt, %168, %3 : vector<2x1xi32>
    %170 = vector.shape_cast %169 : vector<2x1xi1> to vector<2x1xi1>
    %171 = vector.broadcast %170 : vector<2x1xi1> to vector<2x32xi1>
    %172 = arith.select %171, %166, %131 : vector<2x32xi1>, vector<2x32xf32>
    %173 = vector.shape_cast %169 : vector<2x1xi1> to vector<2x1xi1>
    %174 = vector.broadcast %173 : vector<2x1xi1> to vector<2x32xi1>
    %175 = arith.select %174, %164, %134 : vector<2x32xi1>, vector<2x32xf32>
    %c4_i32_39 = arith.constant 4 : i32
    %c0_40 = arith.constant 0 : index
    %c0_41 = arith.constant 0 : index
    %176 = vector.load %arg7[%c0_40, %c0_41] : memref<2x32xf32, #tpu.memory_space<vmem>>, vector<2x32xf32>
    tpu.vector_store %arg7[%c0_40, %c0_41], %172 {strides = array<i32>} : memref<2x32xf32, #tpu.memory_space<vmem>>, vector<2x32xf32>,
    %c0_42 = arith.constant 0 : index
    %c0_43 = arith.constant 0 : index
    %177 = vector.load %arg8[%c0_42, %c0_43] : memref<2x32xf32, #tpu.memory_space<vmem>>, vector<2x32xf32>
    tpu.vector_store %arg8[%c0_42, %c0_43], %175 {strides = array<i32>} : memref<2x32xf32, #tpu.memory_space<vmem>>, vector<2x32xf32>,
    %c1_i32_44 = arith.constant 1 : i32
    %178 = arith.cmpi eq, %arg1, %c1_i32_44 : i32
    %179 = arith.extui %178 : i1 to i32
    %c0_i32_45 = arith.constant 0 : i32
    %180 = arith.cmpi ne, %179, %c0_i32_45 : i32
    scf.if %180 {
      %c0_46 = arith.constant 0 : index
      %c0_47 = arith.constant 0 : index
      %181 = vector.load %arg7[%c0_46, %c0_47] : memref<2x32xf32, #tpu.memory_space<vmem>>, vector<2x32xf32>
      %c0_48 = arith.constant 0 : index
      %c0_49 = arith.constant 0 : index
      %c0_50 = arith.constant 0 : index
      %182 = vector.load %arg5[%c0_48, %c0_49, %c0_50] : memref<1x2x32xf32, #tpu.memory_space<vmem>>, vector<1x2x32xf32>
      %183 = vector.shape_cast %182 : vector<1x2x32xf32> to vector<2x32xf32>
      %184 = vector.shape_cast %181 : vector<2x32xf32> to vector<1x2x32xf32>
      tpu.vector_store %arg5[%c0_48, %c0_49, %c0_50], %184 {strides = array<i32>} : memref<1x2x32xf32, #tpu.memory_space<vmem>>, vector<1x2x32xf32>,
      %c0_51 = arith.constant 0 : index
      %c0_52 = arith.constant 0 : index
      %185 = vector.load %arg8[%c0_51, %c0_52] : memref<2x32xf32, #tpu.memory_space<vmem>>, vector<2x32xf32>
      %c0_53 = arith.constant 0 : index
      %c0_54 = arith.constant 0 : index
      %c0_55 = arith.constant 0 : index
      %186 = vector.load %arg6[%c0_53, %c0_54, %c0_55] : memref<1x2x32xf32, #tpu.memory_space<vmem>>, vector<1x2x32xf32>
      %187 = vector.shape_cast %186 : vector<1x2x32xf32> to vector<2x32xf32>
      %188 = vector.shape_cast %185 : vector<2x32xf32> to vector<1x2x32xf32>
      tpu.vector_store %arg6[%c0_53, %c0_54, %c0_55], %188 {strides = array<i32>} : memref<1x2x32xf32, #tpu.memory_space<vmem>>, vector<1x2x32xf32>,
    } else {
    }
    return
  }
  func.func @transform_0(%arg0: i32, %arg1: i32) -> (i32, i32, i32) {
    %c1_i32 = arith.constant 1 : i32
    %0 = arith.subi %c1_i32, %arg0 : i32
    %1 = arith.muli %arg1, %0 : i32
    %c1_i32_0 = arith.constant 1 : i32
    %2 = arith.subi %c1_i32_0, %arg1 : i32
    %3 = arith.muli %2, %arg0 : i32
    %4 = arith.addi %1, %3 : i32
    %c0_i32 = arith.constant 0 : i32
    %c0_i32_1 = arith.constant 0 : i32
    return %4, %c0_i32, %arg0 : i32, i32, i32
  }
  func.func @transform_1(%arg0: i32, %arg1: i32) -> (i32, i32) {
    %c0_i32 = arith.constant 0 : i32
    %c0_i32_0 = arith.constant 0 : i32
    %c0_i32_1 = arith.constant 0 : i32
    return %c0_i32, %c0_i32_0 : i32, i32
  }
  func.func @transform_2(%arg0: i32, %arg1: i32) -> (i32, i32, i32) {
    %c0_i32 = arith.constant 0 : i32
    %c0_i32_0 = arith.constant 0 : i32
    %c0_i32_1 = arith.constant 0 : i32
    return %arg0, %c0_i32, %c0_i32_0 : i32, i32, i32
  }
  func.func @transform_3(%arg0: i32, %arg1: i32) -> (i32, i32, i32) {
    %c0_i32 = arith.constant 0 : i32
    %c0_i32_0 = arith.constant 0 : i32
    %c0_i32_1 = arith.constant 0 : i32
    return %arg0, %c0_i32, %c0_i32_0 : i32, i32, i32
  }
  func.func @transform_4(%arg0: i32, %arg1: i32) -> (i32, i32, i32) {
    %c0_i32 = arith.constant 0 : i32
    %c0_i32_0 = arith.constant 0 : i32
    %c0_i32_1 = arith.constant 0 : i32
    return %arg0, %c0_i32, %c0_i32_0 : i32, i32, i32
  }
}

module attributes {stable_mosaic.version = 11 : i64} {
  func.func @_linear_kernel(%arg0: i32, %arg1: i32, %arg2: i32, %arg3: memref<16x16xf32, #tpu.memory_space<vmem>>, %arg4: memref<16x128xf32, #tpu.memory_space<vmem>>, %arg5: memref<1x128xf32, #tpu.memory_space<vmem>>, %arg6: memref<16x128xf32, #tpu.memory_space<vmem>>, %arg7: memref<16x128xf32, #tpu.memory_space<vmem>>) attributes {dimension_semantics = [#tpu.dimension_semantics<parallel>, #tpu.dimension_semantics<parallel>, #tpu.dimension_semantics<arbitrary>], iteration_bounds = array<i64: 1, 1, 1>, scalar_prefetch = 0 : i64, scratch_operands = 1 : i64, tpu.core_type = #tpu.core_type<tc>, window_params = [{transform_indices = @transform_0, window_bounds = array<i64: 16, 16>}, {transform_indices = @transform_1, window_bounds = array<i64: 16, 128>}, {transform_indices = @transform_2, window_bounds = array<i64: 1, 128>}, {transform_indices = @transform_3, window_bounds = array<i64: 16, 128>}]} {
    %c0_i32 = arith.constant 0 : i32
    %0 = arith.cmpi eq, %arg2, %c0_i32 : i32
    %1 = arith.extui %0 : i1 to i32
    %c0_i32_0 = arith.constant 0 : i32
    %2 = arith.cmpi ne, %1, %c0_i32_0 : i32
    scf.if %2 {
      %cst_10 = arith.constant 0.000000e+00 : f32
      %12 = vector.broadcast %cst_10 : f32 to vector<16x128xf32>
      %c0_11 = arith.constant 0 : index
      %c0_12 = arith.constant 0 : index
      %13 = vector.load %arg7[%c0_11, %c0_12] : memref<16x128xf32, #tpu.memory_space<vmem>>, vector<16x128xf32>
      tpu.vector_store %arg7[%c0_11, %c0_12], %12 {strides = array<i32>} : memref<16x128xf32, #tpu.memory_space<vmem>>, vector<16x128xf32>,
    } else {
    }
    %c0 = arith.constant 0 : index
    %c0_1 = arith.constant 0 : index
    %3 = vector.load %arg7[%c0, %c0_1] : memref<16x128xf32, #tpu.memory_space<vmem>>, vector<16x128xf32>
    %c0_2 = arith.constant 0 : index
    %c0_3 = arith.constant 0 : index
    %4 = vector.load %arg3[%c0_2, %c0_3] : memref<16x16xf32, #tpu.memory_space<vmem>>, vector<16x16xf32>
    %c0_4 = arith.constant 0 : index
    %c0_5 = arith.constant 0 : index
    %5 = vector.load %arg4[%c0_4, %c0_5] : memref<16x128xf32, #tpu.memory_space<vmem>>, vector<16x128xf32>
    %cst = arith.constant dense<0.000000e+00> : vector<16x128xf32>
    %6 = tpu.matmul %4, %5, %cst {dimension_numbers = #tpu.dot_dimension_numbers<[1], [0], [0], [1], [0, 0, 1, 1], [], []>} : vector<16x16xf32>, vector<16x128xf32>, vector<16x128xf32> -> vector<16x128xf32>
    %7 = arith.addf %3, %6 : vector<16x128xf32>
    %c0_6 = arith.constant 0 : index
    %c0_7 = arith.constant 0 : index
    %8 = vector.load %arg7[%c0_6, %c0_7] : memref<16x128xf32, #tpu.memory_space<vmem>>, vector<16x128xf32>
    tpu.vector_store %arg7[%c0_6, %c0_7], %7 {strides = array<i32>} : memref<16x128xf32, #tpu.memory_space<vmem>>, vector<16x128xf32>,
    %c0_i32_8 = arith.constant 0 : i32
    %9 = arith.cmpi eq, %arg2, %c0_i32_8 : i32
    %10 = arith.extui %9 : i1 to i32
    %c0_i32_9 = arith.constant 0 : i32
    %11 = arith.cmpi ne, %10, %c0_i32_9 : i32
    scf.if %11 {
      %c0_10 = arith.constant 0 : index
      %c0_11 = arith.constant 0 : index
      %12 = vector.load %arg7[%c0_10, %c0_11] : memref<16x128xf32, #tpu.memory_space<vmem>>, vector<16x128xf32>
      %c0_12 = arith.constant 0 : index
      %c0_13 = arith.constant 0 : index
      %13 = vector.load %arg5[%c0_12, %c0_13] : memref<1x128xf32, #tpu.memory_space<vmem>>, vector<1x128xf32>
      %14 = vector.broadcast %13 : vector<1x128xf32> to vector<16x128xf32>
      %15 = arith.addf %12, %14 : vector<16x128xf32>
      %c0_14 = arith.constant 0 : index
      %c0_15 = arith.constant 0 : index
      %16 = vector.load %arg6[%c0_14, %c0_15] : memref<16x128xf32, #tpu.memory_space<vmem>>, vector<16x128xf32>
      tpu.vector_store %arg6[%c0_14, %c0_15], %15 {strides = array<i32>} : memref<16x128xf32, #tpu.memory_space<vmem>>, vector<16x128xf32>,
    } else {
    }
    return
  }
  func.func @transform_0(%arg0: i32, %arg1: i32, %arg2: i32) -> (i32, i32) {
    %c0_i32 = arith.constant 0 : i32
    return %arg0, %arg2 : i32, i32
  }
  func.func @transform_1(%arg0: i32, %arg1: i32, %arg2: i32) -> (i32, i32) {
    %c0_i32 = arith.constant 0 : i32
    return %arg2, %arg1 : i32, i32
  }
  func.func @transform_2(%arg0: i32, %arg1: i32, %arg2: i32) -> (i32, i32) {
    %c0_i32 = arith.constant 0 : i32
    %c0_i32_0 = arith.constant 0 : i32
    return %c0_i32, %arg1 : i32, i32
  }
  func.func @transform_3(%arg0: i32, %arg1: i32, %arg2: i32) -> (i32, i32) {
    %c0_i32 = arith.constant 0 : i32
    return %arg0, %arg1 : i32, i32
  }
}

module attributes {stable_mosaic.version = 11 : i64} {
  func.func @_lstm_decode_kernel(%arg0: i32, %arg1: memref<4x2x128xf32, #tpu.memory_space<vmem>>, %arg2: memref<2x1xi32, #tpu.memory_space<vmem>>, %arg3: memref<32x128xf32, #tpu.memory_space<vmem>>, %arg4: memref<2x32xf32, #tpu.memory_space<vmem>>, %arg5: memref<2x32xf32, #tpu.memory_space<vmem>>, %arg6: memref<4x2x32xf32, #tpu.memory_space<vmem>>, %arg7: memref<2x32xf32, #tpu.memory_space<vmem>>, %arg8: memref<2x32xf32, #tpu.memory_space<vmem>>) attributes {dimension_semantics = [#tpu.dimension_semantics<arbitrary>], iteration_bounds = array<i64: 2>, scalar_prefetch = 0 : i64, scratch_operands = 2 : i64, tpu.core_type = #tpu.core_type<tc>, window_params = [{transform_indices = @transform_0, window_bounds = array<i64: 4, 2, 128>}, {pipeline_mode = #tpu.pipeline_mode<synchronous>, transform_indices = @transform_1, window_bounds = array<i64: 2, 1>}, {pipeline_mode = #tpu.pipeline_mode<synchronous>, transform_indices = @transform_2, window_bounds = array<i64: 32, 128>}, {pipeline_mode = #tpu.pipeline_mode<synchronous>, transform_indices = @transform_3, window_bounds = array<i64: 2, 32>}, {pipeline_mode = #tpu.pipeline_mode<synchronous>, transform_indices = @transform_4, window_bounds = array<i64: 2, 32>}, {transform_indices = @transform_5, window_bounds = array<i64: 4, 2, 32>}]} {
    %c0_i32 = arith.constant 0 : i32
    %0 = arith.cmpi eq, %arg0, %c0_i32 : i32
    %1 = arith.extui %0 : i1 to i32
    %c0_i32_0 = arith.constant 0 : i32
    %2 = arith.cmpi ne, %1, %c0_i32_0 : i32
    scf.if %2 {
      %c0_49 = arith.constant 0 : index
      %c0_50 = arith.constant 0 : index
      %198 = vector.load %arg4[%c0_49, %c0_50] : memref<2x32xf32, #tpu.memory_space<vmem>>, vector<2x32xf32>
      %c0_51 = arith.constant 0 : index
      %c0_52 = arith.constant 0 : index
      %199 = vector.load %arg7[%c0_51, %c0_52] : memref<2x32xf32, #tpu.memory_space<vmem>>, vector<2x32xf32>
      tpu.vector_store %arg7[%c0_51, %c0_52], %198 {strides = array<i32>} : memref<2x32xf32, #tpu.memory_space<vmem>>, vector<2x32xf32>,
      %c0_53 = arith.constant 0 : index
      %c0_54 = arith.constant 0 : index
      %200 = vector.load %arg5[%c0_53, %c0_54] : memref<2x32xf32, #tpu.memory_space<vmem>>, vector<2x32xf32>
      %c0_55 = arith.constant 0 : index
      %c0_56 = arith.constant 0 : index
      %201 = vector.load %arg8[%c0_55, %c0_56] : memref<2x32xf32, #tpu.memory_space<vmem>>, vector<2x32xf32>
      tpu.vector_store %arg8[%c0_55, %c0_56], %200 {strides = array<i32>} : memref<2x32xf32, #tpu.memory_space<vmem>>, vector<2x32xf32>,
    } else {
    }
    %c0 = arith.constant 0 : index
    %c0_1 = arith.constant 0 : index
    %3 = vector.load %arg2[%c0, %c0_1] : memref<2x1xi32, #tpu.memory_space<vmem>>, vector<2x1xi32>
    %c0_2 = arith.constant 0 : index
    %c0_3 = arith.constant 0 : index
    %4 = vector.load %arg3[%c0_2, %c0_3] : memref<32x128xf32, #tpu.memory_space<vmem>>, vector<32x128xf32>
    %c4_i32 = arith.constant 4 : i32
    %5 = arith.muli %arg0, %c4_i32 : i32
    %c0_4 = arith.constant 0 : index
    %c0_5 = arith.constant 0 : index
    %6 = vector.load %arg7[%c0_4, %c0_5] : memref<2x32xf32, #tpu.memory_space<vmem>>, vector<2x32xf32>
    %c0_6 = arith.constant 0 : index
    %c0_7 = arith.constant 0 : index
    %7 = vector.load %arg8[%c0_6, %c0_7] : memref<2x32xf32, #tpu.memory_space<vmem>>, vector<2x32xf32>
    %c0_i32_8 = arith.constant 0 : i32
    %8 = arith.index_cast %c0_i32_8 : i32 to index
    %c0_9 = arith.constant 0 : index
    %c0_10 = arith.constant 0 : index
    %9 = vector.load %arg1[%8, %c0_9, %c0_10] : memref<4x2x128xf32, #tpu.memory_space<vmem>>, vector<1x2x128xf32>
    %10 = vector.shape_cast %9 : vector<1x2x128xf32> to vector<2x128xf32>
    %cst = arith.constant dense<0.000000e+00> : vector<2x128xf32>
    %11 = tpu.matmul %6, %4, %cst {dimension_numbers = #tpu.dot_dimension_numbers<[1], [0], [0], [1], [0, 0, 1, 1], [], []>} : vector<2x32xf32>, vector<32x128xf32>, vector<2x128xf32> -> vector<2x128xf32>
    %12 = arith.addf %10, %11 : vector<2x128xf32>
    %13 = vector.extract_strided_slice %12 {offsets = [0, 0], sizes = [2, 32], strides = [1, 1]} : vector<2x128xf32> to vector<2x32xf32>
    %14 = arith.negf %13 : vector<2x32xf32>
    %15 = math.exp %14 : vector<2x32xf32>
    %cst_11 = arith.constant 1.000000e+00 : f32
    %16 = vector.broadcast %cst_11 : f32 to vector<2x32xf32>
    %17 = arith.addf %16, %15 : vector<2x32xf32>
    %18 = arith.divf %16, %17 : vector<2x32xf32>
    %19 = vector.extract_strided_slice %12 {offsets = [0, 32], sizes = [2, 32], strides = [1, 1]} : vector<2x128xf32> to vector<2x32xf32>
    %20 = arith.negf %19 : vector<2x32xf32>
    %21 = math.exp %20 : vector<2x32xf32>
    %cst_12 = arith.constant 1.000000e+00 : f32
    %22 = vector.broadcast %cst_12 : f32 to vector<2x32xf32>
    %23 = arith.addf %22, %21 : vector<2x32xf32>
    %24 = arith.divf %22, %23 : vector<2x32xf32>
    %25 = vector.extract_strided_slice %12 {offsets = [0, 64], sizes = [2, 32], strides = [1, 1]} : vector<2x128xf32> to vector<2x32xf32>
    %26 = math.tanh %25 : vector<2x32xf32>
    %27 = vector.extract_strided_slice %12 {offsets = [0, 96], sizes = [2, 32], strides = [1, 1]} : vector<2x128xf32> to vector<2x32xf32>
    %28 = arith.negf %27 : vector<2x32xf32>
    %29 = math.exp %28 : vector<2x32xf32>
    %cst_13 = arith.constant 1.000000e+00 : f32
    %30 = vector.broadcast %cst_13 : f32 to vector<2x32xf32>
    %31 = arith.addf %30, %29 : vector<2x32xf32>
    %32 = arith.divf %30, %31 : vector<2x32xf32>
    %33 = arith.mulf %24, %7 : vector<2x32xf32>
    %34 = arith.mulf %18, %26 : vector<2x32xf32>
    %35 = arith.addf %33, %34 : vector<2x32xf32>
    %36 = math.tanh %35 : vector<2x32xf32>
    %37 = arith.mulf %32, %36 : vector<2x32xf32>
    %38 = arith.addi %5, %c0_i32_8 : i32
    %39 = vector.broadcast %38 : i32 to vector<2x1xi32>
    %40 = arith.cmpi slt, %39, %3 : vector<2x1xi32>
    %cst_14 = arith.constant 0.000000e+00 : f32
    %41 = vector.shape_cast %40 : vector<2x1xi1> to vector<2x1xi1>
    %42 = vector.broadcast %41 : vector<2x1xi1> to vector<2x32xi1>
    %43 = vector.broadcast %cst_14 : f32 to vector<2x32xf32>
    %44 = arith.select %42, %37, %43 : vector<2x32xi1>, vector<2x32xf32>
    %45 = arith.index_cast %c0_i32_8 : i32 to index
    %c0_15 = arith.constant 0 : index
    %c0_16 = arith.constant 0 : index
    %46 = vector.load %arg6[%45, %c0_15, %c0_16] : memref<4x2x32xf32, #tpu.memory_space<vmem>>, vector<1x2x32xf32>
    %47 = vector.shape_cast %46 : vector<1x2x32xf32> to vector<2x32xf32>
    %48 = vector.shape_cast %44 : vector<2x32xf32> to vector<1x2x32xf32>
    tpu.vector_store %arg6[%45, %c0_15, %c0_16], %48 {strides = array<i32>} : memref<4x2x32xf32, #tpu.memory_space<vmem>>, vector<1x2x32xf32>,
    %49 = vector.shape_cast %40 : vector<2x1xi1> to vector<2x1xi1>
    %50 = vector.broadcast %49 : vector<2x1xi1> to vector<2x32xi1>
    %51 = arith.select %50, %37, %6 : vector<2x32xi1>, vector<2x32xf32>
    %52 = vector.shape_cast %40 : vector<2x1xi1> to vector<2x1xi1>
    %53 = vector.broadcast %52 : vector<2x1xi1> to vector<2x32xi1>
    %54 = arith.select %53, %35, %7 : vector<2x32xi1>, vector<2x32xf32>
    %c1_i32 = arith.constant 1 : i32
    %55 = arith.index_cast %c1_i32 : i32 to index
    %c0_17 = arith.constant 0 : index
    %c0_18 = arith.constant 0 : index
    %56 = vector.load %arg1[%55, %c0_17, %c0_18] : memref<4x2x128xf32, #tpu.memory_space<vmem>>, vector<1x2x128xf32>
    %57 = vector.shape_cast %56 : vector<1x2x128xf32> to vector<2x128xf32>
    %cst_19 = arith.constant dense<0.000000e+00> : vector<2x128xf32>
    %58 = tpu.matmul %51, %4, %cst_19 {dimension_numbers = #tpu.dot_dimension_numbers<[1], [0], [0], [1], [0, 0, 1, 1], [], []>} : vector<2x32xf32>, vector<32x128xf32>, vector<2x128xf32> -> vector<2x128xf32>
    %59 = arith.addf %57, %58 : vector<2x128xf32>
    %60 = vector.extract_strided_slice %59 {offsets = [0, 0], sizes = [2, 32], strides = [1, 1]} : vector<2x128xf32> to vector<2x32xf32>
    %61 = arith.negf %60 : vector<2x32xf32>
    %62 = math.exp %61 : vector<2x32xf32>
    %cst_20 = arith.constant 1.000000e+00 : f32
    %63 = vector.broadcast %cst_20 : f32 to vector<2x32xf32>
    %64 = arith.addf %63, %62 : vector<2x32xf32>
    %65 = arith.divf %63, %64 : vector<2x32xf32>
    %66 = vector.extract_strided_slice %59 {offsets = [0, 32], sizes = [2, 32], strides = [1, 1]} : vector<2x128xf32> to vector<2x32xf32>
    %67 = arith.negf %66 : vector<2x32xf32>
    %68 = math.exp %67 : vector<2x32xf32>
    %cst_21 = arith.constant 1.000000e+00 : f32
    %69 = vector.broadcast %cst_21 : f32 to vector<2x32xf32>
    %70 = arith.addf %69, %68 : vector<2x32xf32>
    %71 = arith.divf %69, %70 : vector<2x32xf32>
    %72 = vector.extract_strided_slice %59 {offsets = [0, 64], sizes = [2, 32], strides = [1, 1]} : vector<2x128xf32> to vector<2x32xf32>
    %73 = math.tanh %72 : vector<2x32xf32>
    %74 = vector.extract_strided_slice %59 {offsets = [0, 96], sizes = [2, 32], strides = [1, 1]} : vector<2x128xf32> to vector<2x32xf32>
    %75 = arith.negf %74 : vector<2x32xf32>
    %76 = math.exp %75 : vector<2x32xf32>
    %cst_22 = arith.constant 1.000000e+00 : f32
    %77 = vector.broadcast %cst_22 : f32 to vector<2x32xf32>
    %78 = arith.addf %77, %76 : vector<2x32xf32>
    %79 = arith.divf %77, %78 : vector<2x32xf32>
    %80 = arith.mulf %71, %54 : vector<2x32xf32>
    %81 = arith.mulf %65, %73 : vector<2x32xf32>
    %82 = arith.addf %80, %81 : vector<2x32xf32>
    %83 = math.tanh %82 : vector<2x32xf32>
    %84 = arith.mulf %79, %83 : vector<2x32xf32>
    %85 = arith.addi %5, %c1_i32 : i32
    %86 = vector.broadcast %85 : i32 to vector<2x1xi32>
    %87 = arith.cmpi slt, %86, %3 : vector<2x1xi32>
    %cst_23 = arith.constant 0.000000e+00 : f32
    %88 = vector.shape_cast %87 : vector<2x1xi1> to vector<2x1xi1>
    %89 = vector.broadcast %88 : vector<2x1xi1> to vector<2x32xi1>
    %90 = vector.broadcast %cst_23 : f32 to vector<2x32xf32>
    %91 = arith.select %89, %84, %90 : vector<2x32xi1>, vector<2x32xf32>
    %92 = arith.index_cast %c1_i32 : i32 to index
    %c0_24 = arith.constant 0 : index
    %c0_25 = arith.constant 0 : index
    %93 = vector.load %arg6[%92, %c0_24, %c0_25] : memref<4x2x32xf32, #tpu.memory_space<vmem>>, vector<1x2x32xf32>
    %94 = vector.shape_cast %93 : vector<1x2x32xf32> to vector<2x32xf32>
    %95 = vector.shape_cast %91 : vector<2x32xf32> to vector<1x2x32xf32>
    tpu.vector_store %arg6[%92, %c0_24, %c0_25], %95 {strides = array<i32>} : memref<4x2x32xf32, #tpu.memory_space<vmem>>, vector<1x2x32xf32>,
    %96 = vector.shape_cast %87 : vector<2x1xi1> to vector<2x1xi1>
    %97 = vector.broadcast %96 : vector<2x1xi1> to vector<2x32xi1>
    %98 = arith.select %97, %84, %51 : vector<2x32xi1>, vector<2x32xf32>
    %99 = vector.shape_cast %87 : vector<2x1xi1> to vector<2x1xi1>
    %100 = vector.broadcast %99 : vector<2x1xi1> to vector<2x32xi1>
    %101 = arith.select %100, %82, %54 : vector<2x32xi1>, vector<2x32xf32>
    %c2_i32 = arith.constant 2 : i32
    %102 = arith.index_cast %c2_i32 : i32 to index
    %c0_26 = arith.constant 0 : index
    %c0_27 = arith.constant 0 : index
    %103 = vector.load %arg1[%102, %c0_26, %c0_27] : memref<4x2x128xf32, #tpu.memory_space<vmem>>, vector<1x2x128xf32>
    %104 = vector.shape_cast %103 : vector<1x2x128xf32> to vector<2x128xf32>
    %cst_28 = arith.constant dense<0.000000e+00> : vector<2x128xf32>
    %105 = tpu.matmul %98, %4, %cst_28 {dimension_numbers = #tpu.dot_dimension_numbers<[1], [0], [0], [1], [0, 0, 1, 1], [], []>} : vector<2x32xf32>, vector<32x128xf32>, vector<2x128xf32> -> vector<2x128xf32>
    %106 = arith.addf %104, %105 : vector<2x128xf32>
    %107 = vector.extract_strided_slice %106 {offsets = [0, 0], sizes = [2, 32], strides = [1, 1]} : vector<2x128xf32> to vector<2x32xf32>
    %108 = arith.negf %107 : vector<2x32xf32>
    %109 = math.exp %108 : vector<2x32xf32>
    %cst_29 = arith.constant 1.000000e+00 : f32
    %110 = vector.broadcast %cst_29 : f32 to vector<2x32xf32>
    %111 = arith.addf %110, %109 : vector<2x32xf32>
    %112 = arith.divf %110, %111 : vector<2x32xf32>
    %113 = vector.extract_strided_slice %106 {offsets = [0, 32], sizes = [2, 32], strides = [1, 1]} : vector<2x128xf32> to vector<2x32xf32>
    %114 = arith.negf %113 : vector<2x32xf32>
    %115 = math.exp %114 : vector<2x32xf32>
    %cst_30 = arith.constant 1.000000e+00 : f32
    %116 = vector.broadcast %cst_30 : f32 to vector<2x32xf32>
    %117 = arith.addf %116, %115 : vector<2x32xf32>
    %118 = arith.divf %116, %117 : vector<2x32xf32>
    %119 = vector.extract_strided_slice %106 {offsets = [0, 64], sizes = [2, 32], strides = [1, 1]} : vector<2x128xf32> to vector<2x32xf32>
    %120 = math.tanh %119 : vector<2x32xf32>
    %121 = vector.extract_strided_slice %106 {offsets = [0, 96], sizes = [2, 32], strides = [1, 1]} : vector<2x128xf32> to vector<2x32xf32>
    %122 = arith.negf %121 : vector<2x32xf32>
    %123 = math.exp %122 : vector<2x32xf32>
    %cst_31 = arith.constant 1.000000e+00 : f32
    %124 = vector.broadcast %cst_31 : f32 to vector<2x32xf32>
    %125 = arith.addf %124, %123 : vector<2x32xf32>
    %126 = arith.divf %124, %125 : vector<2x32xf32>
    %127 = arith.mulf %118, %101 : vector<2x32xf32>
    %128 = arith.mulf %112, %120 : vector<2x32xf32>
    %129 = arith.addf %127, %128 : vector<2x32xf32>
    %130 = math.tanh %129 : vector<2x32xf32>
    %131 = arith.mulf %126, %130 : vector<2x32xf32>
    %132 = arith.addi %5, %c2_i32 : i32
    %133 = vector.broadcast %132 : i32 to vector<2x1xi32>
    %134 = arith.cmpi slt, %133, %3 : vector<2x1xi32>
    %cst_32 = arith.constant 0.000000e+00 : f32
    %135 = vector.shape_cast %134 : vector<2x1xi1> to vector<2x1xi1>
    %136 = vector.broadcast %135 : vector<2x1xi1> to vector<2x32xi1>
    %137 = vector.broadcast %cst_32 : f32 to vector<2x32xf32>
    %138 = arith.select %136, %131, %137 : vector<2x32xi1>, vector<2x32xf32>
    %139 = arith.index_cast %c2_i32 : i32 to index
    %c0_33 = arith.constant 0 : index
    %c0_34 = arith.constant 0 : index
    %140 = vector.load %arg6[%139, %c0_33, %c0_34] : memref<4x2x32xf32, #tpu.memory_space<vmem>>, vector<1x2x32xf32>
    %141 = vector.shape_cast %140 : vector<1x2x32xf32> to vector<2x32xf32>
    %142 = vector.shape_cast %138 : vector<2x32xf32> to vector<1x2x32xf32>
    tpu.vector_store %arg6[%139, %c0_33, %c0_34], %142 {strides = array<i32>} : memref<4x2x32xf32, #tpu.memory_space<vmem>>, vector<1x2x32xf32>,
    %143 = vector.shape_cast %134 : vector<2x1xi1> to vector<2x1xi1>
    %144 = vector.broadcast %143 : vector<2x1xi1> to vector<2x32xi1>
    %145 = arith.select %144, %131, %98 : vector<2x32xi1>, vector<2x32xf32>
    %146 = vector.shape_cast %134 : vector<2x1xi1> to vector<2x1xi1>
    %147 = vector.broadcast %146 : vector<2x1xi1> to vector<2x32xi1>
    %148 = arith.select %147, %129, %101 : vector<2x32xi1>, vector<2x32xf32>
    %c3_i32 = arith.constant 3 : i32
    %149 = arith.index_cast %c3_i32 : i32 to index
    %c0_35 = arith.constant 0 : index
    %c0_36 = arith.constant 0 : index
    %150 = vector.load %arg1[%149, %c0_35, %c0_36] : memref<4x2x128xf32, #tpu.memory_space<vmem>>, vector<1x2x128xf32>
    %151 = vector.shape_cast %150 : vector<1x2x128xf32> to vector<2x128xf32>
    %cst_37 = arith.constant dense<0.000000e+00> : vector<2x128xf32>
    %152 = tpu.matmul %145, %4, %cst_37 {dimension_numbers = #tpu.dot_dimension_numbers<[1], [0], [0], [1], [0, 0, 1, 1], [], []>} : vector<2x32xf32>, vector<32x128xf32>, vector<2x128xf32> -> vector<2x128xf32>
    %153 = arith.addf %151, %152 : vector<2x128xf32>
    %154 = vector.extract_strided_slice %153 {offsets = [0, 0], sizes = [2, 32], strides = [1, 1]} : vector<2x128xf32> to vector<2x32xf32>
    %155 = arith.negf %154 : vector<2x32xf32>
    %156 = math.exp %155 : vector<2x32xf32>
    %cst_38 = arith.constant 1.000000e+00 : f32
    %157 = vector.broadcast %cst_38 : f32 to vector<2x32xf32>
    %158 = arith.addf %157, %156 : vector<2x32xf32>
    %159 = arith.divf %157, %158 : vector<2x32xf32>
    %160 = vector.extract_strided_slice %153 {offsets = [0, 32], sizes = [2, 32], strides = [1, 1]} : vector<2x128xf32> to vector<2x32xf32>
    %161 = arith.negf %160 : vector<2x32xf32>
    %162 = math.exp %161 : vector<2x32xf32>
    %cst_39 = arith.constant 1.000000e+00 : f32
    %163 = vector.broadcast %cst_39 : f32 to vector<2x32xf32>
    %164 = arith.addf %163, %162 : vector<2x32xf32>
    %165 = arith.divf %163, %164 : vector<2x32xf32>
    %166 = vector.extract_strided_slice %153 {offsets = [0, 64], sizes = [2, 32], strides = [1, 1]} : vector<2x128xf32> to vector<2x32xf32>
    %167 = math.tanh %166 : vector<2x32xf32>
    %168 = vector.extract_strided_slice %153 {offsets = [0, 96], sizes = [2, 32], strides = [1, 1]} : vector<2x128xf32> to vector<2x32xf32>
    %169 = arith.negf %168 : vector<2x32xf32>
    %170 = math.exp %169 : vector<2x32xf32>
    %cst_40 = arith.constant 1.000000e+00 : f32
    %171 = vector.broadcast %cst_40 : f32 to vector<2x32xf32>
    %172 = arith.addf %171, %170 : vector<2x32xf32>
    %173 = arith.divf %171, %172 : vector<2x32xf32>
    %174 = arith.mulf %165, %148 : vector<2x32xf32>
    %175 = arith.mulf %159, %167 : vector<2x32xf32>
    %176 = arith.addf %174, %175 : vector<2x32xf32>
    %177 = math.tanh %176 : vector<2x32xf32>
    %178 = arith.mulf %173, %177 : vector<2x32xf32>
    %179 = arith.addi %5, %c3_i32 : i32
    %180 = vector.broadcast %179 : i32 to vector<2x1xi32>
    %181 = arith.cmpi slt, %180, %3 : vector<2x1xi32>
    %cst_41 = arith.constant 0.000000e+00 : f32
    %182 = vector.shape_cast %181 : vector<2x1xi1> to vector<2x1xi1>
    %183 = vector.broadcast %182 : vector<2x1xi1> to vector<2x32xi1>
    %184 = vector.broadcast %cst_41 : f32 to vector<2x32xf32>
    %185 = arith.select %183, %178, %184 : vector<2x32xi1>, vector<2x32xf32>
    %186 = arith.index_cast %c3_i32 : i32 to index
    %c0_42 = arith.constant 0 : index
    %c0_43 = arith.constant 0 : index
    %187 = vector.load %arg6[%186, %c0_42, %c0_43] : memref<4x2x32xf32, #tpu.memory_space<vmem>>, vector<1x2x32xf32>
    %188 = vector.shape_cast %187 : vector<1x2x32xf32> to vector<2x32xf32>
    %189 = vector.shape_cast %185 : vector<2x32xf32> to vector<1x2x32xf32>
    tpu.vector_store %arg6[%186, %c0_42, %c0_43], %189 {strides = array<i32>} : memref<4x2x32xf32, #tpu.memory_space<vmem>>, vector<1x2x32xf32>,
    %190 = vector.shape_cast %181 : vector<2x1xi1> to vector<2x1xi1>
    %191 = vector.broadcast %190 : vector<2x1xi1> to vector<2x32xi1>
    %192 = arith.select %191, %178, %145 : vector<2x32xi1>, vector<2x32xf32>
    %193 = vector.shape_cast %181 : vector<2x1xi1> to vector<2x1xi1>
    %194 = vector.broadcast %193 : vector<2x1xi1> to vector<2x32xi1>
    %195 = arith.select %194, %176, %148 : vector<2x32xi1>, vector<2x32xf32>
    %c4_i32_44 = arith.constant 4 : i32
    %c0_45 = arith.constant 0 : index
    %c0_46 = arith.constant 0 : index
    %196 = vector.load %arg7[%c0_45, %c0_46] : memref<2x32xf32, #tpu.memory_space<vmem>>, vector<2x32xf32>
    tpu.vector_store %arg7[%c0_45, %c0_46], %192 {strides = array<i32>} : memref<2x32xf32, #tpu.memory_space<vmem>>, vector<2x32xf32>,
    %c0_47 = arith.constant 0 : index
    %c0_48 = arith.constant 0 : index
    %197 = vector.load %arg8[%c0_47, %c0_48] : memref<2x32xf32, #tpu.memory_space<vmem>>, vector<2x32xf32>
    tpu.vector_store %arg8[%c0_47, %c0_48], %195 {strides = array<i32>} : memref<2x32xf32, #tpu.memory_space<vmem>>, vector<2x32xf32>,
    return
  }
  func.func @transform_0(%arg0: i32) -> (i32, i32, i32) {
    %c0_i32 = arith.constant 0 : i32
    %c0_i32_0 = arith.constant 0 : i32
    %c0_i32_1 = arith.constant 0 : i32
    return %arg0, %c0_i32, %c0_i32_0 : i32, i32, i32
  }
  func.func @transform_1(%arg0: i32) -> (i32, i32) {
    %c0_i32 = arith.constant 0 : i32
    %c0_i32_0 = arith.constant 0 : i32
    %c0_i32_1 = arith.constant 0 : i32
    return %c0_i32, %c0_i32_0 : i32, i32
  }
  func.func @transform_2(%arg0: i32) -> (i32, i32) {
    %c0_i32 = arith.constant 0 : i32
    %c0_i32_0 = arith.constant 0 : i32
    %c0_i32_1 = arith.constant 0 : i32
    return %c0_i32, %c0_i32_0 : i32, i32
  }
  func.func @transform_3(%arg0: i32) -> (i32, i32) {
    %c0_i32 = arith.constant 0 : i32
    %c0_i32_0 = arith.constant 0 : i32
    %c0_i32_1 = arith.constant 0 : i32
    return %c0_i32, %c0_i32_0 : i32, i32
  }
  func.func @transform_4(%arg0: i32) -> (i32, i32) {
    %c0_i32 = arith.constant 0 : i32
    %c0_i32_0 = arith.constant 0 : i32
    %c0_i32_1 = arith.constant 0 : i32
    return %c0_i32, %c0_i32_0 : i32, i32
  }
  func.func @transform_5(%arg0: i32) -> (i32, i32, i32) {
    %c0_i32 = arith.constant 0 : i32
    %c0_i32_0 = arith.constant 0 : i32
    %c0_i32_1 = arith.constant 0 : i32
    return %arg0, %c0_i32, %c0_i32_0 : i32, i32, i32
  }
}

module attributes {stable_mosaic.version = 11 : i64} {
  func.func @_linear_kernel(%arg0: i32, %arg1: i32, %arg2: i32, %arg3: memref<16x32xf32, #tpu.memory_space<vmem>>, %arg4: memref<32x64xf32, #tpu.memory_space<vmem>>, %arg5: memref<1x64xf32, #tpu.memory_space<vmem>>, %arg6: memref<16x64xf32, #tpu.memory_space<vmem>>, %arg7: memref<16x64xf32, #tpu.memory_space<vmem>>) attributes {dimension_semantics = [#tpu.dimension_semantics<parallel>, #tpu.dimension_semantics<parallel>, #tpu.dimension_semantics<arbitrary>], iteration_bounds = array<i64: 1, 1, 1>, scalar_prefetch = 0 : i64, scratch_operands = 1 : i64, tpu.core_type = #tpu.core_type<tc>, window_params = [{transform_indices = @transform_0, window_bounds = array<i64: 16, 32>}, {transform_indices = @transform_1, window_bounds = array<i64: 32, 64>}, {transform_indices = @transform_2, window_bounds = array<i64: 1, 64>}, {transform_indices = @transform_3, window_bounds = array<i64: 16, 64>}]} {
    %c0_i32 = arith.constant 0 : i32
    %0 = arith.cmpi eq, %arg2, %c0_i32 : i32
    %1 = arith.extui %0 : i1 to i32
    %c0_i32_0 = arith.constant 0 : i32
    %2 = arith.cmpi ne, %1, %c0_i32_0 : i32
    scf.if %2 {
      %cst_10 = arith.constant 0.000000e+00 : f32
      %12 = vector.broadcast %cst_10 : f32 to vector<16x64xf32>
      %c0_11 = arith.constant 0 : index
      %c0_12 = arith.constant 0 : index
      %13 = vector.load %arg7[%c0_11, %c0_12] : memref<16x64xf32, #tpu.memory_space<vmem>>, vector<16x64xf32>
      tpu.vector_store %arg7[%c0_11, %c0_12], %12 {strides = array<i32>} : memref<16x64xf32, #tpu.memory_space<vmem>>, vector<16x64xf32>,
    } else {
    }
    %c0 = arith.constant 0 : index
    %c0_1 = arith.constant 0 : index
    %3 = vector.load %arg7[%c0, %c0_1] : memref<16x64xf32, #tpu.memory_space<vmem>>, vector<16x64xf32>
    %c0_2 = arith.constant 0 : index
    %c0_3 = arith.constant 0 : index
    %4 = vector.load %arg3[%c0_2, %c0_3] : memref<16x32xf32, #tpu.memory_space<vmem>>, vector<16x32xf32>
    %c0_4 = arith.constant 0 : index
    %c0_5 = arith.constant 0 : index
    %5 = vector.load %arg4[%c0_4, %c0_5] : memref<32x64xf32, #tpu.memory_space<vmem>>, vector<32x64xf32>
    %cst = arith.constant dense<0.000000e+00> : vector<16x64xf32>
    %6 = tpu.matmul %4, %5, %cst {dimension_numbers = #tpu.dot_dimension_numbers<[1], [0], [0], [1], [0, 0, 1, 1], [], []>} : vector<16x32xf32>, vector<32x64xf32>, vector<16x64xf32> -> vector<16x64xf32>
    %7 = arith.addf %3, %6 : vector<16x64xf32>
    %c0_6 = arith.constant 0 : index
    %c0_7 = arith.constant 0 : index
    %8 = vector.load %arg7[%c0_6, %c0_7] : memref<16x64xf32, #tpu.memory_space<vmem>>, vector<16x64xf32>
    tpu.vector_store %arg7[%c0_6, %c0_7], %7 {strides = array<i32>} : memref<16x64xf32, #tpu.memory_space<vmem>>, vector<16x64xf32>,
    %c0_i32_8 = arith.constant 0 : i32
    %9 = arith.cmpi eq, %arg2, %c0_i32_8 : i32
    %10 = arith.extui %9 : i1 to i32
    %c0_i32_9 = arith.constant 0 : i32
    %11 = arith.cmpi ne, %10, %c0_i32_9 : i32
    scf.if %11 {
      %c0_10 = arith.constant 0 : index
      %c0_11 = arith.constant 0 : index
      %12 = vector.load %arg7[%c0_10, %c0_11] : memref<16x64xf32, #tpu.memory_space<vmem>>, vector<16x64xf32>
      %c0_12 = arith.constant 0 : index
      %c0_13 = arith.constant 0 : index
      %13 = vector.load %arg5[%c0_12, %c0_13] : memref<1x64xf32, #tpu.memory_space<vmem>>, vector<1x64xf32>
      %14 = vector.broadcast %13 : vector<1x64xf32> to vector<16x64xf32>
      %15 = arith.addf %12, %14 : vector<16x64xf32>
      %c0_14 = arith.constant 0 : index
      %c0_15 = arith.constant 0 : index
      %16 = vector.load %arg6[%c0_14, %c0_15] : memref<16x64xf32, #tpu.memory_space<vmem>>, vector<16x64xf32>
      tpu.vector_store %arg6[%c0_14, %c0_15], %15 {strides = array<i32>} : memref<16x64xf32, #tpu.memory_space<vmem>>, vector<16x64xf32>,
    } else {
    }
    return
  }
  func.func @transform_0(%arg0: i32, %arg1: i32, %arg2: i32) -> (i32, i32) {
    %c0_i32 = arith.constant 0 : i32
    return %arg0, %arg2 : i32, i32
  }
  func.func @transform_1(%arg0: i32, %arg1: i32, %arg2: i32) -> (i32, i32) {
    %c0_i32 = arith.constant 0 : i32
    return %arg2, %arg1 : i32, i32
  }
  func.func @transform_2(%arg0: i32, %arg1: i32, %arg2: i32) -> (i32, i32) {
    %c0_i32 = arith.constant 0 : i32
    %c0_i32_0 = arith.constant 0 : i32
    return %c0_i32, %arg1 : i32, i32
  }
  func.func @transform_3(%arg0: i32, %arg1: i32, %arg2: i32) -> (i32, i32) {
    %c0_i32 = arith.constant 0 : i32
    return %arg0, %arg1 : i32, i32
  }
}

</mosaic_0001>

<llo_original>
// kernel: naive_seq2seq_forward.5
$region0: #{naive_seq2seq_forward.5}
  #allocation0 [shape = 'u32[]', space=smem, size = 0x4, offset = 0x4, fixed_abs, tag = 'smem constant byte address 0x4 - core index']
  #allocation1 [shape = 'u32[144,128]{1,0:T(1,128)}', space=vmem, size = 0x12000, scoped, tag = 'internal scratch']
  #allocation2 [shape = 'f32[16,256]{1,0:T(8,128)}', space=vmem, size = 0x4000, scoped, tag = 'scratch operand']
  %s0 = inlined_call_operand.hbm [shape: f32[16,16], index: 0, kind: input, shape index: {}]
  %s1 = inlined_call_operand.hbm [shape: f32[16,256], index: 1, kind: input, shape index: {}]
  %s2 = inlined_call_operand.hbm [shape: f32[1,256], index: 2, kind: input, shape index: {}]
  %s3 = inlined_call_operand.hbm [shape: f32[16,256], index: 3, kind: output, shape index: {}]
  %s4 = sld [smem:[#allocation0]]
  $region42: #{naive_seq2seq_forward.5} parent=0
    _
  %s6 = ssub.s32 1, %s4
  %s7 = scalar_select 0, %s6, %s4
  $region1: #{naive_seq2seq_forward.5} parent=0
    #allocation3 [shape = 'u8[8192]{0}', space=vmem, size = 0x2000, scoped, tag = 'input window, operand 0, single buffered']
    #allocation4 [shape = 's32[1]{0}', space=sflag, size = 0x4, scoped, tag = 'scoped memory for naive_seq2seq_forward.5']
    #allocation5 [shape = 's32[1]{0}', space=sflag, size = 0x4, scoped, tag = 'scoped memory for naive_seq2seq_forward.5']
    #allocation6 [shape = 'u8[16384]{0}', space=vmem, size = 0x4000, scoped, tag = 'input window, operand 1, single buffered']
    #allocation7 [shape = 's32[1]{0}', space=sflag, size = 0x4, scoped, tag = 'scoped memory for naive_seq2seq_forward.5']
    #allocation8 [shape = 'u8[1024]{0}', space=vmem, size = 0x400, scoped, tag = 'input window, operand 2, single buffered']
    #allocation9 [shape = 'u8[16384]{0}', space=vmem, size = 0x4000, scoped, tag = 'output window, operand 0, single buffered']
    %8 = vsyncpa [#allocation4], 0
    %9 = vsyncpa [#allocation7], 0
    %10 = vsyncpa [#allocation5], 0
    // Predicated region
    $region2: #{naive_seq2seq_forward.5} parent=1 // pred_check
      _
    $region3: #{naive_seq2seq_forward.5} parent=1 // pred_check_branch
      %12 = sbr.rel (0) target = $region5
    $region4: #{naive_seq2seq_forward.5} parent=1 // pred_region
      %s14 = ssub.s32 256, 256
      %15 = vsyncadd [#allocation4], %s14
      %s16 = sshll.u32 [#allocation3], 4
      %s17 = int_to_ptr.vmem [resolvable:$true] %s16
      %22 = dma.hbm_to_vmem [thread:$0]  %s0, 256, %s17, [#allocation4], 128, 128, 8
    $region5: #{naive_seq2seq_forward.5} parent=1 // pred_fallthru
      _
    // Predicated region
    $region6: #{naive_seq2seq_forward.5} parent=1 // pred_check
      _
    $region7: #{naive_seq2seq_forward.5} parent=1 // pred_check_branch
      %24 = sbr.rel (0) target = $region9
    $region8: #{naive_seq2seq_forward.5} parent=1 // pred_region
      %s26 = ssub.s32 512, 512
      %27 = vsyncadd [#allocation7], %s26
      %s28 = sshll.u32 [#allocation6], 4
      %s29 = int_to_ptr.vmem [resolvable:$true] %s28
      %34 = dma.hbm_to_vmem [thread:$0]  %s1, 512, %s29, [#allocation7], 256, 256, 16
    $region9: #{naive_seq2seq_forward.5} parent=1 // pred_fallthru
      _
    // Predicated region
    $region10: #{naive_seq2seq_forward.5} parent=1 // pred_check
      _
    $region11: #{naive_seq2seq_forward.5} parent=1 // pred_check_branch
      %36 = sbr.rel (0) target = $region13
    $region12: #{naive_seq2seq_forward.5} parent=1 // pred_region
      %s38 = ssub.s32 32, 32
      %39 = vsyncadd [#allocation7], %s38
      %s41 = sshll.u32 [#allocation8], 4
      %s42 = int_to_ptr.vmem [resolvable:$true] %s41
      %44 = dma.hbm_to_vmem [thread:$0]  %s2, 32, %s42, [#allocation7]
    $region13: #{naive_seq2seq_forward.5} parent=1 // pred_fallthru
      _
    // Predicated region
    $region14: #{naive_seq2seq_forward.5} parent=1 // pred_check
      _
    $region15: #{naive_seq2seq_forward.5} parent=1 // pred_check_branch
      %46 = sbr.rel (0) target = $region17
    $region16: #{naive_seq2seq_forward.5} parent=1 // pred_region
      %47 = dma.done [#allocation4], 256
    $region17: #{naive_seq2seq_forward.5} parent=1 // pred_fallthru
      _
    // Predicated region
    $region18: #{naive_seq2seq_forward.5} parent=1 // pred_check
      _
    $region19: #{naive_seq2seq_forward.5} parent=1 // pred_check_branch
      %49 = sbr.rel (0) target = $region21
    $region20: #{naive_seq2seq_forward.5} parent=1 // pred_region
      %50 = dma.done [#allocation7], 512
    $region21: #{naive_seq2seq_forward.5} parent=1 // pred_fallthru
      _
    // Predicated region
    $region22: #{naive_seq2seq_forward.5} parent=1 // pred_check
      _
    $region23: #{naive_seq2seq_forward.5} parent=1 // pred_check_branch
      %52 = sbr.rel (0) target = $region25
    $region24: #{naive_seq2seq_forward.5} parent=1 // pred_region
      %53 = dma.done [#allocation7], 32
    $region25: #{naive_seq2seq_forward.5} parent=1 // pred_fallthru
      _
    %p54 = scmp.eq.s32.totalorder 0, 0
    // Predicated region
    $region26: #{naive_seq2seq_forward.5} parent=1 // pred_check
      %p55 = pneg %p54
    $region27: #{naive_seq2seq_forward.5} parent=1 // pred_check_branch
      %57 = sbr.rel (%p55) target = $region29
    $region28: #{naive_seq2seq_forward.5} parent=1 // pred_region
      %58 = vst [vmem:[#allocation2] sm:$0xff] 0.0
      %59 = vst [vmem:[#allocation2 + $0x8] sm:$0xff] 0.0
      %60 = vst [vmem:[#allocation2 + $0x10] sm:$0xff] 0.0
      %61 = vst [vmem:[#allocation2 + $0x18] sm:$0xff] 0.0
    $region29: #{naive_seq2seq_forward.5} parent=1 // pred_fallthru
      _
    %v62 = vld [vmem:[#allocation2] sm:$0xff]
    %v63 = vld [vmem:[#allocation2 + $0x8] sm:$0xff]
    %v64 = vld [vmem:[#allocation2 + $0x10] sm:$0xff]
    %v65 = vld [vmem:[#allocation2 + $0x18] sm:$0xff]
    %v66 = vld [vmem:[#allocation3] sm:$0xff]
    %v67 = vld [vmem:[#allocation3 + $0x8] sm:$0xff]
    %v68 = vld [vmem:[#allocation6] sm:$0xff]
    %v69 = vld [vmem:[#allocation6 + $0x8] sm:$0xff]
    %v70 = vld [vmem:[#allocation6 + $0x10] sm:$0xff]
    %v71 = vld [vmem:[#allocation6 + $0x18] sm:$0xff]
    %vm72 = vcmask 130048
    %v74 = vsel %vm72, %v66, 0
    %v77 = vsel %vm72, %v67, 0
    %79 = vmatprep.subr.mxu0 %v69
    %80 = vmatpush1.msra.mxu0 %v68
    %81 = vmatprep.subr.mxu0 %v71
    %82 = vmatpush1.msra.mxu0 %v70
    %83 = vmatprep.subr.mxu0 0.0
    %84 = vmatpush1.msra.mxu0 0.0
    %85 = vmatprep.subr.mxu0 0.0
    %86 = vmatpush1.msra.mxu0 0.0
    %87 = vmatprep.subr.mxu0 0.0
    %88 = vmatpush1.msra.mxu0 0.0
    %89 = vmatprep.subr.mxu0 0.0
    %90 = vmatpush1.msra.mxu0 0.0
    %91 = vmatprep.subr.mxu0 0.0
    %92 = vmatpush1.msra.mxu0 0.0
    %93 = vmatprep.subr.mxu0 0.0
    %94 = vmatpush1.msra.mxu0 0.0
    %95 = vmatprep.subr.mxu0 0.0
    %96 = vmatpush1.msra.mxu0 0.0
    %97 = vmatprep.subr.mxu0 0.0
    %98 = vmatpush1.msra.mxu0 0.0
    %99 = vmatprep.subr.mxu0 0.0
    %100 = vmatpush1.msra.mxu0 0.0
    %101 = vmatprep.subr.mxu0 0.0
    %102 = vmatpush1.msra.mxu0 0.0
    %103 = vmatprep.subr.mxu0 0.0
    %104 = vmatpush1.msra.mxu0 0.0
    %105 = vmatprep.subr.mxu0 0.0
    %106 = vmatpush1.msra.mxu0 0.0
    %107 = vmatprep.subr.mxu0 0.0
    %108 = vmatpush1.msra.mxu0 0.0
    %109 = vmatprep.subr.mxu0 0.0
    %110 = vmatpush1.msra.mxu0 0.0
    %111 = vmatprep.subr.mxu0 0.0
    %112 = vmatpush1.msra.mxu0 0.0
    %113 = vmatprep.subr.mxu0 0.0
    %114 = vmatpush1.msra.mxu0 0.0
    %115 = vmatprep.subr.mxu0 0.0
    %116 = vmatpush1.msra.mxu0 0.0
    %117 = vmatprep.subr.mxu0 0.0
    %118 = vmatpush1.msra.mxu0 0.0
    %119 = vmatprep.subr.mxu0 0.0
    %120 = vmatpush1.msra.mxu0 0.0
    %121 = vmatprep.subr.mxu0 0.0
    %122 = vmatpush1.msra.mxu0 0.0
    %123 = vmatprep.subr.mxu0 0.0
    %124 = vmatpush1.msra.mxu0 0.0
    %125 = vmatprep.subr.mxu0 0.0
    %126 = vmatpush1.msra.mxu0 0.0
    %127 = vmatprep.subr.mxu0 0.0
    %128 = vmatpush1.msra.mxu0 0.0
    %129 = vmatprep.subr.mxu0 0.0
    %130 = vmatpush1.msra.mxu0 0.0
    %131 = vmatprep.subr.mxu0 0.0
    %132 = vmatpush1.msra.mxu0 0.0
    %133 = vmatprep.subr.mxu0 0.0
    %134 = vmatpush1.msra.mxu0 0.0
    %135 = vmatprep.subr.mxu0 0.0
    %136 = vmatpush1.msra.mxu0 0.0
    %137 = vmatprep.subr.mxu0 0.0
    %138 = vmatpush1.msra.mxu0 0.0
    %139 = vmatprep.subr.mxu0 0.0
    %140 = vmatpush1.msra.mxu0 0.0
    %141 = vmatprep.subr.mxu0 0.0
    %142 = vmatpush1.msra.mxu0 0.0
    %143 = vmatprep.mubr.f32.mxu0 0.0
    %144 = vmatmul.mubr.f32.gmra.mrb[0].mxu0 %v74
    %v145 = vpop.f32.mrb[0].mxu0
    %v146 = vadd.f32 0.0, %v145
    %v147 = vpop.f32.mrb[0].mxu0
    %v148 = vadd.f32 0.0, %v147
    %149 = vmatprep.mubr.f32.mxu0 0.0
    %150 = vmatmul.mubr.f32.gmra.mrb[0].mxu0 %v77
    %v151 = vpop.f32.mrb[0].mxu0
    %v152 = vadd.f32 0.0, %v151
    %v153 = vpop.f32.mrb[0].mxu0
    %v154 = vadd.f32 0.0, %v153
    %155 = vdwg.mxu0
    %v156 = vadd.f32 %v62, %v146
    %v157 = vadd.f32 %v63, %v148
    %v158 = vadd.f32 %v64, %v152
    %v159 = vadd.f32 %v65, %v154
    %160 = vst [vmem:[#allocation2] sm:$0xff] %v156
    %161 = vst [vmem:[#allocation2 + $0x8] sm:$0xff] %v157
    %162 = vst [vmem:[#allocation2 + $0x10] sm:$0xff] %v158
    %163 = vst [vmem:[#allocation2 + $0x18] sm:$0xff] %v159
    // Predicated region
    $region30: #{naive_seq2seq_forward.5} parent=1 // pred_check
      %p164 = pneg %p54
    $region31: #{naive_seq2seq_forward.5} parent=1 // pred_check_branch
      %166 = sbr.rel (%p164) target = $region33
    $region32: #{naive_seq2seq_forward.5} parent=1 // pred_region
      %v167 = vld [vmem:[#allocation2] sm:$0xff]
      %v168 = vld [vmem:[#allocation2 + $0x8] sm:$0xff]
      %v169 = vld [vmem:[#allocation2 + $0x10] sm:$0xff]
      %v170 = vld [vmem:[#allocation2 + $0x18] sm:$0xff]
      %v171 = vld [vmem:[#allocation8] sm:$0x3]
      %v173 = vlaneseq
      %v174 = vshrl.u32 %v173, 7
      %v175 = vsub.s32 0, %v174
      %v176 = vrot.slane %v171, %v175
      %v177 = vlaneseq
      %v178 = vshrl.u32 %v177, 7
      %v179 = vsub.s32 1, %v178
      %v180 = vrot.slane %v171, %v179
      %v183 = vadd.f32 %v167, %v176
      %v184 = vadd.f32 %v168, %v180
      %v185 = vadd.f32 %v169, %v176
      %v186 = vadd.f32 %v170, %v180
      %187 = vst [vmem:[#allocation9] sm:$0xff] %v183
      %188 = vst [vmem:[#allocation9 + $0x8] sm:$0xff] %v184
      %189 = vst [vmem:[#allocation9 + $0x10] sm:$0xff] %v185
      %190 = vst [vmem:[#allocation9 + $0x18] sm:$0xff] %v186
    $region33: #{naive_seq2seq_forward.5} parent=1 // pred_fallthru
      _
    // Predicated region
    $region34: #{naive_seq2seq_forward.5} parent=1 // pred_check
      _
    $region35: #{naive_seq2seq_forward.5} parent=1 // pred_check_branch
      %192 = sbr.rel (0) target = $region37
    $region36: #{naive_seq2seq_forward.5} parent=1 // pred_region
      %s194 = ssub.s32 512, 512
      %195 = vsyncadd [#allocation5], %s194
      %s196 = sshll.u32 [#allocation9], 4
      %s197 = int_to_ptr.vmem [resolvable:$true] %s196
      %202 = dma.vmem_to_hbm [thread:$0]  %s197, 512, %s3, [#allocation5], 256, 256, 16
    $region37: #{naive_seq2seq_forward.5} parent=1 // pred_fallthru
      _
    // Predicated region
    $region38: #{naive_seq2seq_forward.5} parent=1 // pred_check
      _
    $region39: #{naive_seq2seq_forward.5} parent=1 // pred_check_branch
      %204 = sbr.rel (0) target = $region41
    $region40: #{naive_seq2seq_forward.5} parent=1 // pred_region
      %205 = dma.done [#allocation5], 512
    $region41: #{naive_seq2seq_forward.5} parent=1 // pred_fallthru
      _
    %206 = vsyncpa [#allocation4], 1
    %207 = vsyncpa [#allocation7], 1
    %208 = vsyncpa [#allocation5], 1

// kernel: naive_seq2seq_forward.7
$region0: #{naive_seq2seq_forward.7}
  #allocation0 [shape = 'u32[]', space=smem, size = 0x4, offset = 0x4, fixed_abs, tag = 'smem constant byte address 0x4 - core index']
  #allocation1 [shape = 'u32[144,128]{1,0:T(1,128)}', space=vmem, size = 0x12000, scoped, tag = 'internal scratch']
  #allocation2 [shape = 'f32[16,128]{1,0:T(8,128)}', space=vmem, size = 0x2000, scoped, tag = 'scratch operand']
  %s0 = inlined_call_operand.hbm [shape: f32[16,16], index: 0, kind: input, shape index: {}]
  %s1 = inlined_call_operand.hbm [shape: f32[16,128], index: 1, kind: input, shape index: {}]
  %s2 = inlined_call_operand.hbm [shape: f32[1,128], index: 2, kind: input, shape index: {}]
  %s3 = inlined_call_operand.hbm [shape: f32[16,128], index: 3, kind: output, shape index: {}]
  %s4 = sld [smem:[#allocation0]]
  $region42: #{naive_seq2seq_forward.7} parent=0
    _
  %s6 = ssub.s32 1, %s4
  %s7 = scalar_select 0, %s6, %s4
  $region1: #{naive_seq2seq_forward.7} parent=0
    #allocation3 [shape = 'u8[8192]{0}', space=vmem, size = 0x2000, scoped, tag = 'input window, operand 0, single buffered']
    #allocation4 [shape = 's32[1]{0}', space=sflag, size = 0x4, scoped, tag = 'scoped memory for naive_seq2seq_forward.7']
    #allocation5 [shape = 's32[1]{0}', space=sflag, size = 0x4, scoped, tag = 'scoped memory for naive_seq2seq_forward.7']
    #allocation6 [shape = 'u8[8192]{0}', space=vmem, size = 0x2000, scoped, tag = 'input window, operand 1, single buffered']
    #allocation7 [shape = 's32[1]{0}', space=sflag, size = 0x4, scoped, tag = 'scoped memory for naive_seq2seq_forward.7']
    #allocation8 [shape = 'u8[512]{0}', space=vmem, size = 0x400, scoped, tag = 'input window, operand 2, single buffered']
    #allocation9 [shape = 'u8[8192]{0}', space=vmem, size = 0x2000, scoped, tag = 'output window, operand 0, single buffered']
    %8 = vsyncpa [#allocation4], 0
    %9 = vsyncpa [#allocation7], 0
    %10 = vsyncpa [#allocation5], 0
    // Predicated region
    $region2: #{naive_seq2seq_forward.7} parent=1 // pred_check
      _
    $region3: #{naive_seq2seq_forward.7} parent=1 // pred_check_branch
      %12 = sbr.rel (0) target = $region5
    $region4: #{naive_seq2seq_forward.7} parent=1 // pred_region
      %s14 = ssub.s32 256, 256
      %15 = vsyncadd [#allocation4], %s14
      %s16 = sshll.u32 [#allocation3], 4
      %s17 = int_to_ptr.vmem [resolvable:$true] %s16
      %22 = dma.hbm_to_vmem [thread:$0]  %s0, 256, %s17, [#allocation4], 128, 128, 8
    $region5: #{naive_seq2seq_forward.7} parent=1 // pred_fallthru
      _
    // Predicated region
    $region6: #{naive_seq2seq_forward.7} parent=1 // pred_check
      _
    $region7: #{naive_seq2seq_forward.7} parent=1 // pred_check_branch
      %24 = sbr.rel (0) target = $region9
    $region8: #{naive_seq2seq_forward.7} parent=1 // pred_region
      %s26 = ssub.s32 256, 256
      %27 = vsyncadd [#allocation7], %s26
      %s28 = sshll.u32 [#allocation6], 4
      %s29 = int_to_ptr.vmem [resolvable:$true] %s28
      %34 = dma.hbm_to_vmem [thread:$0]  %s1, 256, %s29, [#allocation7], 128, 128, 8
    $region9: #{naive_seq2seq_forward.7} parent=1 // pred_fallthru
      _
    // Predicated region
    $region10: #{naive_seq2seq_forward.7} parent=1 // pred_check
      _
    $region11: #{naive_seq2seq_forward.7} parent=1 // pred_check_branch
      %36 = sbr.rel (0) target = $region13
    $region12: #{naive_seq2seq_forward.7} parent=1 // pred_region
      %s38 = ssub.s32 16, 16
      %39 = vsyncadd [#allocation7], %s38
      %s41 = sshll.u32 [#allocation8], 4
      %s42 = int_to_ptr.vmem [resolvable:$true] %s41
      %44 = dma.hbm_to_vmem [thread:$0]  %s2, 16, %s42, [#allocation7]
    $region13: #{naive_seq2seq_forward.7} parent=1 // pred_fallthru
      _
    // Predicated region
    $region14: #{naive_seq2seq_forward.7} parent=1 // pred_check
      _
    $region15: #{naive_seq2seq_forward.7} parent=1 // pred_check_branch
      %46 = sbr.rel (0) target = $region17
    $region16: #{naive_seq2seq_forward.7} parent=1 // pred_region
      %47 = dma.done [#allocation4], 256
    $region17: #{naive_seq2seq_forward.7} parent=1 // pred_fallthru
      _
    // Predicated region
    $region18: #{naive_seq2seq_forward.7} parent=1 // pred_check
      _
    $region19: #{naive_seq2seq_forward.7} parent=1 // pred_check_branch
      %49 = sbr.rel (0) target = $region21
    $region20: #{naive_seq2seq_forward.7} parent=1 // pred_region
      %50 = dma.done [#allocation7], 256
    $region21: #{naive_seq2seq_forward.7} parent=1 // pred_fallthru
      _
    // Predicated region
    $region22: #{naive_seq2seq_forward.7} parent=1 // pred_check
      _
    $region23: #{naive_seq2seq_forward.7} parent=1 // pred_check_branch
      %52 = sbr.rel (0) target = $region25
    $region24: #{naive_seq2seq_forward.7} parent=1 // pred_region
      %53 = dma.done [#allocation7], 16
    $region25: #{naive_seq2seq_forward.7} parent=1 // pred_fallthru
      _
    %p54 = scmp.eq.s32.totalorder 0, 0
    // Predicated region
    $region26: #{naive_seq2seq_forward.7} parent=1 // pred_check
      %p55 = pneg %p54
    $region27: #{naive_seq2seq_forward.7} parent=1 // pred_check_branch
      %57 = sbr.rel (%p55) target = $region29
    $region28: #{naive_seq2seq_forward.7} parent=1 // pred_region
      %58 = vst [vmem:[#allocation2] sm:$0xff] 0.0
      %59 = vst [vmem:[#allocation2 + $0x8] sm:$0xff] 0.0
    $region29: #{naive_seq2seq_forward.7} parent=1 // pred_fallthru
      _
    %v60 = vld [vmem:[#allocation2] sm:$0xff]
    %v61 = vld [vmem:[#allocation2 + $0x8] sm:$0xff]
    %v62 = vld [vmem:[#allocation3] sm:$0xff]
    %v63 = vld [vmem:[#allocation3 + $0x8] sm:$0xff]
    %v64 = vld [vmem:[#allocation6] sm:$0xff]
    %v65 = vld [vmem:[#allocation6 + $0x8] sm:$0xff]
    %vm66 = vcmask 130048
    %v68 = vsel %vm66, %v62, 0
    %v71 = vsel %vm66, %v63, 0
    %73 = vmatprep.subr.mxu0 0.0
    %74 = vmatpush1.msra.mxu0 %v64
    %75 = vmatprep.subr.mxu0 0.0
    %76 = vmatpush1.msra.mxu0 %v65
    %77 = vmatprep.subr.mxu0 0.0
    %78 = vmatpush1.msra.mxu0 0.0
    %79 = vmatprep.subr.mxu0 0.0
    %80 = vmatpush1.msra.mxu0 0.0
    %81 = vmatprep.subr.mxu0 0.0
    %82 = vmatpush1.msra.mxu0 0.0
    %83 = vmatprep.subr.mxu0 0.0
    %84 = vmatpush1.msra.mxu0 0.0
    %85 = vmatprep.subr.mxu0 0.0
    %86 = vmatpush1.msra.mxu0 0.0
    %87 = vmatprep.subr.mxu0 0.0
    %88 = vmatpush1.msra.mxu0 0.0
    %89 = vmatprep.subr.mxu0 0.0
    %90 = vmatpush1.msra.mxu0 0.0
    %91 = vmatprep.subr.mxu0 0.0
    %92 = vmatpush1.msra.mxu0 0.0
    %93 = vmatprep.subr.mxu0 0.0
    %94 = vmatpush1.msra.mxu0 0.0
    %95 = vmatprep.subr.mxu0 0.0
    %96 = vmatpush1.msra.mxu0 0.0
    %97 = vmatprep.subr.mxu0 0.0
    %98 = vmatpush1.msra.mxu0 0.0
    %99 = vmatprep.subr.mxu0 0.0
    %100 = vmatpush1.msra.mxu0 0.0
    %101 = vmatprep.subr.mxu0 0.0
    %102 = vmatpush1.msra.mxu0 0.0
    %103 = vmatprep.subr.mxu0 0.0
    %104 = vmatpush1.msra.mxu0 0.0
    %105 = vmatprep.subr.mxu0 0.0
    %106 = vmatpush1.msra.mxu0 0.0
    %107 = vmatprep.subr.mxu0 0.0
    %108 = vmatpush1.msra.mxu0 0.0
    %109 = vmatprep.subr.mxu0 0.0
    %110 = vmatpush1.msra.mxu0 0.0
    %111 = vmatprep.subr.mxu0 0.0
    %112 = vmatpush1.msra.mxu0 0.0
    %113 = vmatprep.subr.mxu0 0.0
    %114 = vmatpush1.msra.mxu0 0.0
    %115 = vmatprep.subr.mxu0 0.0
    %116 = vmatpush1.msra.mxu0 0.0
    %117 = vmatprep.subr.mxu0 0.0
    %118 = vmatpush1.msra.mxu0 0.0
    %119 = vmatprep.subr.mxu0 0.0
    %120 = vmatpush1.msra.mxu0 0.0
    %121 = vmatprep.subr.mxu0 0.0
    %122 = vmatpush1.msra.mxu0 0.0
    %123 = vmatprep.subr.mxu0 0.0
    %124 = vmatpush1.msra.mxu0 0.0
    %125 = vmatprep.subr.mxu0 0.0
    %126 = vmatpush1.msra.mxu0 0.0
    %127 = vmatprep.subr.mxu0 0.0
    %128 = vmatpush1.msra.mxu0 0.0
    %129 = vmatprep.subr.mxu0 0.0
    %130 = vmatpush1.msra.mxu0 0.0
    %131 = vmatprep.subr.mxu0 0.0
    %132 = vmatpush1.msra.mxu0 0.0
    %133 = vmatprep.subr.mxu0 0.0
    %134 = vmatpush1.msra.mxu0 0.0
    %135 = vmatprep.subr.mxu0 0.0
    %136 = vmatpush1.msra.mxu0 0.0
    %137 = vmatprep.mubr.f32.mxu0 0.0
    %138 = vmatmul.mubr.f32.gmra.mrb[0].mxu0 %v68
    %v139 = vpop.f32.mrb[0].mxu0
    %v140 = vadd.f32 0.0, %v139
    %v141 = vpop.f32.mrb[0].mxu0
    %142 = vmatprep.mubr.f32.mxu0 0.0
    %143 = vmatmul.mubr.f32.gmra.mrb[0].mxu0 %v71
    %v144 = vpop.f32.mrb[0].mxu0
    %v145 = vadd.f32 0.0, %v144
    %v146 = vpop.f32.mrb[0].mxu0
    %147 = vdwg.mxu0
    %v148 = vadd.f32 %v60, %v140
    %v149 = vadd.f32 %v61, %v145
    %150 = vst [vmem:[#allocation2] sm:$0xff] %v148
    %151 = vst [vmem:[#allocation2 + $0x8] sm:$0xff] %v149
    // Predicated region
    $region30: #{naive_seq2seq_forward.7} parent=1 // pred_check
      %p152 = pneg %p54
    $region31: #{naive_seq2seq_forward.7} parent=1 // pred_check_branch
      %154 = sbr.rel (%p152) target = $region33
    $region32: #{naive_seq2seq_forward.7} parent=1 // pred_region
      %v155 = vld [vmem:[#allocation2] sm:$0xff]
      %v156 = vld [vmem:[#allocation2 + $0x8] sm:$0xff]
      %v157 = vld [vmem:[#allocation8] sm:$0x1]
      %v159 = vlaneseq
      %v160 = vshrl.u32 %v159, 7
      %v161 = vsub.s32 0, %v160
      %v162 = vrot.slane %v157, %v161
      %v164 = vadd.f32 %v155, %v162
      %v165 = vadd.f32 %v156, %v162
      %166 = vst [vmem:[#allocation9] sm:$0xff] %v164
      %167 = vst [vmem:[#allocation9 + $0x8] sm:$0xff] %v165
    $region33: #{naive_seq2seq_forward.7} parent=1 // pred_fallthru
      _
    // Predicated region
    $region34: #{naive_seq2seq_forward.7} parent=1 // pred_check
      _
    $region35: #{naive_seq2seq_forward.7} parent=1 // pred_check_branch
      %169 = sbr.rel (0) target = $region37
    $region36: #{naive_seq2seq_forward.7} parent=1 // pred_region
      %s171 = ssub.s32 256, 256
      %172 = vsyncadd [#allocation5], %s171
      %s173 = sshll.u32 [#allocation9], 4
      %s174 = int_to_ptr.vmem [resolvable:$true] %s173
      %179 = dma.vmem_to_hbm [thread:$0]  %s174, 256, %s3, [#allocation5], 128, 128, 8
    $region37: #{naive_seq2seq_forward.7} parent=1 // pred_fallthru
      _
    // Predicated region
    $region38: #{naive_seq2seq_forward.7} parent=1 // pred_check
      _
    $region39: #{naive_seq2seq_forward.7} parent=1 // pred_check_branch
      %181 = sbr.rel (0) target = $region41
    $region40: #{naive_seq2seq_forward.7} parent=1 // pred_region
      %182 = dma.done [#allocation5], 256
    $region41: #{naive_seq2seq_forward.7} parent=1 // pred_fallthru
      _
    %183 = vsyncpa [#allocation4], 1
    %184 = vsyncpa [#allocation7], 1
    %185 = vsyncpa [#allocation5], 1

// kernel: naive_seq2seq_forward.6
$region0: #{naive_seq2seq_forward.6}
  #allocation0 [shape = 'u32[]', space=smem, size = 0x4, offset = 0x4, fixed_abs, tag = 'smem constant byte address 0x4 - core index']
  #allocation1 [shape = 'u32[144,128]{1,0:T(1,128)}', space=vmem, size = 0x12000, scoped, tag = 'internal scratch']
  #allocation2 [shape = 'f32[2,32]{1,0:T(2,128)}', space=vmem, size = 0x400, scoped, tag = 'scratch operand']
  #allocation3 [shape = 'f32[2,32]{1,0:T(2,128)}', space=vmem, size = 0x400, scoped, tag = 'scratch operand']
  %s0 = inlined_call_operand.hbm [shape: f32[8,2,256], index: 0, kind: input, shape index: {}]
  %s1 = inlined_call_operand.hbm [shape: s32[2,1], index: 1, kind: input, shape index: {}]
  %s2 = inlined_call_operand.hbm [shape: f32[2,32,128], index: 2, kind: input, shape index: {}]
  %s3 = inlined_call_operand.hbm [shape: f32[2,2,32], index: 3, kind: output, shape index: {0}]
  %s4 = inlined_call_operand.hbm [shape: f32[2,2,32], index: 4, kind: output, shape index: {1}]
  %5 = xla_tuple %s3, %s4
  %s6 = sld [smem:[#allocation0]]
  $region73: #{naive_seq2seq_forward.6} parent=0
    _
  %s8 = ssub.s32 1, %s6
  %s9 = scalar_select 0, %s8, %s6
  $region1: #{naive_seq2seq_forward.6} parent=0
    #allocation4 [shape = 'u8[8192]{0}', space=vmem, size = 0x2000, scoped, tag = 'input window, operand 0']
    #allocation5 [shape = 's32[2]{0}', space=sflag, size = 0x8, scoped, tag = 'scoped memory for naive_seq2seq_forward.6']
    #allocation6 [shape = 's32[2]{0}', space=sflag, size = 0x8, scoped, tag = 'scoped memory for naive_seq2seq_forward.6']
    #allocation7 [shape = 'u8[1024]{0}', space=vmem, size = 0x400, scoped, tag = 'input window, operand 1, single buffered']
    #allocation8 [shape = 's32[1]{0}', space=sflag, size = 0x4, scoped, tag = 'scoped memory for naive_seq2seq_forward.6']
    #allocation9 [shape = 'u8[32768]{0}', space=vmem, size = 0x8000, scoped, tag = 'input window, operand 2']
    #allocation10 [shape = 'u8[2048]{0}', space=vmem, size = 0x800, scoped, tag = 'output window, operand 0']
    #allocation11 [shape = 'u8[2048]{0}', space=vmem, size = 0x800, scoped, tag = 'output window, operand 1']
    #allocation12 [shape = 's32[2]{0}', space=sflag, size = 0x8, scoped, tag = 'scoped memory for naive_seq2seq_forward.6']
    %10 = vsyncpa [#allocation5], 0
    %s11 = scalar_lea.sflag [#allocation5], 1
    %12 = vsyncpa %s11, 0
    %13 = vsyncpa [#allocation8], 0
    %14 = vsyncpa [#allocation6], 0
    %s15 = scalar_lea.sflag [#allocation6], 1
    %16 = vsyncpa %s15, 0
    %17 = vsyncpa [#allocation12], 0
    %s18 = scalar_lea.sflag [#allocation12], 1
    %19 = vsyncpa %s18, 0
    loop: start=0, step=1, limit=6
    $region2: #{naive_seq2seq_forward.6} parent=1 // loop_pre_header
      _
    $region3: #{naive_seq2seq_forward.6} parent=1 // loop_header
      %s21 = sphi 0, %s25
      %p22 = scmp.ge.s32.totalorder %s21, 6
      %s28 = sphi 0, %s40
      %s29 = sphi 0, %s36
      %s30 = sphi 0, %s28
      %s31 = sphi 0, %s29
      %s32 = sphi 0, %s30
      %s33 = sphi 0, %s31
      %s55 = sphi 0, %s57
      %s58 = sphi 0, %s55
      %s59 = sphi 0, %s58
      %s75 = sphi 0, %s59
      %s79 = sphi 0, %s79
      %s81 = sphi 0, %s79
      %s82 = sphi 0, %s81
      %s96 = sphi 0, %s82
      %s102 = sphi 0, %s104
      %s105 = sphi 0, %s102
      %s106 = sphi 0, %s105
      %s122 = sphi 0, %s106
      %s128 = sphi 0, %s130
      %s131 = sphi 0, %s128
      %s132 = sphi 0, %s131
      %s148 = sphi 0, %s132
      %s154 = sphi 0, %s156
      %s157 = sphi 0, %s154
      %s158 = sphi 0, %s157
      %s174 = sphi 0, %s158
    $region4: #{naive_seq2seq_forward.6} parent=1 // loop_header_branch
      %24 = sbr.rel (%p22) target = $region8
    $region5: #{naive_seq2seq_forward.6} parent=1 // loop_body
      %s26 = ssub.s32 %s21, 1
      %s27 = ssub.s32 %s21, 2
      %s34 = sadd.s32 1, %s29
      %p35 = scmp.ge.s32.totalorder %s34, 2
      %s36 = scalar_select %p35, 0, %s34
      %s37 = sadd.s32 1, %s28
      %s38 = scalar_select %p35, %s37, %s28
      %p39 = scmp.ge.s32.totalorder %s38, 2
      %s40 = scalar_select %p39, 0, %s38
      %s41 = ssub.s32 1, %s28
      %s42 = smul.u32 %s29, %s41
      %s43 = ssub.s32 1, %s29
      %s44 = smul.u32 %s43, %s28
      %s45 = sadd.s32 %s42, %s44
      %s46 = ssub.s32 1, %s40
      %s47 = smul.u32 %s36, %s46
      %s48 = ssub.s32 1, %s36
      %s49 = smul.u32 %s48, %s40
      %s50 = sadd.s32 %s47, %s49
      %s51 = ssub.s32 %s45, %s50
      %s52 = ssub.s32 %s28, %s40
      %s53 = sor.u32 %s51, %s52
      %p54 = scmp.eq.s32.totalorder %s53, 0
      %s56 = sadd.s32 %s55, 1
      %s57 = scalar_select %p54, %s55, %s56
      %p60 = pneg %p54
      %p61 = scmp.eq.s32.totalorder %s21, 3
      %p62 = por %p60, %p61
      %p63 = scmp.ne.s32.totalorder %s55, %s58
      %p64 = scmp.eq.s32.totalorder %s21, 0
      %p65 = por %p63, %p64
      %p66 = scmp.ne.s32.totalorder %s55, %s58
      %p67 = scmp.eq.s32.totalorder %s26, 3
      %p68 = por %p66, %p67
      %p69 = scmp.ne.s32.totalorder %s58, %s59
      %p70 = scmp.eq.s32.totalorder %s26, 0
      %p71 = por %p69, %p70
      %p72 = scmp.ne.s32.totalorder %s58, %s59
      %p73 = scmp.eq.s32.totalorder %s27, 3
      %p74 = por %p72, %p73
      %p76 = scmp.ne.s32.totalorder %s59, %s75
      %p77 = scmp.eq.s32.totalorder %s27, 0
      %p78 = por %p76, %p77
      %s80 = sadd.s32 %s79, 1
      %p83 = scmp.eq.s32.totalorder %s21, 3
      %p84 = scmp.ne.s32.totalorder %s79, %s81
      %p85 = scmp.eq.s32.totalorder %s21, 0
      %p86 = por %p84, %p85
      %p87 = scmp.ne.s32.totalorder %s79, %s81
      %p88 = scmp.eq.s32.totalorder %s26, 3
      %p89 = por %p87, %p88
      %p90 = scmp.ne.s32.totalorder %s81, %s82
      %p91 = scmp.eq.s32.totalorder %s26, 0
      %p92 = por %p90, %p91
      %p93 = scmp.ne.s32.totalorder %s81, %s82
      %p94 = scmp.eq.s32.totalorder %s27, 3
      %p95 = por %p93, %p94
      %p97 = scmp.ne.s32.totalorder %s82, %s96
      %p98 = scmp.eq.s32.totalorder %s27, 0
      %p99 = por %p97, %p98
      %s100 = ssub.s32 %s28, %s40
      %p101 = scmp.eq.s32.totalorder %s100, 0
      %s103 = sadd.s32 %s102, 1
      %s104 = scalar_select %p101, %s102, %s103
      %p107 = pneg %p101
      %p108 = scmp.eq.s32.totalorder %s21, 3
      %p109 = por %p107, %p108
      %p110 = scmp.ne.s32.totalorder %s102, %s105
      %p111 = scmp.eq.s32.totalorder %s21, 0
      %p112 = por %p110, %p111
      %p113 = scmp.ne.s32.totalorder %s102, %s105
      %p114 = scmp.eq.s32.totalorder %s26, 3
      %p115 = por %p113, %p114
      %p116 = scmp.ne.s32.totalorder %s105, %s106
      %p117 = scmp.eq.s32.totalorder %s26, 0
      %p118 = por %p116, %p117
      %p119 = scmp.ne.s32.totalorder %s105, %s106
      %p120 = scmp.eq.s32.totalorder %s27, 3
      %p121 = por %p119, %p120
      %p123 = scmp.ne.s32.totalorder %s106, %s122
      %p124 = scmp.eq.s32.totalorder %s27, 0
      %p125 = por %p123, %p124
      %s126 = ssub.s32 %s28, %s40
      %p127 = scmp.eq.s32.totalorder %s126, 0
      %s129 = sadd.s32 %s128, 1
      %s130 = scalar_select %p127, %s128, %s129
      %p133 = pneg %p127
      %p134 = scmp.eq.s32.totalorder %s21, 3
      %p135 = por %p133, %p134
      %p136 = scmp.ne.s32.totalorder %s128, %s131
      %p137 = scmp.eq.s32.totalorder %s21, 0
      %p138 = por %p136, %p137
      %p139 = scmp.ne.s32.totalorder %s128, %s131
      %p140 = scmp.eq.s32.totalorder %s26, 3
      %p141 = por %p139, %p140
      %p142 = scmp.ne.s32.totalorder %s131, %s132
      %p143 = scmp.eq.s32.totalorder %s26, 0
      %p144 = por %p142, %p143
      %p145 = scmp.ne.s32.totalorder %s131, %s132
      %p146 = scmp.eq.s32.totalorder %s27, 3
      %p147 = por %p145, %p146
      %p149 = scmp.ne.s32.totalorder %s132, %s148
      %p150 = scmp.eq.s32.totalorder %s27, 0
      %p151 = por %p149, %p150
      %s152 = ssub.s32 %s28, %s40
      %p153 = scmp.eq.s32.totalorder %s152, 0
      %s155 = sadd.s32 %s154, 1
      %s156 = scalar_select %p153, %s154, %s155
      %p159 = pneg %p153
      %p160 = scmp.eq.s32.totalorder %s21, 3
      %p161 = por %p159, %p160
      %p162 = scmp.ne.s32.totalorder %s154, %s157
      %p163 = scmp.eq.s32.totalorder %s21, 0
      %p164 = por %p162, %p163
      %p165 = scmp.ne.s32.totalorder %s154, %s157
      %p166 = scmp.eq.s32.totalorder %s26, 3
      %p167 = por %p165, %p166
      %p168 = scmp.ne.s32.totalorder %s157, %s158
      %p169 = scmp.eq.s32.totalorder %s26, 0
      %p170 = por %p168, %p169
      %p171 = scmp.ne.s32.totalorder %s157, %s158
      %p172 = scmp.eq.s32.totalorder %s27, 3
      %p173 = por %p171, %p172
      %p175 = scmp.ne.s32.totalorder %s158, %s174
      %p176 = scmp.eq.s32.totalorder %s27, 0
      %p177 = por %p175, %p176
      %p178 = scmp.le.s32.totalorder 1, %s21
      %p179 = scmp.lt.s32.totalorder %s21, 5
      %p180 = pnand %p178, %p179
      %p181 = pneg %p180
      // Predicated region
      $region9: #{naive_seq2seq_forward.6} parent=5 // pred_check
        _
      $region10: #{naive_seq2seq_forward.6} parent=5 // pred_check_branch
        %183 = sbr.rel (%p180) target = $region12
      $region11: #{naive_seq2seq_forward.6} parent=5 // pred_region
        %s184 = ssub.s32 %s21, 1
        // Predicated region
        $region13: #{naive_seq2seq_forward.6} parent=11 // pred_check
          %p185 = pneg %p92
        $region14: #{naive_seq2seq_forward.6} parent=11 // pred_check_branch
          %187 = sbr.rel (%p185) target = $region16
        $region15: #{naive_seq2seq_forward.6} parent=11 // pred_region
          %s189 = ssub.s32 32, 32
          %190 = vsyncadd [#allocation8], %s189
          %s192 = sshll.u32 [#allocation7], 4
          %s193 = int_to_ptr.vmem [resolvable:$true] %s192
          %195 = dma.hbm_to_vmem [thread:$0]  %s1, 32, %s193, [#allocation8]
        $region16: #{naive_seq2seq_forward.6} parent=11 // pred_fallthru
          _
      $region12: #{naive_seq2seq_forward.6} parent=5 // pred_fallthru
        _
      %p196 = scmp.lt.s32.totalorder %s21, 4
      // Predicated region
      $region17: #{naive_seq2seq_forward.6} parent=5 // pred_check
        %p197 = pneg %p196
      $region18: #{naive_seq2seq_forward.6} parent=5 // pred_check_branch
        %199 = sbr.rel (%p197) target = $region20
      $region19: #{naive_seq2seq_forward.6} parent=5 // pred_region
        // Predicated region
        $region21: #{naive_seq2seq_forward.6} parent=19 // pred_check
          %p200 = pneg %p65
        $region22: #{naive_seq2seq_forward.6} parent=19 // pred_check_branch
          %202 = sbr.rel (%p200) target = $region24
        $region23: #{naive_seq2seq_forward.6} parent=19 // pred_region
          %s203 = sand.u32 %s21, 1
          %s204 = scalar_lea.sflag [#allocation5], %s203
          %s205 = sand.u32 %s55, 1
          %s206 = smul.addr %s205, 8
          %s207 = scalar_lea.vmem [#allocation4], %s206
          %s208 = ssub.s32 1, %s28
          %s209 = smul.u32 %s29, %s208
          %s210 = ssub.s32 1, %s29
          %s211 = smul.u32 %s210, %s28
          %s212 = sadd.s32 %s209, %s211
          %s213 = smul.u32 4, %s212
          %s215 = ssub.s32 128, 128
          %216 = vsyncadd %s204, %s215
          %s217 = smul.addr %s213, 2
          %s218 = sadd.s32 %s28, %s217
          %s219 = smul.addr %s218, 32
          %s220 = scalar_lea.hbm %s0, %s219
          %s221 = sshll.u32 %s207, 4
          %s222 = int_to_ptr.vmem [resolvable:$true] %s221
          %227 = dma.hbm_to_vmem [thread:$0]  %s220, 128, %s222, %s204, 64, 32, 2
        $region24: #{naive_seq2seq_forward.6} parent=19 // pred_fallthru
          _
        // Predicated region
        $region25: #{naive_seq2seq_forward.6} parent=19 // pred_check
          %p228 = pneg %p112
        $region26: #{naive_seq2seq_forward.6} parent=19 // pred_check_branch
          %230 = sbr.rel (%p228) target = $region28
        $region27: #{naive_seq2seq_forward.6} parent=19 // pred_region
          %s231 = sand.u32 %s21, 1
          %s232 = scalar_lea.sflag [#allocation5], %s231
          %s233 = sand.u32 %s102, 1
          %s234 = smul.addr %s233, 32
          %s235 = scalar_lea.vmem [#allocation9], %s234
          %s237 = ssub.s32 512, 512
          %238 = vsyncadd %s232, %s237
          %s239 = smul.addr %s28, 4
          %s240 = smul.addr %s239, 128
          %s241 = scalar_lea.hbm %s2, %s240
          %s242 = sshll.u32 %s235, 4
          %s243 = int_to_ptr.vmem [resolvable:$true] %s242
          %248 = dma.hbm_to_vmem [thread:$0]  %s241, 512, %s243, %s232, 128, 128, 8
        $region28: #{naive_seq2seq_forward.6} parent=19 // pred_fallthru
          _
      $region20: #{naive_seq2seq_forward.6} parent=5 // pred_fallthru
        _
      %p249 = scmp.le.s32.totalorder 1, %s21
      %p250 = scmp.lt.s32.totalorder %s21, 5
      %p251 = pnand %p249, %p250
      %p252 = pneg %p251
      // Predicated region
      $region29: #{naive_seq2seq_forward.6} parent=5 // pred_check
        _
      $region30: #{naive_seq2seq_forward.6} parent=5 // pred_check_branch
        %254 = sbr.rel (%p251) target = $region32
      $region31: #{naive_seq2seq_forward.6} parent=5 // pred_region
        %s255 = ssub.s32 %s21, 1
        %s256 = sand.u32 %s26, 1
        %s257 = scalar_lea.sflag [#allocation5], %s256
        %s258 = sand.u32 %s58, 1
        %s259 = smul.addr %s258, 8
        %s260 = scalar_lea.vmem [#allocation4], %s259
        // Predicated region
        $region33: #{naive_seq2seq_forward.6} parent=31 // pred_check
          %p261 = pneg %p71
        $region34: #{naive_seq2seq_forward.6} parent=31 // pred_check_branch
          %263 = sbr.rel (%p261) target = $region36
        $region35: #{naive_seq2seq_forward.6} parent=31 // pred_region
          %264 = dma.done %s257, 128
        $region36: #{naive_seq2seq_forward.6} parent=31 // pred_fallthru
          _
        // Predicated region
        $region37: #{naive_seq2seq_forward.6} parent=31 // pred_check
          %p265 = pneg %p92
        $region38: #{naive_seq2seq_forward.6} parent=31 // pred_check_branch
          %267 = sbr.rel (%p265) target = $region40
        $region39: #{naive_seq2seq_forward.6} parent=31 // pred_region
          %268 = dma.done [#allocation8], 32
        $region40: #{naive_seq2seq_forward.6} parent=31 // pred_fallthru
          _
        %s269 = sand.u32 %s26, 1
        %s270 = scalar_lea.sflag [#allocation5], %s269
        %s271 = sand.u32 %s105, 1
        %s272 = smul.addr %s271, 32
        %s273 = scalar_lea.vmem [#allocation9], %s272
        // Predicated region
        $region41: #{naive_seq2seq_forward.6} parent=31 // pred_check
          %p274 = pneg %p118
        $region42: #{naive_seq2seq_forward.6} parent=31 // pred_check_branch
          %276 = sbr.rel (%p274) target = $region44
        $region43: #{naive_seq2seq_forward.6} parent=31 // pred_region
          %277 = dma.done %s270, 512
        $region44: #{naive_seq2seq_forward.6} parent=31 // pred_fallthru
          _
        %s278 = sand.u32 %s26, 1
        %s279 = scalar_lea.sflag [#allocation5], %s278
        %s280 = sand.u32 %s58, 1
        %s281 = smul.addr %s280, 8
        %s282 = scalar_lea.vmem [#allocation4], %s281
        %p283 = pneg %p71
        %p284 = pneg %p68
        %p285 = pneg %p92
        %p286 = pneg %p89
        %s287 = sand.u32 %s26, 1
        %s288 = scalar_lea.sflag [#allocation5], %s287
        %s289 = sand.u32 %s105, 1
        %s290 = smul.addr %s289, 32
        %s291 = scalar_lea.vmem [#allocation9], %s290
        %p292 = pneg %p118
        %p293 = pneg %p115
        %p294 = pneg %p144
        %p295 = pneg %p141
        %s296 = sand.u32 %s131, 1
        %s297 = scalar_lea.sflag [#allocation6], %s296
        %s298 = sand.u32 %s131, 1
        %s299 = smul.addr %s298, 2
        %s300 = scalar_lea.vmem [#allocation10], %s299
        %p301 = pneg %p170
        %p302 = pneg %p167
        %s303 = sand.u32 %s157, 1
        %s304 = scalar_lea.sflag [#allocation12], %s303
        %s305 = sand.u32 %s157, 1
        %s306 = smul.addr %s305, 2
        %s307 = scalar_lea.vmem [#allocation11], %s306
        %s308 = ssub.s32 1, %s30
        %s309 = smul.u32 %s31, %s308
        %s310 = ssub.s32 1, %s31
        %s311 = smul.u32 %s310, %s30
        %s312 = sadd.s32 %s309, %s311
        %s313 = smul.u32 4, %s312
        %p314 = scmp.eq.s32.totalorder %s31, 0
        // Predicated region
        $region45: #{naive_seq2seq_forward.6} parent=31 // pred_check
          %p315 = pneg %p314
        $region46: #{naive_seq2seq_forward.6} parent=31 // pred_check_branch
          %317 = sbr.rel (%p315) target = $region48
        $region47: #{naive_seq2seq_forward.6} parent=31 // pred_region
          %vm318 = vcmask 254976
          %319 = vst.msk [vmem:[#allocation2] sm:$0x3] %vm318, 0.0
          %320 = vst.msk [vmem:[#allocation3] sm:$0x3] %vm318, 0.0
        $region48: #{naive_seq2seq_forward.6} parent=31 // pred_fallthru
          _
        %v321 = vld [vmem:[#allocation7] sm:$0x3]
        %v322 = vld [vmem:[%s273] sm:$0xff]
        %v323 = vld [vmem:[%s273 + $0x8] sm:$0xff]
        %v324 = vld [vmem:[%s273 + $0x10] sm:$0xff]
        %v325 = vld [vmem:[%s273 + $0x18] sm:$0xff]
        %p326 = scmp.eq.s32.totalorder %s30, 1
        %s327 = ssub.s32 1, %s31
        %s328 = scalar_select %p326, %s327, %s31
        %s329 = smul.u32 %s328, 4
        %v330 = vld [vmem:[#allocation2] sm:$0x3]
        %v331 = vld [vmem:[#allocation3] sm:$0x3]
        %s332 = scalar_select %p326, 3, 0
        %s333 = smul.u32 %s332, 2
        %s334 = scalar_lea.vmem %s260, %s333 [#allocation4]
        %v335 = vld [vmem:[%s334] sm:$0x3]
        %vm336 = vcmask 261120
        %v338 = vsel %vm336, %v330, 0
        %340 = vmatprep.subr.mxu0 0.0
        %341 = vmatpush1.msra.mxu0 %v322
        %342 = vmatprep.subr.mxu0 0.0
        %343 = vmatpush1.msra.mxu0 %v323
        %344 = vmatprep.subr.mxu0 0.0
        %345 = vmatpush1.msra.mxu0 %v324
        %346 = vmatprep.subr.mxu0 0.0
        %347 = vmatpush1.msra.mxu0 %v325
        %348 = vmatprep.subr.mxu0 0.0
        %349 = vmatpush1.msra.mxu0 0.0
        %350 = vmatprep.subr.mxu0 0.0
        %351 = vmatpush1.msra.mxu0 0.0
        %352 = vmatprep.subr.mxu0 0.0
        %353 = vmatpush1.msra.mxu0 0.0
        %354 = vmatprep.subr.mxu0 0.0
        %355 = vmatpush1.msra.mxu0 0.0
        %356 = vmatprep.subr.mxu0 0.0
        %357 = vmatpush1.msra.mxu0 0.0
        %358 = vmatprep.subr.mxu0 0.0
        %359 = vmatpush1.msra.mxu0 0.0
        %360 = vmatprep.subr.mxu0 0.0
        %361 = vmatpush1.msra.mxu0 0.0
        %362 = vmatprep.subr.mxu0 0.0
        %363 = vmatpush1.msra.mxu0 0.0
        %364 = vmatprep.subr.mxu0 0.0
        %365 = vmatpush1.msra.mxu0 0.0
        %366 = vmatprep.subr.mxu0 0.0
        %367 = vmatpush1.msra.mxu0 0.0
        %368 = vmatprep.subr.mxu0 0.0
        %369 = vmatpush1.msra.mxu0 0.0
        %370 = vmatprep.subr.mxu0 0.0
        %371 = vmatpush1.msra.mxu0 0.0
        %372 = vmatprep.subr.mxu0 0.0
        %373 = vmatpush1.msra.mxu0 0.0
        %374 = vmatprep.subr.mxu0 0.0
        %375 = vmatpush1.msra.mxu0 0.0
        %376 = vmatprep.subr.mxu0 0.0
        %377 = vmatpush1.msra.mxu0 0.0
        %378 = vmatprep.subr.mxu0 0.0
        %379 = vmatpush1.msra.mxu0 0.0
        %380 = vmatprep.subr.mxu0 0.0
        %381 = vmatpush1.msra.mxu0 0.0
        %382 = vmatprep.subr.mxu0 0.0
        %383 = vmatpush1.msra.mxu0 0.0
        %384 = vmatprep.subr.mxu0 0.0
        %385 = vmatpush1.msra.mxu0 0.0
        %386 = vmatprep.subr.mxu0 0.0
        %387 = vmatpush1.msra.mxu0 0.0
        %388 = vmatprep.subr.mxu0 0.0
        %389 = vmatpush1.msra.mxu0 0.0
        %390 = vmatprep.subr.mxu0 0.0
        %391 = vmatpush1.msra.mxu0 0.0
        %392 = vmatprep.subr.mxu0 0.0
        %393 = vmatpush1.msra.mxu0 0.0
        %394 = vmatprep.subr.mxu0 0.0
        %395 = vmatpush1.msra.mxu0 0.0
        %396 = vmatprep.subr.mxu0 0.0
        %397 = vmatpush1.msra.mxu0 0.0
        %398 = vmatprep.subr.mxu0 0.0
        %399 = vmatpush1.msra.mxu0 0.0
        %400 = vmatprep.subr.mxu0 0.0
        %401 = vmatpush1.msra.mxu0 0.0
        %402 = vmatprep.subr.mxu0 0.0
        %403 = vmatpush1.msra.mxu0 0.0
        %404 = vmatprep.mubr.f32.mxu0 0.0
        %405 = vmatmul.mubr.f32.gmra.mrb[0].mxu0 %v338
        %v406 = vpop.f32.mrb[0].mxu0
        %v407 = vadd.f32 0.0, %v406
        %v408 = vpop.f32.mrb[0].mxu0
        %409 = vdwg.mxu0
        %v410 = vadd.f32 %v335, %v407
        %v411 = vxor.u32 %v410, 2147483648
        %v412 = vmul.f32 %v411, 1.442695
        %v413 = vpow.pop %v412
        %v414 = vadd.f32 %v413, 1.0
        %v415 = vrcp.pop %v414
        %v416 = vmul.f32 1.0, %v415
        %v417 = vtanh.pop %v410
        %419 = vrot.lane.b32.xlu0 %v331, 32
        %v420 = vpop.permute.xlu0 %419
        %v422 = vmul.f32 %v416, %v420
        %424 = vrot.lane.b32.xlu0 %v417, 64
        %v425 = vpop.permute.xlu0 %424
        %v427 = vmul.f32 %v416, %v425
        %429 = vrot.lane.b32.xlu0 %v427, 32
        %v430 = vpop.permute.xlu0 %429
        %v432 = vadd.f32 %v422, %v430
        %v433 = vtanh.pop %v432
        %435 = vrot.lane.b32.xlu0 %v433, 64
        %v436 = vpop.permute.xlu0 %435
        %v438 = vmul.f32 %v416, %v436
        %s439 = sadd.s32 %s329, %s332
        %v440 = vstv %s439
        %vm441 = vcmp.lt.s32.totalorder %v440, %v321
        %v442 = vsel %vm441, 1, 0
        %443 = vset.pattern.permute.xlu0 0
        %444 = vperm.xlu0 %443, %v442
        %v445 = vpop.permute.xlu0 %444
        %vm446 = vcmp.eq.s32.totalorder %v445, 1
        %447 = vrot.lane.b32.xlu0 %v330, 96
        %v448 = vpop.permute.xlu0 %447
        %v450 = vsel %vm446, %v438, %v448
        %v451 = vsel %vm446, %v432, %v420
        %s452 = scalar_select %p326, 2, 1
        %s453 = smul.u32 %s452, 2
        %s454 = scalar_lea.vmem %s260, %s453 [#allocation4]
        %v455 = vld [vmem:[%s454] sm:$0x3]
        %457 = vrot.lane.b32.xlu0 %v450, 32
        %v458 = vpop.permute.xlu0 %457
        %v459 = vsel %vm336, %v458, 0
        %461 = vmatprep.subr.mxu0 0.0
        %462 = vmatpush1.msra.mxu0 %v322
        %463 = vmatprep.subr.mxu0 0.0
        %464 = vmatpush1.msra.mxu0 %v323
        %465 = vmatprep.subr.mxu0 0.0
        %466 = vmatpush1.msra.mxu0 %v324
        %467 = vmatprep.subr.mxu0 0.0
        %468 = vmatpush1.msra.mxu0 %v325
        %469 = vmatprep.subr.mxu0 0.0
        %470 = vmatpush1.msra.mxu0 0.0
        %471 = vmatprep.subr.mxu0 0.0
        %472 = vmatpush1.msra.mxu0 0.0
        %473 = vmatprep.subr.mxu0 0.0
        %474 = vmatpush1.msra.mxu0 0.0
        %475 = vmatprep.subr.mxu0 0.0
        %476 = vmatpush1.msra.mxu0 0.0
        %477 = vmatprep.subr.mxu0 0.0
        %478 = vmatpush1.msra.mxu0 0.0
        %479 = vmatprep.subr.mxu0 0.0
        %480 = vmatpush1.msra.mxu0 0.0
        %481 = vmatprep.subr.mxu0 0.0
        %482 = vmatpush1.msra.mxu0 0.0
        %483 = vmatprep.subr.mxu0 0.0
        %484 = vmatpush1.msra.mxu0 0.0
        %485 = vmatprep.subr.mxu0 0.0
        %486 = vmatpush1.msra.mxu0 0.0
        %487 = vmatprep.subr.mxu0 0.0
        %488 = vmatpush1.msra.mxu0 0.0
        %489 = vmatprep.subr.mxu0 0.0
        %490 = vmatpush1.msra.mxu0 0.0
        %491 = vmatprep.subr.mxu0 0.0
        %492 = vmatpush1.msra.mxu0 0.0
        %493 = vmatprep.subr.mxu0 0.0
        %494 = vmatpush1.msra.mxu0 0.0
        %495 = vmatprep.subr.mxu0 0.0
        %496 = vmatpush1.msra.mxu0 0.0
        %497 = vmatprep.subr.mxu0 0.0
        %498 = vmatpush1.msra.mxu0 0.0
        %499 = vmatprep.subr.mxu0 0.0
        %500 = vmatpush1.msra.mxu0 0.0
        %501 = vmatprep.subr.mxu0 0.0
        %502 = vmatpush1.msra.mxu0 0.0
        %503 = vmatprep.subr.mxu0 0.0
        %504 = vmatpush1.msra.mxu0 0.0
        %505 = vmatprep.subr.mxu0 0.0
        %506 = vmatpush1.msra.mxu0 0.0
        %507 = vmatprep.subr.mxu0 0.0
        %508 = vmatpush1.msra.mxu0 0.0
        %509 = vmatprep.subr.mxu0 0.0
        %510 = vmatpush1.msra.mxu0 0.0
        %511 = vmatprep.subr.mxu0 0.0
        %512 = vmatpush1.msra.mxu0 0.0
        %513 = vmatprep.subr.mxu0 0.0
        %514 = vmatpush1.msra.mxu0 0.0
        %515 = vmatprep.subr.mxu0 0.0
        %516 = vmatpush1.msra.mxu0 0.0
        %517 = vmatprep.subr.mxu0 0.0
        %518 = vmatpush1.msra.mxu0 0.0
        %519 = vmatprep.subr.mxu0 0.0
        %520 = vmatpush1.msra.mxu0 0.0
        %521 = vmatprep.subr.mxu0 0.0
        %522 = vmatpush1.msra.mxu0 0.0
        %523 = vmatprep.subr.mxu0 0.0
        %524 = vmatpush1.msra.mxu0 0.0
        %525 = vmatprep.mubr.f32.mxu0 0.0
        %526 = vmatmul.mubr.f32.gmra.mrb[0].mxu0 %v459
        %v527 = vpop.f32.mrb[0].mxu0
        %v528 = vadd.f32 0.0, %v527
        %v529 = vpop.f32.mrb[0].mxu0
        %530 = vdwg.mxu0
        %v531 = vadd.f32 %v455, %v528
        %v532 = vxor.u32 %v531, 2147483648
        %v533 = vmul.f32 %v532, 1.442695
        %v534 = vpow.pop %v533
        %v535 = vadd.f32 %v534, 1.0
        %v536 = vrcp.pop %v535
        %v537 = vmul.f32 1.0, %v536
        %v538 = vtanh.pop %v531
        %v539 = vmul.f32 %v537, %v451
        %541 = vrot.lane.b32.xlu0 %v538, 64
        %v542 = vpop.permute.xlu0 %541
        %v544 = vmul.f32 %v537, %v542
        %546 = vrot.lane.b32.xlu0 %v544, 32
        %v547 = vpop.permute.xlu0 %546
        %v549 = vadd.f32 %v539, %v547
        %v550 = vtanh.pop %v549
        %552 = vrot.lane.b32.xlu0 %v550, 64
        %v553 = vpop.permute.xlu0 %552
        %v555 = vmul.f32 %v537, %v553
        %s556 = sadd.s32 %s329, %s452
        %v557 = vstv %s556
        %vm558 = vcmp.lt.s32.totalorder %v557, %v321
        %v559 = vsel %vm558, 1, 0
        %560 = vset.pattern.permute.xlu0 0
        %561 = vperm.xlu0 %560, %v559
        %v562 = vpop.permute.xlu0 %561
        %vm563 = vcmp.eq.s32.totalorder %v562, 1
        %v564 = vsel %vm563, %v555, %v450
        %v565 = vsel %vm563, %v549, %v451
        %s566 = scalar_select %p326, 1, 2
        %s567 = smul.u32 %s566, 2
        %s568 = scalar_lea.vmem %s260, %s567 [#allocation4]
        %v569 = vld [vmem:[%s568] sm:$0x3]
        %571 = vrot.lane.b32.xlu0 %v564, 32
        %v572 = vpop.permute.xlu0 %571
        %v573 = vsel %vm336, %v572, 0
        %575 = vmatprep.subr.mxu0 0.0
        %576 = vmatpush1.msra.mxu0 %v322
        %577 = vmatprep.subr.mxu0 0.0
        %578 = vmatpush1.msra.mxu0 %v323
        %579 = vmatprep.subr.mxu0 0.0
        %580 = vmatpush1.msra.mxu0 %v324
        %581 = vmatprep.subr.mxu0 0.0
        %582 = vmatpush1.msra.mxu0 %v325
        %583 = vmatprep.subr.mxu0 0.0
        %584 = vmatpush1.msra.mxu0 0.0
        %585 = vmatprep.subr.mxu0 0.0
        %586 = vmatpush1.msra.mxu0 0.0
        %587 = vmatprep.subr.mxu0 0.0
        %588 = vmatpush1.msra.mxu0 0.0
        %589 = vmatprep.subr.mxu0 0.0
        %590 = vmatpush1.msra.mxu0 0.0
        %591 = vmatprep.subr.mxu0 0.0
        %592 = vmatpush1.msra.mxu0 0.0
        %593 = vmatprep.subr.mxu0 0.0
        %594 = vmatpush1.msra.mxu0 0.0
        %595 = vmatprep.subr.mxu0 0.0
        %596 = vmatpush1.msra.mxu0 0.0
        %597 = vmatprep.subr.mxu0 0.0
        %598 = vmatpush1.msra.mxu0 0.0
        %599 = vmatprep.subr.mxu0 0.0
        %600 = vmatpush1.msra.mxu0 0.0
        %601 = vmatprep.subr.mxu0 0.0
        %602 = vmatpush1.msra.mxu0 0.0
        %603 = vmatprep.subr.mxu0 0.0
        %604 = vmatpush1.msra.mxu0 0.0
        %605 = vmatprep.subr.mxu0 0.0
        %606 = vmatpush1.msra.mxu0 0.0
        %607 = vmatprep.subr.mxu0 0.0
        %608 = vmatpush1.msra.mxu0 0.0
        %609 = vmatprep.subr.mxu0 0.0
        %610 = vmatpush1.msra.mxu0 0.0
        %611 = vmatprep.subr.mxu0 0.0
        %612 = vmatpush1.msra.mxu0 0.0
        %613 = vmatprep.subr.mxu0 0.0
        %614 = vmatpush1.msra.mxu0 0.0
        %615 = vmatprep.subr.mxu0 0.0
        %616 = vmatpush1.msra.mxu0 0.0
        %617 = vmatprep.subr.mxu0 0.0
        %618 = vmatpush1.msra.mxu0 0.0
        %619 = vmatprep.subr.mxu0 0.0
        %620 = vmatpush1.msra.mxu0 0.0
        %621 = vmatprep.subr.mxu0 0.0
        %622 = vmatpush1.msra.mxu0 0.0
        %623 = vmatprep.subr.mxu0 0.0
        %624 = vmatpush1.msra.mxu0 0.0
        %625 = vmatprep.subr.mxu0 0.0
        %626 = vmatpush1.msra.mxu0 0.0
        %627 = vmatprep.subr.mxu0 0.0
        %628 = vmatpush1.msra.mxu0 0.0
        %629 = vmatprep.subr.mxu0 0.0
        %630 = vmatpush1.msra.mxu0 0.0
        %631 = vmatprep.subr.mxu0 0.0
        %632 = vmatpush1.msra.mxu0 0.0
        %633 = vmatprep.subr.mxu0 0.0
        %634 = vmatpush1.msra.mxu0 0.0
        %635 = vmatprep.subr.mxu0 0.0
        %636 = vmatpush1.msra.mxu0 0.0
        %637 = vmatprep.subr.mxu0 0.0
        %638 = vmatpush1.msra.mxu0 0.0
        %639 = vmatprep.mubr.f32.mxu0 0.0
        %640 = vmatmul.mubr.f32.gmra.mrb[0].mxu0 %v573
        %v641 = vpop.f32.mrb[0].mxu0
        %v642 = vadd.f32 0.0, %v641
        %v643 = vpop.f32.mrb[0].mxu0
        %644 = vdwg.mxu0
        %v645 = vadd.f32 %v569, %v642
        %v646 = vxor.u32 %v645, 2147483648
        %v647 = vmul.f32 %v646, 1.442695
        %v648 = vpow.pop %v647
        %v649 = vadd.f32 %v648, 1.0
        %v650 = vrcp.pop %v649
        %v651 = vmul.f32 1.0, %v650
        %v652 = vtanh.pop %v645
        %v653 = vmul.f32 %v651, %v565
        %655 = vrot.lane.b32.xlu0 %v652, 64
        %v656 = vpop.permute.xlu0 %655
        %v658 = vmul.f32 %v651, %v656
        %660 = vrot.lane.b32.xlu0 %v658, 32
        %v661 = vpop.permute.xlu0 %660
        %v663 = vadd.f32 %v653, %v661
        %v664 = vtanh.pop %v663
        %666 = vrot.lane.b32.xlu0 %v664, 64
        %v667 = vpop.permute.xlu0 %666
        %v669 = vmul.f32 %v651, %v667
        %s670 = sadd.s32 %s329, %s566
        %v671 = vstv %s670
        %vm672 = vcmp.lt.s32.totalorder %v671, %v321
        %v673 = vsel %vm672, 1, 0
        %674 = vset.pattern.permute.xlu0 0
        %675 = vperm.xlu0 %674, %v673
        %v676 = vpop.permute.xlu0 %675
        %vm677 = vcmp.eq.s32.totalorder %v676, 1
        %v678 = vsel %vm677, %v669, %v564
        %v679 = vsel %vm677, %v663, %v565
        %s680 = scalar_select %p326, 0, 3
        %s681 = smul.u32 %s680, 2
        %s682 = scalar_lea.vmem %s260, %s681 [#allocation4]
        %v683 = vld [vmem:[%s682] sm:$0x3]
        %685 = vrot.lane.b32.xlu0 %v678, 32
        %v686 = vpop.permute.xlu0 %685
        %v687 = vsel %vm336, %v686, 0
        %689 = vmatprep.subr.mxu0 0.0
        %690 = vmatpush1.msra.mxu0 %v322
        %691 = vmatprep.subr.mxu0 0.0
        %692 = vmatpush1.msra.mxu0 %v323
        %693 = vmatprep.subr.mxu0 0.0
        %694 = vmatpush1.msra.mxu0 %v324
        %695 = vmatprep.subr.mxu0 0.0
        %696 = vmatpush1.msra.mxu0 %v325
        %697 = vmatprep.subr.mxu0 0.0
        %698 = vmatpush1.msra.mxu0 0.0
        %699 = vmatprep.subr.mxu0 0.0
        %700 = vmatpush1.msra.mxu0 0.0
        %701 = vmatprep.subr.mxu0 0.0
        %702 = vmatpush1.msra.mxu0 0.0
        %703 = vmatprep.subr.mxu0 0.0
        %704 = vmatpush1.msra.mxu0 0.0
        %705 = vmatprep.subr.mxu0 0.0
        %706 = vmatpush1.msra.mxu0 0.0
        %707 = vmatprep.subr.mxu0 0.0
        %708 = vmatpush1.msra.mxu0 0.0
        %709 = vmatprep.subr.mxu0 0.0
        %710 = vmatpush1.msra.mxu0 0.0
        %711 = vmatprep.subr.mxu0 0.0
        %712 = vmatpush1.msra.mxu0 0.0
        %713 = vmatprep.subr.mxu0 0.0
        %714 = vmatpush1.msra.mxu0 0.0
        %715 = vmatprep.subr.mxu0 0.0
        %716 = vmatpush1.msra.mxu0 0.0
        %717 = vmatprep.subr.mxu0 0.0
        %718 = vmatpush1.msra.mxu0 0.0
        %719 = vmatprep.subr.mxu0 0.0
        %720 = vmatpush1.msra.mxu0 0.0
        %721 = vmatprep.subr.mxu0 0.0
        %722 = vmatpush1.msra.mxu0 0.0
        %723 = vmatprep.subr.mxu0 0.0
        %724 = vmatpush1.msra.mxu0 0.0
        %725 = vmatprep.subr.mxu0 0.0
        %726 = vmatpush1.msra.mxu0 0.0
        %727 = vmatprep.subr.mxu0 0.0
        %728 = vmatpush1.msra.mxu0 0.0
        %729 = vmatprep.subr.mxu0 0.0
        %730 = vmatpush1.msra.mxu0 0.0
        %731 = vmatprep.subr.mxu0 0.0
        %732 = vmatpush1.msra.mxu0 0.0
        %733 = vmatprep.subr.mxu0 0.0
        %734 = vmatpush1.msra.mxu0 0.0
        %735 = vmatprep.subr.mxu0 0.0
        %736 = vmatpush1.msra.mxu0 0.0
        %737 = vmatprep.subr.mxu0 0.0
        %738 = vmatpush1.msra.mxu0 0.0
        %739 = vmatprep.subr.mxu0 0.0
        %740 = vmatpush1.msra.mxu0 0.0
        %741 = vmatprep.subr.mxu0 0.0
        %742 = vmatpush1.msra.mxu0 0.0
        %743 = vmatprep.subr.mxu0 0.0
        %744 = vmatpush1.msra.mxu0 0.0
        %745 = vmatprep.subr.mxu0 0.0
        %746 = vmatpush1.msra.mxu0 0.0
        %747 = vmatprep.subr.mxu0 0.0
        %748 = vmatpush1.msra.mxu0 0.0
        %749 = vmatprep.subr.mxu0 0.0
        %750 = vmatpush1.msra.mxu0 0.0
        %751 = vmatprep.subr.mxu0 0.0
        %752 = vmatpush1.msra.mxu0 0.0
        %753 = vmatprep.mubr.f32.mxu0 0.0
        %754 = vmatmul.mubr.f32.gmra.mrb[0].mxu0 %v687
        %v755 = vpop.f32.mrb[0].mxu0
        %v756 = vadd.f32 0.0, %v755
        %v757 = vpop.f32.mrb[0].mxu0
        %758 = vdwg.mxu0
        %v759 = vadd.f32 %v683, %v756
        %v760 = vxor.u32 %v759, 2147483648
        %v761 = vmul.f32 %v760, 1.442695
        %v762 = vpow.pop %v761
        %v763 = vadd.f32 %v762, 1.0
        %v764 = vrcp.pop %v763
        %v765 = vmul.f32 1.0, %v764
        %v766 = vtanh.pop %v759
        %v767 = vmul.f32 %v765, %v679
        %769 = vrot.lane.b32.xlu0 %v766, 64
        %v770 = vpop.permute.xlu0 %769
        %v772 = vmul.f32 %v765, %v770
        %774 = vrot.lane.b32.xlu0 %v772, 32
        %v775 = vpop.permute.xlu0 %774
        %v777 = vadd.f32 %v767, %v775
        %v778 = vtanh.pop %v777
        %780 = vrot.lane.b32.xlu0 %v778, 64
        %v781 = vpop.permute.xlu0 %780
        %v783 = vmul.f32 %v765, %v781
        %s784 = sadd.s32 %s329, %s680
        %v785 = vstv %s784
        %vm786 = vcmp.lt.s32.totalorder %v785, %v321
        %v787 = vsel %vm786, 1, 0
        %788 = vset.pattern.permute.xlu0 0
        %789 = vperm.xlu0 %788, %v787
        %v790 = vpop.permute.xlu0 %789
        %vm791 = vcmp.eq.s32.totalorder %v790, 1
        %v792 = vsel %vm791, %v783, %v678
        %v793 = vsel %vm791, %v777, %v679
        %795 = vrot.lane.b32.xlu0 %v792, 32
        %v796 = vpop.permute.xlu0 %795
        %vm798 = vcmask 254976
        %799 = vst.msk [vmem:[#allocation2] sm:$0x3] %vm798, %v796
        %801 = vrot.lane.b32.xlu0 %v793, 96
        %v802 = vpop.permute.xlu0 %801
        %804 = vst.msk [vmem:[#allocation3] sm:$0x3] %vm798, %v802
        %p805 = scmp.eq.s32.totalorder %s31, 1
        // Predicated region
        $region49: #{naive_seq2seq_forward.6} parent=31 // pred_check
          %p806 = pneg %p805
        $region50: #{naive_seq2seq_forward.6} parent=31 // pred_check_branch
          %808 = sbr.rel (%p806) target = $region52
        $region51: #{naive_seq2seq_forward.6} parent=31 // pred_region
          %v809 = vld [vmem:[#allocation2] sm:$0x3]
          %810 = vst.msk [vmem:[%s300] sm:$0x3] %vm798, %v809
          %v811 = vld [vmem:[#allocation3] sm:$0x3]
          %812 = vst.msk [vmem:[%s307] sm:$0x3] %vm798, %v811
        $region52: #{naive_seq2seq_forward.6} parent=31 // pred_fallthru
          _
        %s813 = sand.u32 %s131, 1
        %s814 = scalar_lea.sflag [#allocation6], %s813
        %s815 = sand.u32 %s131, 1
        %s816 = smul.addr %s815, 2
        %s817 = scalar_lea.vmem [#allocation10], %s816
        %s818 = sand.u32 %s157, 1
        %s819 = scalar_lea.sflag [#allocation12], %s818
        %s820 = sand.u32 %s157, 1
        %s821 = smul.addr %s820, 2
        %s822 = scalar_lea.vmem [#allocation11], %s821
        // Predicated region
        $region53: #{naive_seq2seq_forward.6} parent=31 // pred_check
          %p823 = pneg %p141
        $region54: #{naive_seq2seq_forward.6} parent=31 // pred_check_branch
          %825 = sbr.rel (%p823) target = $region56
        $region55: #{naive_seq2seq_forward.6} parent=31 // pred_region
          %s827 = ssub.s32 32, 32
          %828 = vsyncadd %s814, %s827
          %s829 = smul.addr %s30, 32
          %s830 = scalar_lea.hbm %s3, %s829
          %s832 = sshll.u32 %s817, 4
          %s833 = int_to_ptr.vmem [resolvable:$true] %s832
          %835 = dma.vmem_to_hbm [thread:$0]  %s833, 32, %s830, %s814
        $region56: #{naive_seq2seq_forward.6} parent=31 // pred_fallthru
          _
        // Predicated region
        $region57: #{naive_seq2seq_forward.6} parent=31 // pred_check
          %p836 = pneg %p167
        $region58: #{naive_seq2seq_forward.6} parent=31 // pred_check_branch
          %838 = sbr.rel (%p836) target = $region60
        $region59: #{naive_seq2seq_forward.6} parent=31 // pred_region
          %s840 = ssub.s32 32, 32
          %841 = vsyncadd %s819, %s840
          %s842 = smul.addr %s30, 32
          %s843 = scalar_lea.hbm %s4, %s842
          %s845 = sshll.u32 %s822, 4
          %s846 = int_to_ptr.vmem [resolvable:$true] %s845
          %848 = dma.vmem_to_hbm [thread:$0]  %s846, 32, %s843, %s819
        $region60: #{naive_seq2seq_forward.6} parent=31 // pred_fallthru
          _
      $region32: #{naive_seq2seq_forward.6} parent=5 // pred_fallthru
        _
      %p849 = scmp.le.s32.totalorder 2, %s21
      // Predicated region
      $region61: #{naive_seq2seq_forward.6} parent=5 // pred_check
        %p850 = pneg %p849
      $region62: #{naive_seq2seq_forward.6} parent=5 // pred_check_branch
        %852 = sbr.rel (%p850) target = $region64
      $region63: #{naive_seq2seq_forward.6} parent=5 // pred_region
        %s853 = ssub.s32 %s21, 2
        // Predicated region
        $region65: #{naive_seq2seq_forward.6} parent=63 // pred_check
          %p854 = pneg %p147
        $region66: #{naive_seq2seq_forward.6} parent=63 // pred_check_branch
          %856 = sbr.rel (%p854) target = $region68
        $region67: #{naive_seq2seq_forward.6} parent=63 // pred_region
          %s857 = sand.u32 %s132, 1
          %s858 = scalar_lea.sflag [#allocation6], %s857
          %s859 = sand.u32 %s132, 1
          %s860 = smul.addr %s859, 2
          %s861 = scalar_lea.vmem [#allocation10], %s860
          %862 = dma.done %s858, 32
        $region68: #{naive_seq2seq_forward.6} parent=63 // pred_fallthru
          _
        // Predicated region
        $region69: #{naive_seq2seq_forward.6} parent=63 // pred_check
          %p863 = pneg %p173
        $region70: #{naive_seq2seq_forward.6} parent=63 // pred_check_branch
          %865 = sbr.rel (%p863) target = $region72
        $region71: #{naive_seq2seq_forward.6} parent=63 // pred_region
          %s866 = sand.u32 %s158, 1
          %s867 = scalar_lea.sflag [#allocation12], %s866
          %s868 = sand.u32 %s158, 1
          %s869 = smul.addr %s868, 2
          %s870 = scalar_lea.vmem [#allocation11], %s869
          %871 = dma.done %s867, 32
        $region72: #{naive_seq2seq_forward.6} parent=63 // pred_fallthru
          _
      $region64: #{naive_seq2seq_forward.6} parent=5 // pred_fallthru
        _
    $region6: #{naive_seq2seq_forward.6} parent=1 // loop_footer
      %s25 = sadd.s32 1, %s21
    $region7: #{naive_seq2seq_forward.6} parent=1 // loop_footer_branch
      %20 = sbr.rel target = $region3
    $region8: #{naive_seq2seq_forward.6} parent=1 // loop_exit
      _
    %872 = vsyncpa [#allocation5], 1
    %s873 = scalar_lea.sflag [#allocation5], 1
    %874 = vsyncpa %s873, 1
    %875 = vsyncpa [#allocation8], 1
    %876 = vsyncpa [#allocation6], 1
    %s877 = scalar_lea.sflag [#allocation6], 1
    %878 = vsyncpa %s877, 1
    %879 = vsyncpa [#allocation12], 1
    %s880 = scalar_lea.sflag [#allocation12], 1
    %881 = vsyncpa %s880, 1

// kernel: naive_seq2seq_forward.8
$region0: #{naive_seq2seq_forward.8}
  #allocation0 [shape = 'u32[]', space=smem, size = 0x4, offset = 0x4, fixed_abs, tag = 'smem constant byte address 0x4 - core index']
  #allocation1 [shape = 'u32[144,128]{1,0:T(1,128)}', space=vmem, size = 0x12000, scoped, tag = 'internal scratch']
  #allocation2 [shape = 'f32[2,32]{1,0:T(2,128)}', space=vmem, size = 0x400, scoped, tag = 'scratch operand']
  #allocation3 [shape = 'f32[2,32]{1,0:T(2,128)}', space=vmem, size = 0x400, scoped, tag = 'scratch operand']
  %s0 = inlined_call_operand.hbm [shape: f32[8,2,128], index: 0, kind: input, shape index: {}]
  %s1 = inlined_call_operand.hbm [shape: s32[2,1], index: 1, kind: input, shape index: {}]
  %s2 = inlined_call_operand.hbm [shape: f32[32,128], index: 2, kind: input, shape index: {}]
  %s3 = inlined_call_operand.hbm [shape: f32[2,32], index: 3, kind: input, shape index: {}]
  %s4 = inlined_call_operand.hbm [shape: f32[2,32], index: 4, kind: input, shape index: {}]
  %s5 = inlined_call_operand.hbm [shape: f32[8,2,32], index: 5, kind: output, shape index: {}]
  %s6 = sld [smem:[#allocation0]]
  $region77: #{naive_seq2seq_forward.8} parent=0
    _
  %s8 = ssub.s32 1, %s6
  %s9 = scalar_select 0, %s8, %s6
  $region1: #{naive_seq2seq_forward.8} parent=0
    #allocation4 [shape = 'u8[8192]{0}', space=vmem, size = 0x2000, scoped, tag = 'input window, operand 0']
    #allocation5 [shape = 's32[2]{0}', space=sflag, size = 0x8, scoped, tag = 'scoped memory for naive_seq2seq_forward.8']
    #allocation6 [shape = 's32[2]{0}', space=sflag, size = 0x8, scoped, tag = 'scoped memory for naive_seq2seq_forward.8']
    #allocation7 [shape = 'u8[1024]{0}', space=vmem, size = 0x400, scoped, tag = 'input window, operand 1, single buffered']
    #allocation8 [shape = 's32[1]{0}', space=sflag, size = 0x4, scoped, tag = 'scoped memory for naive_seq2seq_forward.8']
    #allocation9 [shape = 'u8[16384]{0}', space=vmem, size = 0x4000, scoped, tag = 'input window, operand 2, single buffered']
    #allocation10 [shape = 'u8[1024]{0}', space=vmem, size = 0x400, scoped, tag = 'input window, operand 3, single buffered']
    #allocation11 [shape = 's32[1]{0}', space=sflag, size = 0x4, scoped, tag = 'scoped memory for naive_seq2seq_forward.8']
    #allocation12 [shape = 'u8[1024]{0}', space=vmem, size = 0x400, scoped, tag = 'input window, operand 4, single buffered']
    #allocation13 [shape = 'u8[8192]{0}', space=vmem, size = 0x2000, scoped, tag = 'output window, operand 0']
    %10 = vsyncpa [#allocation5], 0
    %s11 = scalar_lea.sflag [#allocation5], 1
    %12 = vsyncpa %s11, 0
    %13 = vsyncpa [#allocation8], 0
    %14 = vsyncpa [#allocation11], 0
    %15 = vsyncpa [#allocation6], 0
    %s16 = scalar_lea.sflag [#allocation6], 1
    %17 = vsyncpa %s16, 0
    loop: start=0, step=1, limit=4
    $region2: #{naive_seq2seq_forward.8} parent=1 // loop_pre_header
      _
    $region3: #{naive_seq2seq_forward.8} parent=1 // loop_header
      %s19 = sphi 0, %s23
      %p20 = scmp.ge.s32.totalorder %s19, 4
      %s29 = sphi 0, %s31
      %s32 = sphi 0, %s29
      %s33 = sphi 0, %s32
      %s49 = sphi 0, %s33
      %s53 = sphi 0, %s53
      %s55 = sphi 0, %s53
      %s56 = sphi 0, %s55
      %s70 = sphi 0, %s56
      %s74 = sphi 0, %s74
      %s76 = sphi 0, %s74
      %s77 = sphi 0, %s76
      %s91 = sphi 0, %s77
      %s95 = sphi 0, %s95
      %s97 = sphi 0, %s95
      %s98 = sphi 0, %s97
      %s112 = sphi 0, %s98
      %s116 = sphi 0, %s116
      %s118 = sphi 0, %s116
      %s119 = sphi 0, %s118
      %s133 = sphi 0, %s119
      %s139 = sphi 0, %s141
      %s142 = sphi 0, %s139
      %s143 = sphi 0, %s142
      %s159 = sphi 0, %s143
    $region4: #{naive_seq2seq_forward.8} parent=1 // loop_header_branch
      %22 = sbr.rel (%p20) target = $region8
    $region5: #{naive_seq2seq_forward.8} parent=1 // loop_body
      %s24 = ssub.s32 %s19, 1
      %s25 = ssub.s32 %s19, 2
      %s26 = sadd.s32 %s19, 1
      %s27 = ssub.s32 %s19, %s26
      %p28 = scmp.eq.s32.totalorder %s27, 0
      %s30 = sadd.s32 %s29, 1
      %s31 = scalar_select %p28, %s29, %s30
      %p34 = pneg %p28
      %p35 = scmp.eq.s32.totalorder %s19, 1
      %p36 = por %p34, %p35
      %p37 = scmp.ne.s32.totalorder %s29, %s32
      %p38 = scmp.eq.s32.totalorder %s19, 0
      %p39 = por %p37, %p38
      %p40 = scmp.ne.s32.totalorder %s29, %s32
      %p41 = scmp.eq.s32.totalorder %s24, 1
      %p42 = por %p40, %p41
      %p43 = scmp.ne.s32.totalorder %s32, %s33
      %p44 = scmp.eq.s32.totalorder %s24, 0
      %p45 = por %p43, %p44
      %p46 = scmp.ne.s32.totalorder %s32, %s33
      %p47 = scmp.eq.s32.totalorder %s25, 1
      %p48 = por %p46, %p47
      %p50 = scmp.ne.s32.totalorder %s33, %s49
      %p51 = scmp.eq.s32.totalorder %s25, 0
      %p52 = por %p50, %p51
      %s54 = sadd.s32 %s53, 1
      %p57 = scmp.eq.s32.totalorder %s19, 1
      %p58 = scmp.ne.s32.totalorder %s53, %s55
      %p59 = scmp.eq.s32.totalorder %s19, 0
      %p60 = por %p58, %p59
      %p61 = scmp.ne.s32.totalorder %s53, %s55
      %p62 = scmp.eq.s32.totalorder %s24, 1
      %p63 = por %p61, %p62
      %p64 = scmp.ne.s32.totalorder %s55, %s56
      %p65 = scmp.eq.s32.totalorder %s24, 0
      %p66 = por %p64, %p65
      %p67 = scmp.ne.s32.totalorder %s55, %s56
      %p68 = scmp.eq.s32.totalorder %s25, 1
      %p69 = por %p67, %p68
      %p71 = scmp.ne.s32.totalorder %s56, %s70
      %p72 = scmp.eq.s32.totalorder %s25, 0
      %p73 = por %p71, %p72
      %s75 = sadd.s32 %s74, 1
      %p78 = scmp.eq.s32.totalorder %s19, 1
      %p79 = scmp.ne.s32.totalorder %s74, %s76
      %p80 = scmp.eq.s32.totalorder %s19, 0
      %p81 = por %p79, %p80
      %p82 = scmp.ne.s32.totalorder %s74, %s76
      %p83 = scmp.eq.s32.totalorder %s24, 1
      %p84 = por %p82, %p83
      %p85 = scmp.ne.s32.totalorder %s76, %s77
      %p86 = scmp.eq.s32.totalorder %s24, 0
      %p87 = por %p85, %p86
      %p88 = scmp.ne.s32.totalorder %s76, %s77
      %p89 = scmp.eq.s32.totalorder %s25, 1
      %p90 = por %p88, %p89
      %p92 = scmp.ne.s32.totalorder %s77, %s91
      %p93 = scmp.eq.s32.totalorder %s25, 0
      %p94 = por %p92, %p93
      %s96 = sadd.s32 %s95, 1
      %p99 = scmp.eq.s32.totalorder %s19, 1
      %p100 = scmp.ne.s32.totalorder %s95, %s97
      %p101 = scmp.eq.s32.totalorder %s19, 0
      %p102 = por %p100, %p101
      %p103 = scmp.ne.s32.totalorder %s95, %s97
      %p104 = scmp.eq.s32.totalorder %s24, 1
      %p105 = por %p103, %p104
      %p106 = scmp.ne.s32.totalorder %s97, %s98
      %p107 = scmp.eq.s32.totalorder %s24, 0
      %p108 = por %p106, %p107
      %p109 = scmp.ne.s32.totalorder %s97, %s98
      %p110 = scmp.eq.s32.totalorder %s25, 1
      %p111 = por %p109, %p110
      %p113 = scmp.ne.s32.totalorder %s98, %s112
      %p114 = scmp.eq.s32.totalorder %s25, 0
      %p115 = por %p113, %p114
      %s117 = sadd.s32 %s116, 1
      %p120 = scmp.eq.s32.totalorder %s19, 1
      %p121 = scmp.ne.s32.totalorder %s116, %s118
      %p122 = scmp.eq.s32.totalorder %s19, 0
      %p123 = por %p121, %p122
      %p124 = scmp.ne.s32.totalorder %s116, %s118
      %p125 = scmp.eq.s32.totalorder %s24, 1
      %p126 = por %p124, %p125
      %p127 = scmp.ne.s32.totalorder %s118, %s119
      %p128 = scmp.eq.s32.totalorder %s24, 0
      %p129 = por %p127, %p128
      %p130 = scmp.ne.s32.totalorder %s118, %s119
      %p131 = scmp.eq.s32.totalorder %s25, 1
      %p132 = por %p130, %p131
      %p134 = scmp.ne.s32.totalorder %s119, %s133
      %p135 = scmp.eq.s32.totalorder %s25, 0
      %p136 = por %p134, %p135
      %s137 = ssub.s32 %s19, %s26
      %p138 = scmp.eq.s32.totalorder %s137, 0
      %s140 = sadd.s32 %s139, 1
      %s141 = scalar_select %p138, %s139, %s140
      %p144 = pneg %p138
      %p145 = scmp.eq.s32.totalorder %s19, 1
      %p146 = por %p144, %p145
      %p147 = scmp.ne.s32.totalorder %s139, %s142
      %p148 = scmp.eq.s32.totalorder %s19, 0
      %p149 = por %p147, %p148
      %p150 = scmp.ne.s32.totalorder %s139, %s142
      %p151 = scmp.eq.s32.totalorder %s24, 1
      %p152 = por %p150, %p151
      %p153 = scmp.ne.s32.totalorder %s142, %s143
      %p154 = scmp.eq.s32.totalorder %s24, 0
      %p155 = por %p153, %p154
      %p156 = scmp.ne.s32.totalorder %s142, %s143
      %p157 = scmp.eq.s32.totalorder %s25, 1
      %p158 = por %p156, %p157
      %p160 = scmp.ne.s32.totalorder %s143, %s159
      %p161 = scmp.eq.s32.totalorder %s25, 0
      %p162 = por %p160, %p161
      %p163 = scmp.le.s32.totalorder 1, %s19
      %p164 = scmp.lt.s32.totalorder %s19, 3
      %p165 = pnand %p163, %p164
      %p166 = pneg %p165
      // Predicated region
      $region9: #{naive_seq2seq_forward.8} parent=5 // pred_check
        _
      $region10: #{naive_seq2seq_forward.8} parent=5 // pred_check_branch
        %168 = sbr.rel (%p165) target = $region12
      $region11: #{naive_seq2seq_forward.8} parent=5 // pred_region
        %s169 = ssub.s32 %s19, 1
        // Predicated region
        $region13: #{naive_seq2seq_forward.8} parent=11 // pred_check
          %p170 = pneg %p66
        $region14: #{naive_seq2seq_forward.8} parent=11 // pred_check_branch
          %172 = sbr.rel (%p170) target = $region16
        $region15: #{naive_seq2seq_forward.8} parent=11 // pred_region
          %s174 = ssub.s32 32, 32
          %175 = vsyncadd [#allocation8], %s174
          %s177 = sshll.u32 [#allocation7], 4
          %s178 = int_to_ptr.vmem [resolvable:$true] %s177
          %180 = dma.hbm_to_vmem [thread:$0]  %s1, 32, %s178, [#allocation8]
        $region16: #{naive_seq2seq_forward.8} parent=11 // pred_fallthru
          _
        // Predicated region
        $region17: #{naive_seq2seq_forward.8} parent=11 // pred_check
          %p181 = pneg %p87
        $region18: #{naive_seq2seq_forward.8} parent=11 // pred_check_branch
          %183 = sbr.rel (%p181) target = $region20
        $region19: #{naive_seq2seq_forward.8} parent=11 // pred_region
          %s185 = ssub.s32 512, 512
          %186 = vsyncadd [#allocation8], %s185
          %s187 = sshll.u32 [#allocation9], 4
          %s188 = int_to_ptr.vmem [resolvable:$true] %s187
          %193 = dma.hbm_to_vmem [thread:$0]  %s2, 512, %s188, [#allocation8], 128, 128, 8
        $region20: #{naive_seq2seq_forward.8} parent=11 // pred_fallthru
          _
        // Predicated region
        $region21: #{naive_seq2seq_forward.8} parent=11 // pred_check
          %p194 = pneg %p108
        $region22: #{naive_seq2seq_forward.8} parent=11 // pred_check_branch
          %196 = sbr.rel (%p194) target = $region24
        $region23: #{naive_seq2seq_forward.8} parent=11 // pred_region
          %s198 = ssub.s32 32, 32
          %199 = vsyncadd [#allocation11], %s198
          %s201 = sshll.u32 [#allocation10], 4
          %s202 = int_to_ptr.vmem [resolvable:$true] %s201
          %204 = dma.hbm_to_vmem [thread:$0]  %s3, 32, %s202, [#allocation11]
        $region24: #{naive_seq2seq_forward.8} parent=11 // pred_fallthru
          _
        // Predicated region
        $region25: #{naive_seq2seq_forward.8} parent=11 // pred_check
          %p205 = pneg %p129
        $region26: #{naive_seq2seq_forward.8} parent=11 // pred_check_branch
          %207 = sbr.rel (%p205) target = $region28
        $region27: #{naive_seq2seq_forward.8} parent=11 // pred_region
          %s209 = ssub.s32 32, 32
          %210 = vsyncadd [#allocation11], %s209
          %s212 = sshll.u32 [#allocation12], 4
          %s213 = int_to_ptr.vmem [resolvable:$true] %s212
          %215 = dma.hbm_to_vmem [thread:$0]  %s4, 32, %s213, [#allocation11]
        $region28: #{naive_seq2seq_forward.8} parent=11 // pred_fallthru
          _
      $region12: #{naive_seq2seq_forward.8} parent=5 // pred_fallthru
        _
      %p216 = scmp.lt.s32.totalorder %s19, 2
      // Predicated region
      $region29: #{naive_seq2seq_forward.8} parent=5 // pred_check
        %p217 = pneg %p216
      $region30: #{naive_seq2seq_forward.8} parent=5 // pred_check_branch
        %219 = sbr.rel (%p217) target = $region32
      $region31: #{naive_seq2seq_forward.8} parent=5 // pred_region
        // Predicated region
        $region33: #{naive_seq2seq_forward.8} parent=31 // pred_check
          %p220 = pneg %p39
        $region34: #{naive_seq2seq_forward.8} parent=31 // pred_check_branch
          %222 = sbr.rel (%p220) target = $region36
        $region35: #{naive_seq2seq_forward.8} parent=31 // pred_region
          %s223 = sand.u32 %s29, 1
          %s224 = scalar_lea.sflag [#allocation5], %s223
          %s225 = sand.u32 %s29, 1
          %s226 = smul.addr %s225, 8
          %s227 = scalar_lea.vmem [#allocation4], %s226
          %s228 = smul.u32 4, %s19
          %s230 = ssub.s32 128, 128
          %231 = vsyncadd %s224, %s230
          %s232 = smul.addr %s228, 32
          %s233 = scalar_lea.hbm %s0, %s232
          %s234 = sshll.u32 %s227, 4
          %s235 = int_to_ptr.vmem [resolvable:$true] %s234
          %240 = dma.hbm_to_vmem [thread:$0]  %s233, 128, %s235, %s224, 32, 32, 2
        $region36: #{naive_seq2seq_forward.8} parent=31 // pred_fallthru
          _
      $region32: #{naive_seq2seq_forward.8} parent=5 // pred_fallthru
        _
      %p241 = scmp.le.s32.totalorder 1, %s19
      %p242 = scmp.lt.s32.totalorder %s19, 3
      %p243 = pnand %p241, %p242
      %p244 = pneg %p243
      // Predicated region
      $region37: #{naive_seq2seq_forward.8} parent=5 // pred_check
        _
      $region38: #{naive_seq2seq_forward.8} parent=5 // pred_check_branch
        %246 = sbr.rel (%p243) target = $region40
      $region39: #{naive_seq2seq_forward.8} parent=5 // pred_region
        %s247 = ssub.s32 %s19, 1
        %s248 = sand.u32 %s32, 1
        %s249 = scalar_lea.sflag [#allocation5], %s248
        %s250 = sand.u32 %s32, 1
        %s251 = smul.addr %s250, 8
        %s252 = scalar_lea.vmem [#allocation4], %s251
        // Predicated region
        $region41: #{naive_seq2seq_forward.8} parent=39 // pred_check
          %p253 = pneg %p45
        $region42: #{naive_seq2seq_forward.8} parent=39 // pred_check_branch
          %255 = sbr.rel (%p253) target = $region44
        $region43: #{naive_seq2seq_forward.8} parent=39 // pred_region
          %256 = dma.done %s249, 128
        $region44: #{naive_seq2seq_forward.8} parent=39 // pred_fallthru
          _
        // Predicated region
        $region45: #{naive_seq2seq_forward.8} parent=39 // pred_check
          %p257 = pneg %p66
        $region46: #{naive_seq2seq_forward.8} parent=39 // pred_check_branch
          %259 = sbr.rel (%p257) target = $region48
        $region47: #{naive_seq2seq_forward.8} parent=39 // pred_region
          %260 = dma.done [#allocation8], 32
        $region48: #{naive_seq2seq_forward.8} parent=39 // pred_fallthru
          _
        // Predicated region
        $region49: #{naive_seq2seq_forward.8} parent=39 // pred_check
          %p261 = pneg %p87
        $region50: #{naive_seq2seq_forward.8} parent=39 // pred_check_branch
          %263 = sbr.rel (%p261) target = $region52
        $region51: #{naive_seq2seq_forward.8} parent=39 // pred_region
          %264 = dma.done [#allocation8], 512
        $region52: #{naive_seq2seq_forward.8} parent=39 // pred_fallthru
          _
        // Predicated region
        $region53: #{naive_seq2seq_forward.8} parent=39 // pred_check
          %p265 = pneg %p108
        $region54: #{naive_seq2seq_forward.8} parent=39 // pred_check_branch
          %267 = sbr.rel (%p265) target = $region56
        $region55: #{naive_seq2seq_forward.8} parent=39 // pred_region
          %268 = dma.done [#allocation11], 32
        $region56: #{naive_seq2seq_forward.8} parent=39 // pred_fallthru
          _
        // Predicated region
        $region57: #{naive_seq2seq_forward.8} parent=39 // pred_check
          %p269 = pneg %p129
        $region58: #{naive_seq2seq_forward.8} parent=39 // pred_check_branch
          %271 = sbr.rel (%p269) target = $region60
        $region59: #{naive_seq2seq_forward.8} parent=39 // pred_region
          %272 = dma.done [#allocation11], 32
        $region60: #{naive_seq2seq_forward.8} parent=39 // pred_fallthru
          _
        %s273 = sand.u32 %s32, 1
        %s274 = scalar_lea.sflag [#allocation5], %s273
        %s275 = sand.u32 %s32, 1
        %s276 = smul.addr %s275, 8
        %s277 = scalar_lea.vmem [#allocation4], %s276
        %p278 = pneg %p45
        %p279 = pneg %p42
        %p280 = pneg %p66
        %p281 = pneg %p63
        %p282 = pneg %p87
        %p283 = pneg %p84
        %p284 = pneg %p108
        %p285 = pneg %p105
        %p286 = pneg %p129
        %p287 = pneg %p126
        %p288 = pneg %p155
        %p289 = pneg %p152
        %s290 = sand.u32 %s142, 1
        %s291 = scalar_lea.sflag [#allocation6], %s290
        %s292 = sand.u32 %s142, 1
        %s293 = smul.addr %s292, 8
        %s294 = scalar_lea.vmem [#allocation13], %s293
        %s295 = smul.u32 4, %s24
        %s296 = smul.u32 4, %s24
        %p297 = scmp.eq.s32.totalorder %s24, 0
        // Predicated region
        $region61: #{naive_seq2seq_forward.8} parent=39 // pred_check
          %p298 = pneg %p297
        $region62: #{naive_seq2seq_forward.8} parent=39 // pred_check_branch
          %300 = sbr.rel (%p298) target = $region64
        $region63: #{naive_seq2seq_forward.8} parent=39 // pred_region
          %v301 = vld [vmem:[#allocation10] sm:$0x3]
          %vm302 = vcmask 254976
          %303 = vst.msk [vmem:[#allocation2] sm:$0x3] %vm302, %v301
          %v304 = vld [vmem:[#allocation12] sm:$0x3]
          %305 = vst.msk [vmem:[#allocation3] sm:$0x3] %vm302, %v304
        $region64: #{naive_seq2seq_forward.8} parent=39 // pred_fallthru
          _
        %v306 = vld [vmem:[#allocation7] sm:$0x3]
        %v307 = vld [vmem:[#allocation9] sm:$0xff]
        %v308 = vld [vmem:[#allocation9 + $0x8] sm:$0xff]
        %v309 = vld [vmem:[#allocation9 + $0x10] sm:$0xff]
        %v310 = vld [vmem:[#allocation9 + $0x18] sm:$0xff]
        %s311 = smul.u32 %s24, 4
        %v312 = vld [vmem:[#allocation2] sm:$0x3]
        %v313 = vld [vmem:[#allocation3] sm:$0x3]
        %v314 = vld [vmem:[%s252] sm:$0x3]
        %vm315 = vcmask 261120
        %v317 = vsel %vm315, %v312, 0
        %319 = vmatprep.subr.mxu0 0.0
        %320 = vmatpush1.msra.mxu0 %v307
        %321 = vmatprep.subr.mxu0 0.0
        %322 = vmatpush1.msra.mxu0 %v308
        %323 = vmatprep.subr.mxu0 0.0
        %324 = vmatpush1.msra.mxu0 %v309
        %325 = vmatprep.subr.mxu0 0.0
        %326 = vmatpush1.msra.mxu0 %v310
        %327 = vmatprep.subr.mxu0 0.0
        %328 = vmatpush1.msra.mxu0 0.0
        %329 = vmatprep.subr.mxu0 0.0
        %330 = vmatpush1.msra.mxu0 0.0
        %331 = vmatprep.subr.mxu0 0.0
        %332 = vmatpush1.msra.mxu0 0.0
        %333 = vmatprep.subr.mxu0 0.0
        %334 = vmatpush1.msra.mxu0 0.0
        %335 = vmatprep.subr.mxu0 0.0
        %336 = vmatpush1.msra.mxu0 0.0
        %337 = vmatprep.subr.mxu0 0.0
        %338 = vmatpush1.msra.mxu0 0.0
        %339 = vmatprep.subr.mxu0 0.0
        %340 = vmatpush1.msra.mxu0 0.0
        %341 = vmatprep.subr.mxu0 0.0
        %342 = vmatpush1.msra.mxu0 0.0
        %343 = vmatprep.subr.mxu0 0.0
        %344 = vmatpush1.msra.mxu0 0.0
        %345 = vmatprep.subr.mxu0 0.0
        %346 = vmatpush1.msra.mxu0 0.0
        %347 = vmatprep.subr.mxu0 0.0
        %348 = vmatpush1.msra.mxu0 0.0
        %349 = vmatprep.subr.mxu0 0.0
        %350 = vmatpush1.msra.mxu0 0.0
        %351 = vmatprep.subr.mxu0 0.0
        %352 = vmatpush1.msra.mxu0 0.0
        %353 = vmatprep.subr.mxu0 0.0
        %354 = vmatpush1.msra.mxu0 0.0
        %355 = vmatprep.subr.mxu0 0.0
        %356 = vmatpush1.msra.mxu0 0.0
        %357 = vmatprep.subr.mxu0 0.0
        %358 = vmatpush1.msra.mxu0 0.0
        %359 = vmatprep.subr.mxu0 0.0
        %360 = vmatpush1.msra.mxu0 0.0
        %361 = vmatprep.subr.mxu0 0.0
        %362 = vmatpush1.msra.mxu0 0.0
        %363 = vmatprep.subr.mxu0 0.0
        %364 = vmatpush1.msra.mxu0 0.0
        %365 = vmatprep.subr.mxu0 0.0
        %366 = vmatpush1.msra.mxu0 0.0
        %367 = vmatprep.subr.mxu0 0.0
        %368 = vmatpush1.msra.mxu0 0.0
        %369 = vmatprep.subr.mxu0 0.0
        %370 = vmatpush1.msra.mxu0 0.0
        %371 = vmatprep.subr.mxu0 0.0
        %372 = vmatpush1.msra.mxu0 0.0
        %373 = vmatprep.subr.mxu0 0.0
        %374 = vmatpush1.msra.mxu0 0.0
        %375 = vmatprep.subr.mxu0 0.0
        %376 = vmatpush1.msra.mxu0 0.0
        %377 = vmatprep.subr.mxu0 0.0
        %378 = vmatpush1.msra.mxu0 0.0
        %379 = vmatprep.subr.mxu0 0.0
        %380 = vmatpush1.msra.mxu0 0.0
        %381 = vmatprep.subr.mxu0 0.0
        %382 = vmatpush1.msra.mxu0 0.0
        %383 = vmatprep.mubr.f32.mxu0 0.0
        %384 = vmatmul.mubr.f32.gmra.mrb[0].mxu0 %v317
        %v385 = vpop.f32.mrb[0].mxu0
        %v386 = vadd.f32 0.0, %v385
        %v387 = vpop.f32.mrb[0].mxu0
        %388 = vdwg.mxu0
        %v389 = vadd.f32 %v314, %v386
        %v390 = vxor.u32 %v389, 2147483648
        %v391 = vmul.f32 %v390, 1.442695
        %v392 = vpow.pop %v391
        %v393 = vadd.f32 %v392, 1.0
        %v394 = vrcp.pop %v393
        %v395 = vmul.f32 1.0, %v394
        %v396 = vtanh.pop %v389
        %398 = vrot.lane.b32.xlu0 %v313, 32
        %v399 = vpop.permute.xlu0 %398
        %v401 = vmul.f32 %v395, %v399
        %403 = vrot.lane.b32.xlu0 %v396, 64
        %v404 = vpop.permute.xlu0 %403
        %v406 = vmul.f32 %v395, %v404
        %408 = vrot.lane.b32.xlu0 %v406, 32
        %v409 = vpop.permute.xlu0 %408
        %v411 = vadd.f32 %v401, %v409
        %v412 = vtanh.pop %v411
        %414 = vrot.lane.b32.xlu0 %v412, 64
        %v415 = vpop.permute.xlu0 %414
        %v417 = vmul.f32 %v395, %v415
        %v418 = vstv %s311
        %vm419 = vcmp.lt.s32.totalorder %v418, %v306
        %v420 = vsel %vm419, 1, 0
        %421 = vset.pattern.permute.xlu0 0
        %422 = vperm.xlu0 %421, %v420
        %v423 = vpop.permute.xlu0 %422
        %vm424 = vcmp.eq.s32.totalorder %v423, 1
        %v425 = vsel %vm424, %v417, 0.0
        %427 = vrot.lane.b32.xlu0 %v425, 32
        %v428 = vpop.permute.xlu0 %427
        %vm430 = vcmask 254976
        %431 = vst.msk [vmem:[%s294] sm:$0x3] %vm430, %v428
        %432 = vrot.lane.b32.xlu0 %v312, 96
        %v433 = vpop.permute.xlu0 %432
        %v435 = vsel %vm424, %v417, %v433
        %v436 = vsel %vm424, %v411, %v399
        %s437 = scalar_lea.vmem %s252, 2 [#allocation4]
        %v438 = vld [vmem:[%s437] sm:$0x3]
        %440 = vrot.lane.b32.xlu0 %v435, 32
        %v441 = vpop.permute.xlu0 %440
        %v442 = vsel %vm315, %v441, 0
        %444 = vmatprep.subr.mxu0 0.0
        %445 = vmatpush1.msra.mxu0 %v307
        %446 = vmatprep.subr.mxu0 0.0
        %447 = vmatpush1.msra.mxu0 %v308
        %448 = vmatprep.subr.mxu0 0.0
        %449 = vmatpush1.msra.mxu0 %v309
        %450 = vmatprep.subr.mxu0 0.0
        %451 = vmatpush1.msra.mxu0 %v310
        %452 = vmatprep.subr.mxu0 0.0
        %453 = vmatpush1.msra.mxu0 0.0
        %454 = vmatprep.subr.mxu0 0.0
        %455 = vmatpush1.msra.mxu0 0.0
        %456 = vmatprep.subr.mxu0 0.0
        %457 = vmatpush1.msra.mxu0 0.0
        %458 = vmatprep.subr.mxu0 0.0
        %459 = vmatpush1.msra.mxu0 0.0
        %460 = vmatprep.subr.mxu0 0.0
        %461 = vmatpush1.msra.mxu0 0.0
        %462 = vmatprep.subr.mxu0 0.0
        %463 = vmatpush1.msra.mxu0 0.0
        %464 = vmatprep.subr.mxu0 0.0
        %465 = vmatpush1.msra.mxu0 0.0
        %466 = vmatprep.subr.mxu0 0.0
        %467 = vmatpush1.msra.mxu0 0.0
        %468 = vmatprep.subr.mxu0 0.0
        %469 = vmatpush1.msra.mxu0 0.0
        %470 = vmatprep.subr.mxu0 0.0
        %471 = vmatpush1.msra.mxu0 0.0
        %472 = vmatprep.subr.mxu0 0.0
        %473 = vmatpush1.msra.mxu0 0.0
        %474 = vmatprep.subr.mxu0 0.0
        %475 = vmatpush1.msra.mxu0 0.0
        %476 = vmatprep.subr.mxu0 0.0
        %477 = vmatpush1.msra.mxu0 0.0
        %478 = vmatprep.subr.mxu0 0.0
        %479 = vmatpush1.msra.mxu0 0.0
        %480 = vmatprep.subr.mxu0 0.0
        %481 = vmatpush1.msra.mxu0 0.0
        %482 = vmatprep.subr.mxu0 0.0
        %483 = vmatpush1.msra.mxu0 0.0
        %484 = vmatprep.subr.mxu0 0.0
        %485 = vmatpush1.msra.mxu0 0.0
        %486 = vmatprep.subr.mxu0 0.0
        %487 = vmatpush1.msra.mxu0 0.0
        %488 = vmatprep.subr.mxu0 0.0
        %489 = vmatpush1.msra.mxu0 0.0
        %490 = vmatprep.subr.mxu0 0.0
        %491 = vmatpush1.msra.mxu0 0.0
        %492 = vmatprep.subr.mxu0 0.0
        %493 = vmatpush1.msra.mxu0 0.0
        %494 = vmatprep.subr.mxu0 0.0
        %495 = vmatpush1.msra.mxu0 0.0
        %496 = vmatprep.subr.mxu0 0.0
        %497 = vmatpush1.msra.mxu0 0.0
        %498 = vmatprep.subr.mxu0 0.0
        %499 = vmatpush1.msra.mxu0 0.0
        %500 = vmatprep.subr.mxu0 0.0
        %501 = vmatpush1.msra.mxu0 0.0
        %502 = vmatprep.subr.mxu0 0.0
        %503 = vmatpush1.msra.mxu0 0.0
        %504 = vmatprep.subr.mxu0 0.0
        %505 = vmatpush1.msra.mxu0 0.0
        %506 = vmatprep.subr.mxu0 0.0
        %507 = vmatpush1.msra.mxu0 0.0
        %508 = vmatprep.mubr.f32.mxu0 0.0
        %509 = vmatmul.mubr.f32.gmra.mrb[0].mxu0 %v442
        %v510 = vpop.f32.mrb[0].mxu0
        %v511 = vadd.f32 0.0, %v510
        %v512 = vpop.f32.mrb[0].mxu0
        %513 = vdwg.mxu0
        %v514 = vadd.f32 %v438, %v511
        %v515 = vxor.u32 %v514, 2147483648
        %v516 = vmul.f32 %v515, 1.442695
        %v517 = vpow.pop %v516
        %v518 = vadd.f32 %v517, 1.0
        %v519 = vrcp.pop %v518
        %v520 = vmul.f32 1.0, %v519
        %v521 = vtanh.pop %v514
        %v522 = vmul.f32 %v520, %v436
        %524 = vrot.lane.b32.xlu0 %v521, 64
        %v525 = vpop.permute.xlu0 %524
        %v527 = vmul.f32 %v520, %v525
        %529 = vrot.lane.b32.xlu0 %v527, 32
        %v530 = vpop.permute.xlu0 %529
        %v532 = vadd.f32 %v522, %v530
        %v533 = vtanh.pop %v532
        %535 = vrot.lane.b32.xlu0 %v533, 64
        %v536 = vpop.permute.xlu0 %535
        %v538 = vmul.f32 %v520, %v536
        %s539 = sadd.s32 %s311, 1
        %v540 = vstv %s539
        %vm541 = vcmp.lt.s32.totalorder %v540, %v306
        %v542 = vsel %vm541, 1, 0
        %543 = vset.pattern.permute.xlu0 0
        %544 = vperm.xlu0 %543, %v542
        %v545 = vpop.permute.xlu0 %544
        %vm546 = vcmp.eq.s32.totalorder %v545, 1
        %v547 = vsel %vm546, %v538, 0.0
        %549 = vrot.lane.b32.xlu0 %v547, 32
        %v550 = vpop.permute.xlu0 %549
        %s552 = scalar_lea.vmem %s294, 2 [#allocation13]
        %553 = vst.msk [vmem:[%s552] sm:$0x3] %vm430, %v550
        %v554 = vsel %vm546, %v538, %v435
        %v555 = vsel %vm546, %v532, %v436
        %s556 = scalar_lea.vmem %s252, 4 [#allocation4]
        %v557 = vld [vmem:[%s556] sm:$0x3]
        %559 = vrot.lane.b32.xlu0 %v554, 32
        %v560 = vpop.permute.xlu0 %559
        %v561 = vsel %vm315, %v560, 0
        %563 = vmatprep.subr.mxu0 0.0
        %564 = vmatpush1.msra.mxu0 %v307
        %565 = vmatprep.subr.mxu0 0.0
        %566 = vmatpush1.msra.mxu0 %v308
        %567 = vmatprep.subr.mxu0 0.0
        %568 = vmatpush1.msra.mxu0 %v309
        %569 = vmatprep.subr.mxu0 0.0
        %570 = vmatpush1.msra.mxu0 %v310
        %571 = vmatprep.subr.mxu0 0.0
        %572 = vmatpush1.msra.mxu0 0.0
        %573 = vmatprep.subr.mxu0 0.0
        %574 = vmatpush1.msra.mxu0 0.0
        %575 = vmatprep.subr.mxu0 0.0
        %576 = vmatpush1.msra.mxu0 0.0
        %577 = vmatprep.subr.mxu0 0.0
        %578 = vmatpush1.msra.mxu0 0.0
        %579 = vmatprep.subr.mxu0 0.0
        %580 = vmatpush1.msra.mxu0 0.0
        %581 = vmatprep.subr.mxu0 0.0
        %582 = vmatpush1.msra.mxu0 0.0
        %583 = vmatprep.subr.mxu0 0.0
        %584 = vmatpush1.msra.mxu0 0.0
        %585 = vmatprep.subr.mxu0 0.0
        %586 = vmatpush1.msra.mxu0 0.0
        %587 = vmatprep.subr.mxu0 0.0
        %588 = vmatpush1.msra.mxu0 0.0
        %589 = vmatprep.subr.mxu0 0.0
        %590 = vmatpush1.msra.mxu0 0.0
        %591 = vmatprep.subr.mxu0 0.0
        %592 = vmatpush1.msra.mxu0 0.0
        %593 = vmatprep.subr.mxu0 0.0
        %594 = vmatpush1.msra.mxu0 0.0
        %595 = vmatprep.subr.mxu0 0.0
        %596 = vmatpush1.msra.mxu0 0.0
        %597 = vmatprep.subr.mxu0 0.0
        %598 = vmatpush1.msra.mxu0 0.0
        %599 = vmatprep.subr.mxu0 0.0
        %600 = vmatpush1.msra.mxu0 0.0
        %601 = vmatprep.subr.mxu0 0.0
        %602 = vmatpush1.msra.mxu0 0.0
        %603 = vmatprep.subr.mxu0 0.0
        %604 = vmatpush1.msra.mxu0 0.0
        %605 = vmatprep.subr.mxu0 0.0
        %606 = vmatpush1.msra.mxu0 0.0
        %607 = vmatprep.subr.mxu0 0.0
        %608 = vmatpush1.msra.mxu0 0.0
        %609 = vmatprep.subr.mxu0 0.0
        %610 = vmatpush1.msra.mxu0 0.0
        %611 = vmatprep.subr.mxu0 0.0
        %612 = vmatpush1.msra.mxu0 0.0
        %613 = vmatprep.subr.mxu0 0.0
        %614 = vmatpush1.msra.mxu0 0.0
        %615 = vmatprep.subr.mxu0 0.0
        %616 = vmatpush1.msra.mxu0 0.0
        %617 = vmatprep.subr.mxu0 0.0
        %618 = vmatpush1.msra.mxu0 0.0
        %619 = vmatprep.subr.mxu0 0.0
        %620 = vmatpush1.msra.mxu0 0.0
        %621 = vmatprep.subr.mxu0 0.0
        %622 = vmatpush1.msra.mxu0 0.0
        %623 = vmatprep.subr.mxu0 0.0
        %624 = vmatpush1.msra.mxu0 0.0
        %625 = vmatprep.subr.mxu0 0.0
        %626 = vmatpush1.msra.mxu0 0.0
        %627 = vmatprep.mubr.f32.mxu0 0.0
        %628 = vmatmul.mubr.f32.gmra.mrb[0].mxu0 %v561
        %v629 = vpop.f32.mrb[0].mxu0
        %v630 = vadd.f32 0.0, %v629
        %v631 = vpop.f32.mrb[0].mxu0
        %632 = vdwg.mxu0
        %v633 = vadd.f32 %v557, %v630
        %v634 = vxor.u32 %v633, 2147483648
        %v635 = vmul.f32 %v634, 1.442695
        %v636 = vpow.pop %v635
        %v637 = vadd.f32 %v636, 1.0
        %v638 = vrcp.pop %v637
        %v639 = vmul.f32 1.0, %v638
        %v640 = vtanh.pop %v633
        %v641 = vmul.f32 %v639, %v555
        %643 = vrot.lane.b32.xlu0 %v640, 64
        %v644 = vpop.permute.xlu0 %643
        %v646 = vmul.f32 %v639, %v644
        %648 = vrot.lane.b32.xlu0 %v646, 32
        %v649 = vpop.permute.xlu0 %648
        %v651 = vadd.f32 %v641, %v649
        %v652 = vtanh.pop %v651
        %654 = vrot.lane.b32.xlu0 %v652, 64
        %v655 = vpop.permute.xlu0 %654
        %v657 = vmul.f32 %v639, %v655
        %s658 = sadd.s32 %s311, 2
        %v659 = vstv %s658
        %vm660 = vcmp.lt.s32.totalorder %v659, %v306
        %v661 = vsel %vm660, 1, 0
        %662 = vset.pattern.permute.xlu0 0
        %663 = vperm.xlu0 %662, %v661
        %v664 = vpop.permute.xlu0 %663
        %vm665 = vcmp.eq.s32.totalorder %v664, 1
        %v666 = vsel %vm665, %v657, 0.0
        %668 = vrot.lane.b32.xlu0 %v666, 32
        %v669 = vpop.permute.xlu0 %668
        %s671 = scalar_lea.vmem %s294, 4 [#allocation13]
        %672 = vst.msk [vmem:[%s671] sm:$0x3] %vm430, %v669
        %v673 = vsel %vm665, %v657, %v554
        %v674 = vsel %vm665, %v651, %v555
        %s675 = scalar_lea.vmem %s252, 6 [#allocation4]
        %v676 = vld [vmem:[%s675] sm:$0x3]
        %678 = vrot.lane.b32.xlu0 %v673, 32
        %v679 = vpop.permute.xlu0 %678
        %v680 = vsel %vm315, %v679, 0
        %682 = vmatprep.subr.mxu0 0.0
        %683 = vmatpush1.msra.mxu0 %v307
        %684 = vmatprep.subr.mxu0 0.0
        %685 = vmatpush1.msra.mxu0 %v308
        %686 = vmatprep.subr.mxu0 0.0
        %687 = vmatpush1.msra.mxu0 %v309
        %688 = vmatprep.subr.mxu0 0.0
        %689 = vmatpush1.msra.mxu0 %v310
        %690 = vmatprep.subr.mxu0 0.0
        %691 = vmatpush1.msra.mxu0 0.0
        %692 = vmatprep.subr.mxu0 0.0
        %693 = vmatpush1.msra.mxu0 0.0
        %694 = vmatprep.subr.mxu0 0.0
        %695 = vmatpush1.msra.mxu0 0.0
        %696 = vmatprep.subr.mxu0 0.0
        %697 = vmatpush1.msra.mxu0 0.0
        %698 = vmatprep.subr.mxu0 0.0
        %699 = vmatpush1.msra.mxu0 0.0
        %700 = vmatprep.subr.mxu0 0.0
        %701 = vmatpush1.msra.mxu0 0.0
        %702 = vmatprep.subr.mxu0 0.0
        %703 = vmatpush1.msra.mxu0 0.0
        %704 = vmatprep.subr.mxu0 0.0
        %705 = vmatpush1.msra.mxu0 0.0
        %706 = vmatprep.subr.mxu0 0.0
        %707 = vmatpush1.msra.mxu0 0.0
        %708 = vmatprep.subr.mxu0 0.0
        %709 = vmatpush1.msra.mxu0 0.0
        %710 = vmatprep.subr.mxu0 0.0
        %711 = vmatpush1.msra.mxu0 0.0
        %712 = vmatprep.subr.mxu0 0.0
        %713 = vmatpush1.msra.mxu0 0.0
        %714 = vmatprep.subr.mxu0 0.0
        %715 = vmatpush1.msra.mxu0 0.0
        %716 = vmatprep.subr.mxu0 0.0
        %717 = vmatpush1.msra.mxu0 0.0
        %718 = vmatprep.subr.mxu0 0.0
        %719 = vmatpush1.msra.mxu0 0.0
        %720 = vmatprep.subr.mxu0 0.0
        %721 = vmatpush1.msra.mxu0 0.0
        %722 = vmatprep.subr.mxu0 0.0
        %723 = vmatpush1.msra.mxu0 0.0
        %724 = vmatprep.subr.mxu0 0.0
        %725 = vmatpush1.msra.mxu0 0.0
        %726 = vmatprep.subr.mxu0 0.0
        %727 = vmatpush1.msra.mxu0 0.0
        %728 = vmatprep.subr.mxu0 0.0
        %729 = vmatpush1.msra.mxu0 0.0
        %730 = vmatprep.subr.mxu0 0.0
        %731 = vmatpush1.msra.mxu0 0.0
        %732 = vmatprep.subr.mxu0 0.0
        %733 = vmatpush1.msra.mxu0 0.0
        %734 = vmatprep.subr.mxu0 0.0
        %735 = vmatpush1.msra.mxu0 0.0
        %736 = vmatprep.subr.mxu0 0.0
        %737 = vmatpush1.msra.mxu0 0.0
        %738 = vmatprep.subr.mxu0 0.0
        %739 = vmatpush1.msra.mxu0 0.0
        %740 = vmatprep.subr.mxu0 0.0
        %741 = vmatpush1.msra.mxu0 0.0
        %742 = vmatprep.subr.mxu0 0.0
        %743 = vmatpush1.msra.mxu0 0.0
        %744 = vmatprep.subr.mxu0 0.0
        %745 = vmatpush1.msra.mxu0 0.0
        %746 = vmatprep.mubr.f32.mxu0 0.0
        %747 = vmatmul.mubr.f32.gmra.mrb[0].mxu0 %v680
        %v748 = vpop.f32.mrb[0].mxu0
        %v749 = vadd.f32 0.0, %v748
        %v750 = vpop.f32.mrb[0].mxu0
        %751 = vdwg.mxu0
        %v752 = vadd.f32 %v676, %v749
        %v753 = vxor.u32 %v752, 2147483648
        %v754 = vmul.f32 %v753, 1.442695
        %v755 = vpow.pop %v754
        %v756 = vadd.f32 %v755, 1.0
        %v757 = vrcp.pop %v756
        %v758 = vmul.f32 1.0, %v757
        %v759 = vtanh.pop %v752
        %v760 = vmul.f32 %v758, %v674
        %762 = vrot.lane.b32.xlu0 %v759, 64
        %v763 = vpop.permute.xlu0 %762
        %v765 = vmul.f32 %v758, %v763
        %767 = vrot.lane.b32.xlu0 %v765, 32
        %v768 = vpop.permute.xlu0 %767
        %v770 = vadd.f32 %v760, %v768
        %v771 = vtanh.pop %v770
        %773 = vrot.lane.b32.xlu0 %v771, 64
        %v774 = vpop.permute.xlu0 %773
        %v776 = vmul.f32 %v758, %v774
        %s777 = sadd.s32 %s311, 3
        %v778 = vstv %s777
        %vm779 = vcmp.lt.s32.totalorder %v778, %v306
        %v780 = vsel %vm779, 1, 0
        %781 = vset.pattern.permute.xlu0 0
        %782 = vperm.xlu0 %781, %v780
        %v783 = vpop.permute.xlu0 %782
        %vm784 = vcmp.eq.s32.totalorder %v783, 1
        %v785 = vsel %vm784, %v776, 0.0
        %787 = vrot.lane.b32.xlu0 %v785, 32
        %v788 = vpop.permute.xlu0 %787
        %s790 = scalar_lea.vmem %s294, 6 [#allocation13]
        %791 = vst.msk [vmem:[%s790] sm:$0x3] %vm430, %v788
        %v792 = vsel %vm784, %v776, %v673
        %v793 = vsel %vm784, %v770, %v674
        %795 = vrot.lane.b32.xlu0 %v792, 32
        %v796 = vpop.permute.xlu0 %795
        %798 = vst.msk [vmem:[#allocation2] sm:$0x3] %vm430, %v796
        %800 = vrot.lane.b32.xlu0 %v793, 96
        %v801 = vpop.permute.xlu0 %800
        %803 = vst.msk [vmem:[#allocation3] sm:$0x3] %vm430, %v801
        %s804 = sand.u32 %s142, 1
        %s805 = scalar_lea.sflag [#allocation6], %s804
        %s806 = sand.u32 %s142, 1
        %s807 = smul.addr %s806, 8
        %s808 = scalar_lea.vmem [#allocation13], %s807
        // Predicated region
        $region65: #{naive_seq2seq_forward.8} parent=39 // pred_check
          %p809 = pneg %p152
        $region66: #{naive_seq2seq_forward.8} parent=39 // pred_check_branch
          %811 = sbr.rel (%p809) target = $region68
        $region67: #{naive_seq2seq_forward.8} parent=39 // pred_region
          %s812 = smul.u32 4, %s24
          %s814 = ssub.s32 128, 128
          %815 = vsyncadd %s805, %s814
          %s816 = smul.addr %s812, 32
          %s817 = scalar_lea.hbm %s5, %s816
          %s818 = sshll.u32 %s808, 4
          %s819 = int_to_ptr.vmem [resolvable:$true] %s818
          %824 = dma.vmem_to_hbm [thread:$0]  %s819, 128, %s817, %s805, 32, 32, 2
        $region68: #{naive_seq2seq_forward.8} parent=39 // pred_fallthru
          _
      $region40: #{naive_seq2seq_forward.8} parent=5 // pred_fallthru
        _
      %p825 = scmp.le.s32.totalorder 2, %s19
      // Predicated region
      $region69: #{naive_seq2seq_forward.8} parent=5 // pred_check
        %p826 = pneg %p825
      $region70: #{naive_seq2seq_forward.8} parent=5 // pred_check_branch
        %828 = sbr.rel (%p826) target = $region72
      $region71: #{naive_seq2seq_forward.8} parent=5 // pred_region
        %s829 = ssub.s32 %s19, 2
        // Predicated region
        $region73: #{naive_seq2seq_forward.8} parent=71 // pred_check
          %p830 = pneg %p158
        $region74: #{naive_seq2seq_forward.8} parent=71 // pred_check_branch
          %832 = sbr.rel (%p830) target = $region76
        $region75: #{naive_seq2seq_forward.8} parent=71 // pred_region
          %s833 = sand.u32 %s143, 1
          %s834 = scalar_lea.sflag [#allocation6], %s833
          %s835 = sand.u32 %s143, 1
          %s836 = smul.addr %s835, 8
          %s837 = scalar_lea.vmem [#allocation13], %s836
          %838 = dma.done %s834, 128
        $region76: #{naive_seq2seq_forward.8} parent=71 // pred_fallthru
          _
      $region72: #{naive_seq2seq_forward.8} parent=5 // pred_fallthru
        _
    $region6: #{naive_seq2seq_forward.8} parent=1 // loop_footer
      %s23 = sadd.s32 1, %s19
    $region7: #{naive_seq2seq_forward.8} parent=1 // loop_footer_branch
      %18 = sbr.rel target = $region3
    $region8: #{naive_seq2seq_forward.8} parent=1 // loop_exit
      _
    %839 = vsyncpa [#allocation5], 1
    %s840 = scalar_lea.sflag [#allocation5], 1
    %841 = vsyncpa %s840, 1
    %842 = vsyncpa [#allocation8], 1
    %843 = vsyncpa [#allocation11], 1
    %844 = vsyncpa [#allocation6], 1
    %s845 = scalar_lea.sflag [#allocation6], 1
    %846 = vsyncpa %s845, 1

// kernel: naive_seq2seq_forward.9
$region0: #{naive_seq2seq_forward.9}
  #allocation0 [shape = 'u32[]', space=smem, size = 0x4, offset = 0x4, fixed_abs, tag = 'smem constant byte address 0x4 - core index']
  #allocation1 [shape = 'u32[144,128]{1,0:T(1,128)}', space=vmem, size = 0x12000, scoped, tag = 'internal scratch']
  #allocation2 [shape = 'f32[16,64]{1,0:T(8,128)}', space=vmem, size = 0x2000, scoped, tag = 'scratch operand']
  %s0 = inlined_call_operand.hbm [shape: f32[16,32], index: 0, kind: input, shape index: {}]
  %s1 = inlined_call_operand.hbm [shape: f32[32,64], index: 1, kind: input, shape index: {}]
  %s2 = inlined_call_operand.hbm [shape: f32[1,64], index: 2, kind: input, shape index: {}]
  %s3 = inlined_call_operand.hbm [shape: f32[16,64], index: 3, kind: output, shape index: {}]
  %s4 = sld [smem:[#allocation0]]
  $region42: #{naive_seq2seq_forward.9} parent=0
    _
  %s6 = ssub.s32 1, %s4
  %s7 = scalar_select 0, %s6, %s4
  $region1: #{naive_seq2seq_forward.9} parent=0
    #allocation3 [shape = 'u8[8192]{0}', space=vmem, size = 0x2000, scoped, tag = 'input window, operand 0, single buffered']
    #allocation4 [shape = 's32[1]{0}', space=sflag, size = 0x4, scoped, tag = 'scoped memory for naive_seq2seq_forward.9']
    #allocation5 [shape = 's32[1]{0}', space=sflag, size = 0x4, scoped, tag = 'scoped memory for naive_seq2seq_forward.9']
    #allocation6 [shape = 'u8[16384]{0}', space=vmem, size = 0x4000, scoped, tag = 'input window, operand 1, single buffered']
    #allocation7 [shape = 's32[1]{0}', space=sflag, size = 0x4, scoped, tag = 'scoped memory for naive_seq2seq_forward.9']
    #allocation8 [shape = 'u8[512]{0}', space=vmem, size = 0x400, scoped, tag = 'input window, operand 2, single buffered']
    #allocation9 [shape = 'u8[8192]{0}', space=vmem, size = 0x2000, scoped, tag = 'output window, operand 0, single buffered']
    %8 = vsyncpa [#allocation4], 0
    %9 = vsyncpa [#allocation7], 0
    %10 = vsyncpa [#allocation5], 0
    // Predicated region
    $region2: #{naive_seq2seq_forward.9} parent=1 // pred_check
      _
    $region3: #{naive_seq2seq_forward.9} parent=1 // pred_check_branch
      %12 = sbr.rel (0) target = $region5
    $region4: #{naive_seq2seq_forward.9} parent=1 // pred_region
      %s14 = ssub.s32 256, 256
      %15 = vsyncadd [#allocation4], %s14
      %s16 = sshll.u32 [#allocation3], 4
      %s17 = int_to_ptr.vmem [resolvable:$true] %s16
      %22 = dma.hbm_to_vmem [thread:$0]  %s0, 256, %s17, [#allocation4], 128, 128, 8
    $region5: #{naive_seq2seq_forward.9} parent=1 // pred_fallthru
      _
    // Predicated region
    $region6: #{naive_seq2seq_forward.9} parent=1 // pred_check
      _
    $region7: #{naive_seq2seq_forward.9} parent=1 // pred_check_branch
      %24 = sbr.rel (0) target = $region9
    $region8: #{naive_seq2seq_forward.9} parent=1 // pred_region
      %s26 = ssub.s32 512, 512
      %27 = vsyncadd [#allocation7], %s26
      %s28 = sshll.u32 [#allocation6], 4
      %s29 = int_to_ptr.vmem [resolvable:$true] %s28
      %34 = dma.hbm_to_vmem [thread:$0]  %s1, 512, %s29, [#allocation7], 128, 128, 8
    $region9: #{naive_seq2seq_forward.9} parent=1 // pred_fallthru
      _
    // Predicated region
    $region10: #{naive_seq2seq_forward.9} parent=1 // pred_check
      _
    $region11: #{naive_seq2seq_forward.9} parent=1 // pred_check_branch
      %36 = sbr.rel (0) target = $region13
    $region12: #{naive_seq2seq_forward.9} parent=1 // pred_region
      %s38 = ssub.s32 16, 16
      %39 = vsyncadd [#allocation7], %s38
      %s41 = sshll.u32 [#allocation8], 4
      %s42 = int_to_ptr.vmem [resolvable:$true] %s41
      %44 = dma.hbm_to_vmem [thread:$0]  %s2, 16, %s42, [#allocation7]
    $region13: #{naive_seq2seq_forward.9} parent=1 // pred_fallthru
      _
    // Predicated region
    $region14: #{naive_seq2seq_forward.9} parent=1 // pred_check
      _
    $region15: #{naive_seq2seq_forward.9} parent=1 // pred_check_branch
      %46 = sbr.rel (0) target = $region17
    $region16: #{naive_seq2seq_forward.9} parent=1 // pred_region
      %47 = dma.done [#allocation4], 256
    $region17: #{naive_seq2seq_forward.9} parent=1 // pred_fallthru
      _
    // Predicated region
    $region18: #{naive_seq2seq_forward.9} parent=1 // pred_check
      _
    $region19: #{naive_seq2seq_forward.9} parent=1 // pred_check_branch
      %49 = sbr.rel (0) target = $region21
    $region20: #{naive_seq2seq_forward.9} parent=1 // pred_region
      %50 = dma.done [#allocation7], 512
    $region21: #{naive_seq2seq_forward.9} parent=1 // pred_fallthru
      _
    // Predicated region
    $region22: #{naive_seq2seq_forward.9} parent=1 // pred_check
      _
    $region23: #{naive_seq2seq_forward.9} parent=1 // pred_check_branch
      %52 = sbr.rel (0) target = $region25
    $region24: #{naive_seq2seq_forward.9} parent=1 // pred_region
      %53 = dma.done [#allocation7], 16
    $region25: #{naive_seq2seq_forward.9} parent=1 // pred_fallthru
      _
    %p54 = scmp.eq.s32.totalorder 0, 0
    // Predicated region
    $region26: #{naive_seq2seq_forward.9} parent=1 // pred_check
      %p55 = pneg %p54
    $region27: #{naive_seq2seq_forward.9} parent=1 // pred_check_branch
      %57 = sbr.rel (%p55) target = $region29
    $region28: #{naive_seq2seq_forward.9} parent=1 // pred_region
      %vm58 = vcmask 523264
      %59 = vst.msk [vmem:[#allocation2] sm:$0xff] %vm58, 0.0
      %60 = vst.msk [vmem:[#allocation2 + $0x8] sm:$0xff] %vm58, 0.0
    $region29: #{naive_seq2seq_forward.9} parent=1 // pred_fallthru
      _
    %v61 = vld [vmem:[#allocation2] sm:$0xff]
    %v62 = vld [vmem:[#allocation2 + $0x8] sm:$0xff]
    %v63 = vld [vmem:[#allocation3] sm:$0xff]
    %v64 = vld [vmem:[#allocation3 + $0x8] sm:$0xff]
    %v65 = vld [vmem:[#allocation6] sm:$0xff]
    %v66 = vld [vmem:[#allocation6 + $0x8] sm:$0xff]
    %v67 = vld [vmem:[#allocation6 + $0x10] sm:$0xff]
    %v68 = vld [vmem:[#allocation6 + $0x18] sm:$0xff]
    %vm69 = vcmask 261120
    %v71 = vsel %vm69, %v63, 0
    %v74 = vsel %vm69, %v64, 0
    %76 = vmatprep.subr.mxu0 0.0
    %77 = vmatpush1.msra.mxu0 %v65
    %78 = vmatprep.subr.mxu0 0.0
    %79 = vmatpush1.msra.mxu0 %v66
    %80 = vmatprep.subr.mxu0 0.0
    %81 = vmatpush1.msra.mxu0 %v67
    %82 = vmatprep.subr.mxu0 0.0
    %83 = vmatpush1.msra.mxu0 %v68
    %84 = vmatprep.subr.mxu0 0.0
    %85 = vmatpush1.msra.mxu0 0.0
    %86 = vmatprep.subr.mxu0 0.0
    %87 = vmatpush1.msra.mxu0 0.0
    %88 = vmatprep.subr.mxu0 0.0
    %89 = vmatpush1.msra.mxu0 0.0
    %90 = vmatprep.subr.mxu0 0.0
    %91 = vmatpush1.msra.mxu0 0.0
    %92 = vmatprep.subr.mxu0 0.0
    %93 = vmatpush1.msra.mxu0 0.0
    %94 = vmatprep.subr.mxu0 0.0
    %95 = vmatpush1.msra.mxu0 0.0
    %96 = vmatprep.subr.mxu0 0.0
    %97 = vmatpush1.msra.mxu0 0.0
    %98 = vmatprep.subr.mxu0 0.0
    %99 = vmatpush1.msra.mxu0 0.0
    %100 = vmatprep.subr.mxu0 0.0
    %101 = vmatpush1.msra.mxu0 0.0
    %102 = vmatprep.subr.mxu0 0.0
    %103 = vmatpush1.msra.mxu0 0.0
    %104 = vmatprep.subr.mxu0 0.0
    %105 = vmatpush1.msra.mxu0 0.0
    %106 = vmatprep.subr.mxu0 0.0
    %107 = vmatpush1.msra.mxu0 0.0
    %108 = vmatprep.subr.mxu0 0.0
    %109 = vmatpush1.msra.mxu0 0.0
    %110 = vmatprep.subr.mxu0 0.0
    %111 = vmatpush1.msra.mxu0 0.0
    %112 = vmatprep.subr.mxu0 0.0
    %113 = vmatpush1.msra.mxu0 0.0
    %114 = vmatprep.subr.mxu0 0.0
    %115 = vmatpush1.msra.mxu0 0.0
    %116 = vmatprep.subr.mxu0 0.0
    %117 = vmatpush1.msra.mxu0 0.0
    %118 = vmatprep.subr.mxu0 0.0
    %119 = vmatpush1.msra.mxu0 0.0
    %120 = vmatprep.subr.mxu0 0.0
    %121 = vmatpush1.msra.mxu0 0.0
    %122 = vmatprep.subr.mxu0 0.0
    %123 = vmatpush1.msra.mxu0 0.0
    %124 = vmatprep.subr.mxu0 0.0
    %125 = vmatpush1.msra.mxu0 0.0
    %126 = vmatprep.subr.mxu0 0.0
    %127 = vmatpush1.msra.mxu0 0.0
    %128 = vmatprep.subr.mxu0 0.0
    %129 = vmatpush1.msra.mxu0 0.0
    %130 = vmatprep.subr.mxu0 0.0
    %131 = vmatpush1.msra.mxu0 0.0
    %132 = vmatprep.subr.mxu0 0.0
    %133 = vmatpush1.msra.mxu0 0.0
    %134 = vmatprep.subr.mxu0 0.0
    %135 = vmatpush1.msra.mxu0 0.0
    %136 = vmatprep.subr.mxu0 0.0
    %137 = vmatpush1.msra.mxu0 0.0
    %138 = vmatprep.subr.mxu0 0.0
    %139 = vmatpush1.msra.mxu0 0.0
    %140 = vmatprep.mubr.f32.mxu0 0.0
    %141 = vmatmul.mubr.f32.gmra.mrb[0].mxu0 %v71
    %v142 = vpop.f32.mrb[0].mxu0
    %v143 = vadd.f32 0.0, %v142
    %v144 = vpop.f32.mrb[0].mxu0
    %145 = vmatprep.mubr.f32.mxu0 0.0
    %146 = vmatmul.mubr.f32.gmra.mrb[0].mxu0 %v74
    %v147 = vpop.f32.mrb[0].mxu0
    %v148 = vadd.f32 0.0, %v147
    %v149 = vpop.f32.mrb[0].mxu0
    %150 = vdwg.mxu0
    %v151 = vadd.f32 %v61, %v143
    %v152 = vadd.f32 %v62, %v148
    %vm153 = vcmask 523264
    %154 = vst.msk [vmem:[#allocation2] sm:$0xff] %vm153, %v151
    %155 = vst.msk [vmem:[#allocation2 + $0x8] sm:$0xff] %vm153, %v152
    // Predicated region
    $region30: #{naive_seq2seq_forward.9} parent=1 // pred_check
      %p156 = pneg %p54
    $region31: #{naive_seq2seq_forward.9} parent=1 // pred_check_branch
      %158 = sbr.rel (%p156) target = $region33
    $region32: #{naive_seq2seq_forward.9} parent=1 // pred_region
      %v159 = vld [vmem:[#allocation2] sm:$0xff]
      %v160 = vld [vmem:[#allocation2 + $0x8] sm:$0xff]
      %v161 = vld [vmem:[#allocation8] sm:$0x1]
      %v163 = vlaneseq
      %v164 = vshrl.u32 %v163, 7
      %v165 = vsub.s32 0, %v164
      %v166 = vrot.slane %v161, %v165
      %v168 = vadd.f32 %v159, %v166
      %v169 = vadd.f32 %v160, %v166
      %170 = vst.msk [vmem:[#allocation9] sm:$0xff] %vm153, %v168
      %171 = vst.msk [vmem:[#allocation9 + $0x8] sm:$0xff] %vm153, %v169
    $region33: #{naive_seq2seq_forward.9} parent=1 // pred_fallthru
      _
    // Predicated region
    $region34: #{naive_seq2seq_forward.9} parent=1 // pred_check
      _
    $region35: #{naive_seq2seq_forward.9} parent=1 // pred_check_branch
      %173 = sbr.rel (0) target = $region37
    $region36: #{naive_seq2seq_forward.9} parent=1 // pred_region
      %s175 = ssub.s32 256, 256
      %176 = vsyncadd [#allocation5], %s175
      %s177 = sshll.u32 [#allocation9], 4
      %s178 = int_to_ptr.vmem [resolvable:$true] %s177
      %183 = dma.vmem_to_hbm [thread:$0]  %s178, 256, %s3, [#allocation5], 128, 128, 8
    $region37: #{naive_seq2seq_forward.9} parent=1 // pred_fallthru
      _
    // Predicated region
    $region38: #{naive_seq2seq_forward.9} parent=1 // pred_check
      _
    $region39: #{naive_seq2seq_forward.9} parent=1 // pred_check_branch
      %185 = sbr.rel (0) target = $region41
    $region40: #{naive_seq2seq_forward.9} parent=1 // pred_region
      %186 = dma.done [#allocation5], 256
    $region41: #{naive_seq2seq_forward.9} parent=1 // pred_fallthru
      _
    %187 = vsyncpa [#allocation4], 1
    %188 = vsyncpa [#allocation7], 1
    %189 = vsyncpa [#allocation5], 1

</llo_original>
